<compile_context>
chip_gen: v5e
topology: v5e:2x2
jax: 0.10.0
libtpu: 0.0.40
codegen_flags: <defaults>
</compile_context>

<pallas_src>
import functools

import jax
import jax.numpy as jnp
from jax import lax
from jax.experimental import pallas as pl
from jax.experimental.pallas import tpu as pltpu

EPS = 1e-5          # nn.GroupNorm default
NUM_GROUPS = 2      # GroupNorm(2, C_out)


def _unconvsc3d_kernel(x_ref, w_ref, c_ref, m_ref, o_ref, xe_ref, xs_ref,
                       *, shifts, p, count):
    """One sample x one GroupNorm group.

    x_ref : (1, C_in, P)  f32   flattened input, P = D*H*W on lanes
    w_ref : (R2, K)       bf16  phase weights for this group, K = 8*C_in
                                 (column = offset*C_in + ci, row = phase*cpg + coig)
    c_ref : (R2, 4)       f32   per-row [bias, gamma, beta, 0]
    m_ref : (8, P)        bf16  per-offset boundary masks (row 0 is all ones)
    o_ref : (1, R2, P)    bf16
    xe_ref: (C_in, P_ext) bf16  scratch: zero-extended flat input
    xs_ref: (K, P)        bf16  scratch: shifted+masked stack
    """
    c_in = x_ref.shape[1]
    p_ext = xe_ref.shape[1]

    # Zero-extended bf16 copy of the flat input: every shifted window stays in-bounds;
    # wrong-axis "carry" elements are killed by the masks below.
    xe_ref[:, pl.ds(0, p)] = x_ref[0].astype(jnp.bfloat16)
    xe_ref[:, pl.ds(p, p_ext - p)] = jnp.zeros((c_in, p_ext - p), jnp.bfloat16)

    xe = xe_ref[...]                      # (C_in, P_ext)
    masks = m_ref[...]                    # (8, P)

    # Build the (8*C_in, P) shifted-and-masked stack in VMEM (static unrolled, 8 offsets).
    for o, delta in enumerate(shifts):
        v = xe[:, delta:delta + p]        # (C_in, P)  lane-shifted view
        if delta:
            v = v * masks[o:o + 1, :]
        xs_ref[pl.ds(o * c_in, c_in), :] = v

    # ConvTranspose3d for this group's 8 sub-pixel phases: one lane-dense MXU matmul.
    acc = jnp.dot(w_ref[...], xs_ref[...],
                  preferred_element_type=jnp.float32)          # (R2, P) f32, no bias yet

    cst = c_ref[...]                      # (R2, 4)
    b = cst[:, 0:1]
    ga = cst[:, 1:2]
    be = cst[:, 2:3]

    # ---- GroupNorm stats: single pass (bias folded in analytically) ----
    rs = jnp.sum(acc, axis=1, keepdims=True)                   # (R2, 1)
    rq = jnp.sum(acc * acc, axis=1, keepdims=True)             # (R2, 1)
    pf = float(p)
    rs_b = rs + pf * b                                         # sum of (acc + bias)
    rq_b = rq + 2.0 * b * rs + pf * b * b                      # sumsq of (acc + bias)
    mean = jnp.sum(rs_b, axis=0, keepdims=True) / count        # (1, 1)
    var = jnp.maximum(jnp.sum(rq_b, axis=0, keepdims=True) / count - mean * mean, 0.0)
    inv = lax.rsqrt(var + EPS)

    scale = ga * inv                                           # (R2, 1)
    shift = (b - mean) * scale + be                            # (R2, 1)

    # ---- normalize + SiLU: one fused pass over acc ----
    z = acc * scale + shift
    sig = pl.reciprocal(1.0 + jnp.exp(-z), approx=True)
    o_ref[0] = (z * sig).astype(o_ref.dtype)


def _phase_weights(weight):
    """weight: (C_in, C_out, 3, 3, 3) ConvTranspose3d layout.
    Returns (8*C_out, 8*C_in): row = phase*C_out + co (phase = rd*4+rh*2+rw),
    col = offset*C_in + ci (offset = od*4+oh*2+ow).
    Adjoint relation (stride 2, pad 1): o + 1 = 2*i + k, so per axis:
    parity r=0 -> (k=1, off=0); r=1 -> (k=2, off=0) and (k=0, off=1)."""
    C_in, C_out = weight.shape[0], weight.shape[1]
    zero = jnp.zeros((C_in, C_out), weight.dtype)

    def tap(r, o):
        if r == 0:
            return 1 if o == 0 else None
        return 2 if o == 0 else 0

    phase_mats = []
    for rd in (0, 1):
        for rh in (0, 1):
            for rw in (0, 1):
                offs = []
                for od in (0, 1):
                    for oh in (0, 1):
                        for ow in (0, 1):
                            kd, kh, kw = tap(rd, od), tap(rh, oh), tap(rw, ow)
                            if kd is None or kh is None or kw is None:
                                offs.append(zero)
                            else:
                                offs.append(weight[:, :, kd, kh, kw])      # (C_in, C_out)
                m = jnp.stack(offs, axis=0)                                # (8, C_in, C_out)
                m = jnp.transpose(m, (2, 0, 1)).reshape(C_out, 8 * C_in)   # (C_out, K)
                phase_mats.append(m)
    return jnp.concatenate(phase_mats, axis=0)                             # (8*C_out, K)


def unconv_sc3d_pallas(x, weight, bias, gamma, beta):
    """x: (N, C_in, D, H, W) f32; weight: (C_in, C_out, 3, 3, 3) (ConvTranspose3d layout);
    bias/gamma/beta: (C_out,).  Returns (N, C_out, 2D, 2H, 2W) f32."""
    N, C_in, D, H, W = x.shape
    C_out = weight.shape[1]
    assert C_out % NUM_GROUPS == 0
    cpg = C_out // NUM_GROUPS
    HW = H * W
    P = D * HW                    # lane-dense when a multiple of 128 (true at typical sizes)
    K = 8 * C_in
    R2 = 8 * cpg                  # rows per (sample, group) block
    R = NUM_GROUPS * R2           # = 8 * C_out

    # Static lane shifts for the 8 input offsets (od, oh, ow).
    shifts = tuple(od * HW + oh * W + ow
                   for od in (0, 1) for oh in (0, 1) for ow in (0, 1))
    p_ext = -(-(P + shifts[-1]) // 128) * 128

    # Per-offset boundary masks (kill wrong-axis carries of the flat lane shift).
    idx = jnp.arange(P)
    md = (idx // HW) < (D - 1)
    mh = ((idx // W) % H) < (H - 1)
    mw = (idx % W) < (W - 1)
    rows = []
    for od in (0, 1):
        for oh in (0, 1):
            for ow in (0, 1):
                m = jnp.ones((P,), bool)
                if od:
                    m = m & md
                if oh:
                    m = m & mh
                if ow:
                    m = m & mw
                rows.append(m)
    mask8 = jnp.stack(rows, axis=0).astype(jnp.bfloat16)        # (8, P)

    # Phase weights, reordered to group-major rows: row = g*8*cpg + phase*cpg + coig.
    Wall = _phase_weights(weight.astype(jnp.float32))           # (R, K) phase-major
    Wall = (Wall.reshape(8, NUM_GROUPS, cpg, K)
                .transpose(1, 0, 2, 3).reshape(R, K).astype(jnp.bfloat16))

    def group_major(v):
        t = jnp.tile(v.astype(jnp.float32), 8).reshape(8, NUM_GROUPS, cpg)
        return t.transpose(1, 0, 2).reshape(R)

    consts = jnp.stack([group_major(bias), group_major(gamma), group_major(beta),
                        jnp.zeros((R,), jnp.float32)], axis=1)  # (R, 4)

    Xf = x.reshape(N, C_in, P)                                  # free reshape, stays f32
    count = float(R2) * float(P)                                # cpg * (2D*2H*2W)

    kernel = functools.partial(_unconvsc3d_kernel, shifts=shifts, p=P, count=count)

    # Explicit VMEM budget: double-buffered blocks + scratch + compiler temporaries.
    blk_bytes = C_in * P * 4 + R2 * P * 2 + R2 * K * 2 + 8 * P * 2 + R2 * 4 * 4
    scratch_bytes = C_in * p_ext * 2 + K * P * 2
    temp_bytes = 6 * R2 * P * 4 + 2 * K * P * 2
    vmem_limit = int(min(48 * 2**20,
                         max(32 * 2**20,
                             2 * blk_bytes + scratch_bytes + temp_bytes + 4 * 2**20)))

    out = pl.pallas_call(
        kernel,
        out_shape=jax.ShapeDtypeStruct((N, R, P), jnp.bfloat16),
        grid_spec=pltpu.PrefetchScalarGridSpec(
            num_scalar_prefetch=0,
            grid=(N, NUM_GROUPS),
            in_specs=[
                pl.BlockSpec((1, C_in, P), lambda n, g: (n, 0, 0)),   # input (re-used per g)
                pl.BlockSpec((R2, K), lambda n, g: (g, 0)),           # phase weights, group g
                pl.BlockSpec((R2, 4), lambda n, g: (g, 0)),           # bias/gamma/beta rows
                pl.BlockSpec((8, P), lambda n, g: (0, 0)),            # boundary masks
            ],
            out_specs=pl.BlockSpec((1, R2, P), lambda n, g: (n, g, 0)),
            scratch_shapes=[
                pltpu.VMEM((C_in, p_ext), jnp.bfloat16),               # extended flat input
                pltpu.VMEM((K, P), jnp.bfloat16),                      # shifted stack
            ],
        ),
        compiler_params=pltpu.CompilerParams(
            dimension_semantics=("parallel", "parallel"),
            vmem_limit_bytes=vmem_limit),
    )(Xf, Wall, consts, mask8)

    # Interleave the 8 sub-pixel phases and merge groups back to NCDHW.
    # (bf16 intermediate -> single fused XLA transpose+convert; see TODO above.)
    out = out.reshape(N, NUM_GROUPS, 2, 2, 2, cpg, D, H, W)      # (n,g,rd,rh,rw,coig,d,h,w)
    out = jnp.transpose(out, (0, 1, 5, 6, 2, 7, 3, 8, 4))        # (n,g,coig,d,rd,h,rh,w,rw)
    return out.reshape(N, C_out, 2 * D, 2 * H, 2 * W).astype(jnp.float32)


def _reference(x, weight, bias, gamma, beta):
    """Pure-JAX reference matching the PyTorch module (ConvTranspose3d -> GN(2) -> SiLU)."""
    N = x.shape[0]
    C_out = weight.shape[1]
    w_flip = weight[:, :, ::-1, ::-1, ::-1]
    w_oi = jnp.transpose(w_flip, (1, 0, 2, 3, 4))                # (C_out, C_in, 3, 3, 3)
    y = lax.conv_general_dilated(
        x, w_oi, window_strides=(1, 1, 1),
        padding=[(1, 2), (1, 2), (1, 2)],
        lhs_dilation=(2, 2, 2),
        dimension_numbers=("NCDHW", "OIDHW", "NCDHW"),
        precision=lax.Precision.HIGHEST,
    ) + bias.reshape(1, C_out, 1, 1, 1)
    _, _, Do, Ho, Wo = y.shape
    yg = y.reshape(N, NUM_GROUPS, C_out // NUM_GROUPS, Do, Ho, Wo)
    mean = yg.mean(axis=(2, 3, 4, 5), keepdims=True)
    var = ((yg - mean) ** 2).mean(axis=(2, 3, 4, 5), keepdims=True)
    yn = ((yg - mean) / jnp.sqrt(var + EPS)).reshape(N, C_out, Do, Ho, Wo)
    yn = yn * gamma.reshape(1, C_out, 1, 1, 1) + beta.reshape(1, C_out, 1, 1, 1)
    return yn * jax.nn.sigmoid(yn)


if __name__ == "__main__":
    key = jax.random.PRNGKey(0)
    k_x, k_w, k_b, k_g, k_t = jax.random.split(key, 5)

    N, C_in, D, H, W = 2, 4, 8, 16, 16
    C_out = 8

    x = jax.random.normal(k_x, (N, C_in, D, H, W), dtype=jnp.float32)
    # ConvTranspose3d weight layout: (C_in, C_out, kD, kH, kW); synthetic init.
    weight = jax.random.normal(k_w, (C_in, C_out, 3, 3, 3), dtype=jnp.float32) * 0.1
    bias = jax.random.normal(k_b, (C_out,), dtype=jnp.float32) * 0.1
    gamma = 1.0 + 0.1 * jax.random.normal(k_g, (C_out,), dtype=jnp.float32)
    beta = 0.1 * jax.random.normal(k_t, (C_out,), dtype=jnp.float32)

    fwd = jax.jit(unconv_sc3d_pallas)
    out = jax.block_until_ready(fwd(x, weight, bias, gamma, beta))

    ref = jax.block_until_ready(_reference(x, weight, bias, gamma, beta))
    assert out.shape == ref.shape == (N, C_out, 2 * D, 2 * H, 2 * W), out.shape
    max_err = float(jnp.max(jnp.abs(out - ref)))
    mean_err = float(jnp.mean(jnp.abs(out - ref)))
    # bf16 MXU inputs + bf16 kernel output -> relaxed tolerance vs f32 reference.
    assert max_err < 7.5e-2, (max_err, mean_err)
    assert mean_err < 1e-2, (max_err, mean_err)

    print("KERNEL_OK")
</pallas_src>

<mosaic_0001>
module attributes {stable_mosaic.version = 11 : i64} {
  func.func @_unconvsc3d_kernel(%arg0: i32, %arg1: i32, %arg2: memref<1x4x2048xf32, #tpu.memory_space<vmem>>, %arg3: memref<32x32xbf16, #tpu.memory_space<vmem>>, %arg4: memref<32x4xf32, #tpu.memory_space<vmem>>, %arg5: memref<8x2048xbf16, #tpu.memory_space<vmem>>, %arg6: memref<1x32x2048xbf16, #tpu.memory_space<vmem>>, %arg7: memref<4x2432xbf16, #tpu.memory_space<vmem>>, %arg8: memref<32x2048xbf16, #tpu.memory_space<vmem>>) attributes {dimension_semantics = [#tpu.dimension_semantics<parallel>, #tpu.dimension_semantics<parallel>], iteration_bounds = array<i64: 2, 2>, scalar_prefetch = 0 : i64, scratch_operands = 2 : i64, tpu.core_type = #tpu.core_type<tc>, window_params = [{transform_indices = @transform_0, window_bounds = array<i64: 1, 4, 2048>}, {transform_indices = @transform_1, window_bounds = array<i64: 32, 32>}, {transform_indices = @transform_2, window_bounds = array<i64: 32, 4>}, {pipeline_mode = #tpu.pipeline_mode<synchronous>, transform_indices = @transform_3, window_bounds = array<i64: 8, 2048>}, {transform_indices = @transform_4, window_bounds = array<i64: 1, 32, 2048>}]} {
    %c0 = arith.constant 0 : index
    %c0_0 = arith.constant 0 : index
    %c0_1 = arith.constant 0 : index
    %0 = vector.load %arg2[%c0, %c0_0, %c0_1] : memref<1x4x2048xf32, #tpu.memory_space<vmem>>, vector<1x4x2048xf32>
    %1 = vector.shape_cast %0 : vector<1x4x2048xf32> to vector<4x2048xf32>
    %2 = arith.truncf %1 : vector<4x2048xf32> to vector<4x2048xbf16>
    %c0_2 = arith.constant 0 : index
    %c0_3 = arith.constant 0 : index
    %3 = vector.load %arg7[%c0_2, %c0_3] : memref<4x2432xbf16, #tpu.memory_space<vmem>>, vector<4x2048xbf16>
    tpu.vector_store %arg7[%c0_2, %c0_3], %2 {strides = array<i32>} : memref<4x2432xbf16, #tpu.memory_space<vmem>>, vector<4x2048xbf16>,
    %cst = arith.constant 0.000000e+00 : bf16
    %4 = vector.broadcast %cst : bf16 to vector<4x384xbf16>
    %c0_4 = arith.constant 0 : index
    %c2048 = arith.constant 2048 : index
    %5 = vector.load %arg7[%c0_4, %c2048] : memref<4x2432xbf16, #tpu.memory_space<vmem>>, vector<4x384xbf16>
    tpu.vector_store %arg7[%c0_4, %c2048], %4 {strides = array<i32>} : memref<4x2432xbf16, #tpu.memory_space<vmem>>, vector<4x384xbf16>,
    %c0_5 = arith.constant 0 : index
    %c0_6 = arith.constant 0 : index
    %6 = vector.load %arg7[%c0_5, %c0_6] : memref<4x2432xbf16, #tpu.memory_space<vmem>>, vector<4x2432xbf16>
    %c0_7 = arith.constant 0 : index
    %c0_8 = arith.constant 0 : index
    %7 = vector.load %arg5[%c0_7, %c0_8] : memref<8x2048xbf16, #tpu.memory_space<vmem>>, vector<8x2048xbf16>
    %8 = vector.extract_strided_slice %6 {offsets = [0, 0], sizes = [4, 2048], strides = [1, 1]} : vector<4x2432xbf16> to vector<4x2048xbf16>
    %c0_9 = arith.constant 0 : index
    %c0_10 = arith.constant 0 : index
    %9 = vector.load %arg8[%c0_9, %c0_10] : memref<32x2048xbf16, #tpu.memory_space<vmem>>, vector<4x2048xbf16>
    tpu.vector_store %arg8[%c0_9, %c0_10], %8 {strides = array<i32>} : memref<32x2048xbf16, #tpu.memory_space<vmem>>, vector<4x2048xbf16>,
    %10 = vector.extract_strided_slice %6 {offsets = [0, 1], sizes = [4, 2048], strides = [1, 1]} : vector<4x2432xbf16> to vector<4x2048xbf16>
    %11 = vector.extract_strided_slice %7 {offsets = [1, 0], sizes = [1, 2048], strides = [1, 1]} : vector<8x2048xbf16> to vector<1x2048xbf16>
    %12 = vector.broadcast %11 : vector<1x2048xbf16> to vector<4x2048xbf16>
    %13 = arith.mulf %10, %12 : vector<4x2048xbf16>
    %c4 = arith.constant 4 : index
    %c0_11 = arith.constant 0 : index
    %14 = vector.load %arg8[%c4, %c0_11] : memref<32x2048xbf16, #tpu.memory_space<vmem>>, vector<4x2048xbf16>
    tpu.vector_store %arg8[%c4, %c0_11], %13 {strides = array<i32>} : memref<32x2048xbf16, #tpu.memory_space<vmem>>, vector<4x2048xbf16>,
    %15 = vector.extract_strided_slice %6 {offsets = [0, 16], sizes = [4, 2048], strides = [1, 1]} : vector<4x2432xbf16> to vector<4x2048xbf16>
    %16 = vector.extract_strided_slice %7 {offsets = [2, 0], sizes = [1, 2048], strides = [1, 1]} : vector<8x2048xbf16> to vector<1x2048xbf16>
    %17 = vector.broadcast %16 : vector<1x2048xbf16> to vector<4x2048xbf16>
    %18 = arith.mulf %15, %17 : vector<4x2048xbf16>
    %c8 = arith.constant 8 : index
    %c0_12 = arith.constant 0 : index
    %19 = vector.load %arg8[%c8, %c0_12] : memref<32x2048xbf16, #tpu.memory_space<vmem>>, vector<4x2048xbf16>
    tpu.vector_store %arg8[%c8, %c0_12], %18 {strides = array<i32>} : memref<32x2048xbf16, #tpu.memory_space<vmem>>, vector<4x2048xbf16>,
    %20 = vector.extract_strided_slice %6 {offsets = [0, 17], sizes = [4, 2048], strides = [1, 1]} : vector<4x2432xbf16> to vector<4x2048xbf16>
    %21 = vector.extract_strided_slice %7 {offsets = [3, 0], sizes = [1, 2048], strides = [1, 1]} : vector<8x2048xbf16> to vector<1x2048xbf16>
    %22 = vector.broadcast %21 : vector<1x2048xbf16> to vector<4x2048xbf16>
    %23 = arith.mulf %20, %22 : vector<4x2048xbf16>
    %c12 = arith.constant 12 : index
    %c0_13 = arith.constant 0 : index
    %24 = vector.load %arg8[%c12, %c0_13] : memref<32x2048xbf16, #tpu.memory_space<vmem>>, vector<4x2048xbf16>
    tpu.vector_store %arg8[%c12, %c0_13], %23 {strides = array<i32>} : memref<32x2048xbf16, #tpu.memory_space<vmem>>, vector<4x2048xbf16>,
    %25 = vector.extract_strided_slice %6 {offsets = [0, 256], sizes = [4, 2048], strides = [1, 1]} : vector<4x2432xbf16> to vector<4x2048xbf16>
    %26 = vector.extract_strided_slice %7 {offsets = [4, 0], sizes = [1, 2048], strides = [1, 1]} : vector<8x2048xbf16> to vector<1x2048xbf16>
    %27 = vector.broadcast %26 : vector<1x2048xbf16> to vector<4x2048xbf16>
    %28 = arith.mulf %25, %27 : vector<4x2048xbf16>
    %c16 = arith.constant 16 : index
    %c0_14 = arith.constant 0 : index
    %29 = vector.load %arg8[%c16, %c0_14] : memref<32x2048xbf16, #tpu.memory_space<vmem>>, vector<4x2048xbf16>
    tpu.vector_store %arg8[%c16, %c0_14], %28 {strides = array<i32>} : memref<32x2048xbf16, #tpu.memory_space<vmem>>, vector<4x2048xbf16>,
    %30 = vector.extract_strided_slice %6 {offsets = [0, 257], sizes = [4, 2048], strides = [1, 1]} : vector<4x2432xbf16> to vector<4x2048xbf16>
    %31 = vector.extract_strided_slice %7 {offsets = [5, 0], sizes = [1, 2048], strides = [1, 1]} : vector<8x2048xbf16> to vector<1x2048xbf16>
    %32 = vector.broadcast %31 : vector<1x2048xbf16> to vector<4x2048xbf16>
    %33 = arith.mulf %30, %32 : vector<4x2048xbf16>
    %c20 = arith.constant 20 : index
    %c0_15 = arith.constant 0 : index
    %34 = vector.load %arg8[%c20, %c0_15] : memref<32x2048xbf16, #tpu.memory_space<vmem>>, vector<4x2048xbf16>
    tpu.vector_store %arg8[%c20, %c0_15], %33 {strides = array<i32>} : memref<32x2048xbf16, #tpu.memory_space<vmem>>, vector<4x2048xbf16>,
    %35 = vector.extract_strided_slice %6 {offsets = [0, 272], sizes = [4, 2048], strides = [1, 1]} : vector<4x2432xbf16> to vector<4x2048xbf16>
    %36 = vector.extract_strided_slice %7 {offsets = [6, 0], sizes = [1, 2048], strides = [1, 1]} : vector<8x2048xbf16> to vector<1x2048xbf16>
    %37 = vector.broadcast %36 : vector<1x2048xbf16> to vector<4x2048xbf16>
    %38 = arith.mulf %35, %37 : vector<4x2048xbf16>
    %c24 = arith.constant 24 : index
    %c0_16 = arith.constant 0 : index
    %39 = vector.load %arg8[%c24, %c0_16] : memref<32x2048xbf16, #tpu.memory_space<vmem>>, vector<4x2048xbf16>
    tpu.vector_store %arg8[%c24, %c0_16], %38 {strides = array<i32>} : memref<32x2048xbf16, #tpu.memory_space<vmem>>, vector<4x2048xbf16>,
    %40 = vector.extract_strided_slice %6 {offsets = [0, 273], sizes = [4, 2048], strides = [1, 1]} : vector<4x2432xbf16> to vector<4x2048xbf16>
    %41 = vector.extract_strided_slice %7 {offsets = [7, 0], sizes = [1, 2048], strides = [1, 1]} : vector<8x2048xbf16> to vector<1x2048xbf16>
    %42 = vector.broadcast %41 : vector<1x2048xbf16> to vector<4x2048xbf16>
    %43 = arith.mulf %40, %42 : vector<4x2048xbf16>
    %c28 = arith.constant 28 : index
    %c0_17 = arith.constant 0 : index
    %44 = vector.load %arg8[%c28, %c0_17] : memref<32x2048xbf16, #tpu.memory_space<vmem>>, vector<4x2048xbf16>
    tpu.vector_store %arg8[%c28, %c0_17], %43 {strides = array<i32>} : memref<32x2048xbf16, #tpu.memory_space<vmem>>, vector<4x2048xbf16>,
    %c0_18 = arith.constant 0 : index
    %c0_19 = arith.constant 0 : index
    %45 = vector.load %arg3[%c0_18, %c0_19] : memref<32x32xbf16, #tpu.memory_space<vmem>>, vector<32x32xbf16>
    %c0_20 = arith.constant 0 : index
    %c0_21 = arith.constant 0 : index
    %46 = vector.load %arg8[%c0_20, %c0_21] : memref<32x2048xbf16, #tpu.memory_space<vmem>>, vector<32x2048xbf16>
    %cst_22 = arith.constant dense<0.000000e+00> : vector<32x2048xf32>
    %47 = tpu.matmul %45, %46, %cst_22 {dimension_numbers = #tpu.dot_dimension_numbers<[1], [0], [0], [1], [0, 0, 1, 1], [], []>} : vector<32x32xbf16>, vector<32x2048xbf16>, vector<32x2048xf32> -> vector<32x2048xf32>
    %c0_23 = arith.constant 0 : index
    %c0_24 = arith.constant 0 : index
    %48 = vector.load %arg4[%c0_23, %c0_24] : memref<32x4xf32, #tpu.memory_space<vmem>>, vector<32x4xf32>
    %49 = vector.extract_strided_slice %48 {offsets = [0, 0], sizes = [32, 1], strides = [1, 1]} : vector<32x4xf32> to vector<32x1xf32>
    %50 = vector.extract_strided_slice %48 {offsets = [0, 1], sizes = [32, 1], strides = [1, 1]} : vector<32x4xf32> to vector<32x1xf32>
    %51 = vector.extract_strided_slice %48 {offsets = [0, 2], sizes = [32, 1], strides = [1, 1]} : vector<32x4xf32> to vector<32x1xf32>
    %cst_25 = arith.constant dense<0.000000e+00> : vector<32xf32>
    %52 = vector.multi_reduction <add>, %47, %cst_25 [1] : vector<32x2048xf32> to vector<32xf32>
    %53 = vector.shape_cast %52 : vector<32xf32> to vector<32x1xf32>
    %54 = arith.mulf %47, %47 : vector<32x2048xf32>
    %cst_26 = arith.constant dense<0.000000e+00> : vector<32xf32>
    %55 = vector.multi_reduction <add>, %54, %cst_26 [1] : vector<32x2048xf32> to vector<32xf32>
    %56 = vector.shape_cast %55 : vector<32xf32> to vector<32x1xf32>
    %cst_27 = arith.constant 2.048000e+03 : f32
    %57 = vector.broadcast %cst_27 : f32 to vector<32x1xf32>
    %58 = arith.mulf %57, %49 : vector<32x1xf32>
    %59 = arith.addf %53, %58 : vector<32x1xf32>
    %cst_28 = arith.constant 2.000000e+00 : f32
    %60 = vector.broadcast %cst_28 : f32 to vector<32x1xf32>
    %61 = arith.mulf %60, %49 : vector<32x1xf32>
    %62 = arith.mulf %61, %53 : vector<32x1xf32>
    %63 = arith.addf %56, %62 : vector<32x1xf32>
    %cst_29 = arith.constant 2.048000e+03 : f32
    %64 = vector.broadcast %cst_29 : f32 to vector<32x1xf32>
    %65 = arith.mulf %64, %49 : vector<32x1xf32>
    %66 = arith.mulf %65, %49 : vector<32x1xf32>
    %67 = arith.addf %63, %66 : vector<32x1xf32>
    %cst_30 = arith.constant dense<0.000000e+00> : vector<1xf32>
    %68 = vector.multi_reduction <add>, %59, %cst_30 [0] : vector<32x1xf32> to vector<1xf32>
    %69 = vector.shape_cast %68 : vector<1xf32> to vector<1x1xf32>
    %cst_31 = arith.constant 6.553600e+04 : f32
    %70 = vector.broadcast %cst_31 : f32 to vector<1x1xf32>
    %71 = arith.divf %69, %70 : vector<1x1xf32>
    %cst_32 = arith.constant dense<0.000000e+00> : vector<1xf32>
    %72 = vector.multi_reduction <add>, %67, %cst_32 [0] : vector<32x1xf32> to vector<1xf32>
    %73 = vector.shape_cast %72 : vector<1xf32> to vector<1x1xf32>
    %cst_33 = arith.constant 6.553600e+04 : f32
    %74 = vector.broadcast %cst_33 : f32 to vector<1x1xf32>
    %75 = arith.divf %73, %74 : vector<1x1xf32>
    %76 = arith.mulf %71, %71 : vector<1x1xf32>
    %77 = arith.subf %75, %76 : vector<1x1xf32>
    %cst_34 = arith.constant 0.000000e+00 : f32
    %78 = vector.broadcast %cst_34 : f32 to vector<1x1xf32>
    %79 = arith.maximumf %77, %78 : vector<1x1xf32>
    %cst_35 = arith.constant 9.99999974E-6 : f32
    %80 = vector.broadcast %cst_35 : f32 to vector<1x1xf32>
    %81 = arith.addf %79, %80 : vector<1x1xf32>
    %82 = math.rsqrt %81 : vector<1x1xf32>
    %83 = vector.broadcast %82 : vector<1x1xf32> to vector<32x1xf32>
    %84 = arith.mulf %50, %83 : vector<32x1xf32>
    %85 = vector.broadcast %71 : vector<1x1xf32> to vector<32x1xf32>
    %86 = arith.subf %49, %85 : vector<32x1xf32>
    %87 = arith.mulf %86, %84 : vector<32x1xf32>
    %88 = arith.addf %87, %51 : vector<32x1xf32>
    %89 = vector.broadcast %84 : vector<32x1xf32> to vector<32x2048xf32>
    %90 = arith.mulf %47, %89 : vector<32x2048xf32>
    %91 = vector.broadcast %88 : vector<32x1xf32> to vector<32x2048xf32>
    %92 = arith.addf %90, %91 : vector<32x2048xf32>
    %cst_36 = arith.constant 0.000000e+00 : f32
    %93 = vector.broadcast %cst_36 : f32 to vector<32x2048xf32>
    %94 = arith.subf %93, %92 : vector<32x2048xf32>
    %95 = math.exp %94 : vector<32x2048xf32>
    %cst_37 = arith.constant 1.000000e+00 : f32
    %96 = vector.broadcast %cst_37 : f32 to vector<32x2048xf32>
    %97 = arith.addf %96, %95 : vector<32x2048xf32>
    %98 = tpu.reciprocal %97 {approx = true} : vector<32x2048xf32> -> vector<32x2048xf32>
    %99 = arith.mulf %92, %98 : vector<32x2048xf32>
    %100 = arith.truncf %99 : vector<32x2048xf32> to vector<32x2048xbf16>
    %c0_38 = arith.constant 0 : index
    %c0_39 = arith.constant 0 : index
    %c0_40 = arith.constant 0 : index
    %101 = vector.load %arg6[%c0_38, %c0_39, %c0_40] : memref<1x32x2048xbf16, #tpu.memory_space<vmem>>, vector<1x32x2048xbf16>
    %102 = vector.shape_cast %101 : vector<1x32x2048xbf16> to vector<32x2048xbf16>
    %103 = vector.shape_cast %100 : vector<32x2048xbf16> to vector<1x32x2048xbf16>
    tpu.vector_store %arg6[%c0_38, %c0_39, %c0_40], %103 {strides = array<i32>} : memref<1x32x2048xbf16, #tpu.memory_space<vmem>>, vector<1x32x2048xbf16>,
    return
  }
  func.func @transform_0(%arg0: i32, %arg1: i32) -> (i32, i32, i32) {
    %c0_i32 = arith.constant 0 : i32
    %c0_i32_0 = arith.constant 0 : i32
    %c0_i32_1 = arith.constant 0 : i32
    return %arg0, %c0_i32, %c0_i32_0 : i32, i32, i32
  }
  func.func @transform_1(%arg0: i32, %arg1: i32) -> (i32, i32) {
    %c0_i32 = arith.constant 0 : i32
    %c0_i32_0 = arith.constant 0 : i32
    return %arg1, %c0_i32 : i32, i32
  }
  func.func @transform_2(%arg0: i32, %arg1: i32) -> (i32, i32) {
    %c0_i32 = arith.constant 0 : i32
    %c0_i32_0 = arith.constant 0 : i32
    return %arg1, %c0_i32 : i32, i32
  }
  func.func @transform_3(%arg0: i32, %arg1: i32) -> (i32, i32) {
    %c0_i32 = arith.constant 0 : i32
    %c0_i32_0 = arith.constant 0 : i32
    %c0_i32_1 = arith.constant 0 : i32
    return %c0_i32, %c0_i32_0 : i32, i32
  }
  func.func @transform_4(%arg0: i32, %arg1: i32) -> (i32, i32, i32) {
    %c0_i32 = arith.constant 0 : i32
    %c0_i32_0 = arith.constant 0 : i32
    return %arg0, %arg1, %c0_i32 : i32, i32, i32
  }
}

</mosaic_0001>

<llo_original>
// kernel: unconv_sc3d_pallas.1
$region0: #{unconv_sc3d_pallas.1}
  #allocation0 [shape = 'u32[]', space=smem, size = 0x4, offset = 0x4, fixed_abs, tag = 'smem constant byte address 0x4 - core index']
  #allocation1 [shape = 'u32[72,128]{1,0:T(1,128)}', space=vmem, size = 0x9000, scoped, tag = 'internal scratch']
  #allocation2 [shape = 'bf16[4,2432]{1,0:T(4,128)(2,1)}', space=vmem, size = 0x4c00, scoped, tag = 'scratch operand']
  #allocation3 [shape = 'bf16[32,2048]{1,0:T(8,128)(2,1)}', space=vmem, size = 0x20000, scoped, tag = 'scratch operand']
  %s0 = inlined_call_operand.vmem [shape: f32[2,4,2048], index: 0, kind: input, shape index: {}]
  %s1 = inlined_call_operand.vmem [shape: bf16[64,32], index: 1, kind: input, shape index: {}]
  %s2 = inlined_call_operand.vmem [shape: f32[64,4], index: 2, kind: input, shape index: {}]
  %s3 = inlined_call_operand.vmem [shape: bf16[8,2048], index: 3, kind: input, shape index: {}]
  %s4 = inlined_call_operand.vmem [shape: bf16[2,64,2048], index: 4, kind: output, shape index: {}]
  %s5 = sld [smem:[#allocation0]]
  $region49: #{unconv_sc3d_pallas.1} parent=0
    _
  %s7 = ssub.s32 1, %s5
  %s8 = scalar_select 0, %s7, %s5
  loop: start=0, step=1, limit=6
  $region2: #{unconv_sc3d_pallas.1} parent=0 // loop_pre_header
    _
  $region3: #{unconv_sc3d_pallas.1} parent=0 // loop_header
    %s10 = sphi 0, %s14
    %p11 = scmp.ge.s32.totalorder %s10, 6
    %s17 = sphi 0, %s29
    %s18 = sphi 0, %s25
    %s19 = sphi 0, %s17
    %s20 = sphi 0, %s18
    %s21 = sphi 0, %s19
    %s22 = sphi 0, %s20
    %s32 = sphi 0, %s34
    %s35 = sphi 0, %s32
    %s36 = sphi 0, %s35
    %s52 = sphi 0, %s36
    %s58 = sphi 0, %s60
    %s61 = sphi 0, %s58
    %s62 = sphi 0, %s61
    %s78 = sphi 0, %s62
    %s84 = sphi 0, %s86
    %s87 = sphi 0, %s84
    %s88 = sphi 0, %s87
    %s104 = sphi 0, %s88
    %s108 = sphi 0, %s108
    %s110 = sphi 0, %s108
    %s111 = sphi 0, %s110
    %s125 = sphi 0, %s111
    %s133 = sphi 0, %s135
    %s136 = sphi 0, %s133
    %s137 = sphi 0, %s136
    %s153 = sphi 0, %s137
  $region4: #{unconv_sc3d_pallas.1} parent=0 // loop_header_branch
    %13 = sbr.rel (%p11) target = $region8
  $region5: #{unconv_sc3d_pallas.1} parent=0 // loop_body
    %s15 = ssub.s32 %s10, 1
    %s16 = ssub.s32 %s10, 2
    %s23 = sadd.s32 1, %s18
    %p24 = scmp.ge.s32.totalorder %s23, 2
    %s25 = scalar_select %p24, 0, %s23
    %s26 = sadd.s32 1, %s17
    %s27 = scalar_select %p24, %s26, %s17
    %p28 = scmp.ge.s32.totalorder %s27, 2
    %s29 = scalar_select %p28, 0, %s27
    %s30 = ssub.s32 %s17, %s29
    %p31 = scmp.eq.s32.totalorder %s30, 0
    %s33 = sadd.s32 %s32, 1
    %s34 = scalar_select %p31, %s32, %s33
    %p37 = pneg %p31
    %p38 = scmp.eq.s32.totalorder %s10, 3
    %p39 = por %p37, %p38
    %p40 = scmp.ne.s32.totalorder %s32, %s35
    %p41 = scmp.eq.s32.totalorder %s10, 0
    %p42 = por %p40, %p41
    %p43 = scmp.ne.s32.totalorder %s32, %s35
    %p44 = scmp.eq.s32.totalorder %s15, 3
    %p45 = por %p43, %p44
    %p46 = scmp.ne.s32.totalorder %s35, %s36
    %p47 = scmp.eq.s32.totalorder %s15, 0
    %p48 = por %p46, %p47
    %p49 = scmp.ne.s32.totalorder %s35, %s36
    %p50 = scmp.eq.s32.totalorder %s16, 3
    %p51 = por %p49, %p50
    %p53 = scmp.ne.s32.totalorder %s36, %s52
    %p54 = scmp.eq.s32.totalorder %s16, 0
    %p55 = por %p53, %p54
    %s56 = ssub.s32 %s18, %s25
    %p57 = scmp.eq.s32.totalorder %s56, 0
    %s59 = sadd.s32 %s58, 1
    %s60 = scalar_select %p57, %s58, %s59
    %p63 = pneg %p57
    %p64 = scmp.eq.s32.totalorder %s10, 3
    %p65 = por %p63, %p64
    %p66 = scmp.ne.s32.totalorder %s58, %s61
    %p67 = scmp.eq.s32.totalorder %s10, 0
    %p68 = por %p66, %p67
    %p69 = scmp.ne.s32.totalorder %s58, %s61
    %p70 = scmp.eq.s32.totalorder %s15, 3
    %p71 = por %p69, %p70
    %p72 = scmp.ne.s32.totalorder %s61, %s62
    %p73 = scmp.eq.s32.totalorder %s15, 0
    %p74 = por %p72, %p73
    %p75 = scmp.ne.s32.totalorder %s61, %s62
    %p76 = scmp.eq.s32.totalorder %s16, 3
    %p77 = por %p75, %p76
    %p79 = scmp.ne.s32.totalorder %s62, %s78
    %p80 = scmp.eq.s32.totalorder %s16, 0
    %p81 = por %p79, %p80
    %s82 = ssub.s32 %s18, %s25
    %p83 = scmp.eq.s32.totalorder %s82, 0
    %s85 = sadd.s32 %s84, 1
    %s86 = scalar_select %p83, %s84, %s85
    %p89 = pneg %p83
    %p90 = scmp.eq.s32.totalorder %s10, 3
    %p91 = por %p89, %p90
    %p92 = scmp.ne.s32.totalorder %s84, %s87
    %p93 = scmp.eq.s32.totalorder %s10, 0
    %p94 = por %p92, %p93
    %p95 = scmp.ne.s32.totalorder %s84, %s87
    %p96 = scmp.eq.s32.totalorder %s15, 3
    %p97 = por %p95, %p96
    %p98 = scmp.ne.s32.totalorder %s87, %s88
    %p99 = scmp.eq.s32.totalorder %s15, 0
    %p100 = por %p98, %p99
    %p101 = scmp.ne.s32.totalorder %s87, %s88
    %p102 = scmp.eq.s32.totalorder %s16, 3
    %p103 = por %p101, %p102
    %p105 = scmp.ne.s32.totalorder %s88, %s104
    %p106 = scmp.eq.s32.totalorder %s16, 0
    %p107 = por %p105, %p106
    %s109 = sadd.s32 %s108, 1
    %p112 = scmp.eq.s32.totalorder %s10, 3
    %p113 = scmp.ne.s32.totalorder %s108, %s110
    %p114 = scmp.eq.s32.totalorder %s10, 0
    %p115 = por %p113, %p114
    %p116 = scmp.ne.s32.totalorder %s108, %s110
    %p117 = scmp.eq.s32.totalorder %s15, 3
    %p118 = por %p116, %p117
    %p119 = scmp.ne.s32.totalorder %s110, %s111
    %p120 = scmp.eq.s32.totalorder %s15, 0
    %p121 = por %p119, %p120
    %p122 = scmp.ne.s32.totalorder %s110, %s111
    %p123 = scmp.eq.s32.totalorder %s16, 3
    %p124 = por %p122, %p123
    %p126 = scmp.ne.s32.totalorder %s111, %s125
    %p127 = scmp.eq.s32.totalorder %s16, 0
    %p128 = por %p126, %p127
    %s129 = ssub.s32 %s17, %s29
    %s130 = ssub.s32 %s18, %s25
    %s131 = sor.u32 %s129, %s130
    %p132 = scmp.eq.s32.totalorder %s131, 0
    %s134 = sadd.s32 %s133, 1
    %s135 = scalar_select %p132, %s133, %s134
    %p138 = pneg %p132
    %p139 = scmp.eq.s32.totalorder %s10, 3
    %p140 = por %p138, %p139
    %p141 = scmp.ne.s32.totalorder %s133, %s136
    %p142 = scmp.eq.s32.totalorder %s10, 0
    %p143 = por %p141, %p142
    %p144 = scmp.ne.s32.totalorder %s133, %s136
    %p145 = scmp.eq.s32.totalorder %s15, 3
    %p146 = por %p144, %p145
    %p147 = scmp.ne.s32.totalorder %s136, %s137
    %p148 = scmp.eq.s32.totalorder %s15, 0
    %p149 = por %p147, %p148
    %p150 = scmp.ne.s32.totalorder %s136, %s137
    %p151 = scmp.eq.s32.totalorder %s16, 3
    %p152 = por %p150, %p151
    %p154 = scmp.ne.s32.totalorder %s137, %s153
    %p155 = scmp.eq.s32.totalorder %s16, 0
    %p156 = por %p154, %p155
    %p157 = scmp.le.s32.totalorder 1, %s10
    %p158 = scmp.lt.s32.totalorder %s10, 5
    %p159 = pnand %p157, %p158
    %p160 = pneg %p159
    // Predicated region
    $region9: #{unconv_sc3d_pallas.1} parent=5 // pred_check
      _
    $region10: #{unconv_sc3d_pallas.1} parent=5 // pred_check_branch
      %162 = sbr.rel (%p159) target = $region12
    $region11: #{unconv_sc3d_pallas.1} parent=5 // pred_region
      %s163 = ssub.s32 %s10, 1
      // Predicated region
      $region13: #{unconv_sc3d_pallas.1} parent=11 // pred_check
        %p164 = pneg %p121
      $region14: #{unconv_sc3d_pallas.1} parent=11 // pred_check_branch
        %166 = sbr.rel (%p164) target = $region16
      $region15: #{unconv_sc3d_pallas.1} parent=11 // pred_region
        _
      $region16: #{unconv_sc3d_pallas.1} parent=11 // pred_fallthru
        _
    $region12: #{unconv_sc3d_pallas.1} parent=5 // pred_fallthru
      _
    %p167 = scmp.lt.s32.totalorder %s10, 4
    // Predicated region
    $region17: #{unconv_sc3d_pallas.1} parent=5 // pred_check
      %p168 = pneg %p167
    $region18: #{unconv_sc3d_pallas.1} parent=5 // pred_check_branch
      %170 = sbr.rel (%p168) target = $region20
    $region19: #{unconv_sc3d_pallas.1} parent=5 // pred_region
      // Predicated region
      $region21: #{unconv_sc3d_pallas.1} parent=19 // pred_check
        %p171 = pneg %p42
      $region22: #{unconv_sc3d_pallas.1} parent=19 // pred_check_branch
        %173 = sbr.rel (%p171) target = $region24
      $region23: #{unconv_sc3d_pallas.1} parent=19 // pred_region
        %p174 = scmp.lt.s32.totalorder %s17, 1
        %s175 = scalar_select %p174, %s17, 1
        %s176 = smul.addr %s175, 16
        %s177 = smul.addr %s176, 4
        %s178 = scalar_lea.vmem %s0, %s177
      $region24: #{unconv_sc3d_pallas.1} parent=19 // pred_fallthru
        _
      // Predicated region
      $region25: #{unconv_sc3d_pallas.1} parent=19 // pred_check
        %p179 = pneg %p68
      $region26: #{unconv_sc3d_pallas.1} parent=19 // pred_check_branch
        %181 = sbr.rel (%p179) target = $region28
      $region27: #{unconv_sc3d_pallas.1} parent=19 // pred_region
        %s182 = smul.u32 4, %s18
        %p183 = scmp.lt.s32.totalorder %s182, 7
        %s184 = scalar_select %p183, %s182, 7
        %s185 = smul.addr %s184, 4
        %s186 = scalar_lea.vmem %s1, %s185
        %s187 = smul.u32 4, %s18
      $region28: #{unconv_sc3d_pallas.1} parent=19 // pred_fallthru
        _
      // Predicated region
      $region29: #{unconv_sc3d_pallas.1} parent=19 // pred_check
        %p188 = pneg %p94
      $region30: #{unconv_sc3d_pallas.1} parent=19 // pred_check_branch
        %190 = sbr.rel (%p188) target = $region32
      $region31: #{unconv_sc3d_pallas.1} parent=19 // pred_region
        %s191 = smul.u32 4, %s18
        %p192 = scmp.lt.s32.totalorder %s191, 7
        %s193 = scalar_select %p192, %s191, 7
        %s194 = smul.addr %s193, 8
        %s195 = scalar_lea.vmem %s2, %s194
        %s196 = smul.u32 4, %s18
      $region32: #{unconv_sc3d_pallas.1} parent=19 // pred_fallthru
        _
    $region20: #{unconv_sc3d_pallas.1} parent=5 // pred_fallthru
      _
    %p197 = scmp.le.s32.totalorder 1, %s10
    %p198 = scmp.lt.s32.totalorder %s10, 5
    %p199 = pnand %p197, %p198
    %p200 = pneg %p199
    // Predicated region
    $region33: #{unconv_sc3d_pallas.1} parent=5 // pred_check
      _
    $region34: #{unconv_sc3d_pallas.1} parent=5 // pred_check_branch
      %202 = sbr.rel (%p199) target = $region36
    $region35: #{unconv_sc3d_pallas.1} parent=5 // pred_region
      %s203 = ssub.s32 %s10, 1
      %p204 = scmp.lt.s32.totalorder %s19, 1
      %s205 = scalar_select %p204, %s19, 1
      %s206 = smul.addr %s205, 16
      %s207 = smul.addr %s206, 4
      %s208 = scalar_lea.vmem %s0, %s207
      %p209 = pneg %p48
      %p210 = pneg %p45
      %s211 = smul.u32 4, %s20
      %p212 = scmp.lt.s32.totalorder %s211, 7
      %s213 = scalar_select %p212, %s211, 7
      %s214 = smul.addr %s213, 4
      %s215 = scalar_lea.vmem %s1, %s214
      %p216 = pneg %p74
      %p217 = pneg %p71
      %s218 = smul.u32 4, %s20
      %p219 = scmp.lt.s32.totalorder %s218, 7
      %s220 = scalar_select %p219, %s218, 7
      %s221 = smul.addr %s220, 8
      %s222 = scalar_lea.vmem %s2, %s221
      %p223 = pneg %p100
      %p224 = pneg %p97
      %p225 = pneg %p121
      %p226 = pneg %p118
      %p227 = pneg %p149
      %p228 = pneg %p146
      %s229 = smul.u32 4, %s20
      %p230 = scmp.lt.s32.totalorder %s19, 1
      %s231 = scalar_select %p230, %s19, 1
      %p232 = scmp.lt.s32.totalorder %s229, 7
      %s233 = scalar_select %p232, %s229, 7
      %s234 = smul.addr %s233, 16
      %s235 = smul.addr %s231, 128
      %s236 = sadd.s32 %s234, %s235
      %s237 = smul.addr %s236, 4
      %s238 = scalar_lea.vmem %s4, %s237
      %p239 = scmp.lt.s32.totalorder %s19, 1
      %s240 = scalar_select %p239, %s19, 1
      %s241 = smul.addr %s240, 16
      %s242 = smul.addr %s241, 4
      %s243 = scalar_lea.vmem %s0, %s242
      %s244 = smul.u32 4, %s20
      %p245 = scmp.lt.s32.totalorder %s244, 7
      %s246 = scalar_select %p245, %s244, 7
      %s247 = smul.addr %s246, 4
      %s248 = scalar_lea.vmem %s1, %s247
      %s249 = smul.u32 4, %s20
      %s250 = smul.u32 4, %s20
      %p251 = scmp.lt.s32.totalorder %s250, 7
      %s252 = scalar_select %p251, %s250, 7
      %s253 = smul.addr %s252, 8
      %s254 = scalar_lea.vmem %s2, %s253
      %s255 = smul.u32 4, %s20
      %s256 = smul.u32 4, %s20
      %p257 = scmp.lt.s32.totalorder %s19, 1
      %s258 = scalar_select %p257, %s19, 1
      %p259 = scmp.lt.s32.totalorder %s256, 7
      %s260 = scalar_select %p259, %s256, 7
      %s261 = smul.addr %s260, 16
      %s262 = smul.addr %s258, 128
      %s263 = sadd.s32 %s261, %s262
      %s264 = smul.addr %s263, 4
      %s265 = scalar_lea.vmem %s4, %s264
      %s266 = smul.u32 4, %s20
      %v268 = vld [vmem:[%s243] sm:$0xff]
      %v269 = vld [vmem:[%s243 + $0x8] sm:$0xff]
      %v270 = vld [vmem:[%s243 + $0x10] sm:$0xff]
      %v271 = vld [vmem:[%s243 + $0x18] sm:$0xff]
      %v272 = vld [vmem:[%s243 + $0x20] sm:$0xff]
      %v273 = vld [vmem:[%s243 + $0x28] sm:$0xff]
      %v274 = vld [vmem:[%s243 + $0x30] sm:$0xff]
      %v275 = vld [vmem:[%s243 + $0x38] sm:$0xff]
      %284 = vst [vmem:[#allocation1] ss:$2 sm:$0xff] %v268
      %s285 = scalar_lea.vmem [#allocation1], 16
      %286 = vst [vmem:[%s285] ss:$2 sm:$0xff] %v269
      %s287 = scalar_lea.vmem [#allocation1], 32
      %288 = vst [vmem:[%s287] ss:$2 sm:$0xff] %v270
      %s289 = scalar_lea.vmem [#allocation1], 48
      %290 = vst [vmem:[%s289] ss:$2 sm:$0xff] %v271
      %v291 = vld.sshfl [vmem:[#allocation1] sm:$0xff pattern:$0x75316420]
      %v292 = vld.sshfl [vmem:[#allocation1 + $0x8] sm:$0xff pattern:$0x75316420]
      %v293 = vld.sshfl [vmem:[#allocation1 + $0x10] sm:$0xff pattern:$0x75316420]
      %v294 = vld.sshfl [vmem:[#allocation1 + $0x18] sm:$0xff pattern:$0x75316420]
      %v295 = vld.sshfl [vmem:[#allocation1 + $0x20] sm:$0xff pattern:$0x75316420]
      %v296 = vld.sshfl [vmem:[#allocation1 + $0x28] sm:$0xff pattern:$0x75316420]
      %v297 = vld.sshfl [vmem:[#allocation1 + $0x30] sm:$0xff pattern:$0x75316420]
      %v298 = vld.sshfl [vmem:[#allocation1 + $0x38] sm:$0xff pattern:$0x75316420]
      %299 = vst [vmem:[#allocation1] ss:$2 sm:$0xff] %v272
      %300 = vst [vmem:[%s285] ss:$2 sm:$0xff] %v273
      %301 = vst [vmem:[%s287] ss:$2 sm:$0xff] %v274
      %302 = vst [vmem:[%s289] ss:$2 sm:$0xff] %v275
      %v303 = vld.sshfl [vmem:[#allocation1] sm:$0xff pattern:$0x75316420]
      %v304 = vld.sshfl [vmem:[#allocation1 + $0x8] sm:$0xff pattern:$0x75316420]
      %v305 = vld.sshfl [vmem:[#allocation1 + $0x10] sm:$0xff pattern:$0x75316420]
      %v306 = vld.sshfl [vmem:[#allocation1 + $0x18] sm:$0xff pattern:$0x75316420]
      %v307 = vld.sshfl [vmem:[#allocation1 + $0x20] sm:$0xff pattern:$0x75316420]
      %v308 = vld.sshfl [vmem:[#allocation1 + $0x28] sm:$0xff pattern:$0x75316420]
      %v309 = vld.sshfl [vmem:[#allocation1 + $0x30] sm:$0xff pattern:$0x75316420]
      %v310 = vld.sshfl [vmem:[#allocation1 + $0x38] sm:$0xff pattern:$0x75316420]
      %v327 = vpack.c.bf16 %v292, %v291
      %v328 = vpack.c.bf16 %v294, %v293
      %v329 = vpack.c.bf16 %v296, %v295
      %v330 = vpack.c.bf16 %v298, %v297
      %v331 = vpack.c.bf16 %v304, %v303
      %v332 = vpack.c.bf16 %v306, %v305
      %v333 = vpack.c.bf16 %v308, %v307
      %v334 = vpack.c.bf16 %v310, %v309
      %v343 = vrot.slane %v327, 2
      %v344 = vrot.slane %v328, 4
      %v345 = vrot.slane %v328, 6
      %v346 = vrot.slane %v329, 2
      %v347 = vrot.slane %v330, 4
      %v348 = vrot.slane %v330, 6
      %v349 = vrot.slane %v331, 2
      %v350 = vrot.slane %v332, 4
      %v351 = vrot.slane %v332, 6
      %v352 = vrot.slane %v333, 2
      %v353 = vrot.slane %v334, 4
      %v354 = vrot.slane %v334, 6
      %vm355 = vcmask 1041408
      %v358 = vsel %vm355, %v327, %v343
      %vm359 = vcmask 1045508
      %v362 = vsel %vm359, %v344, %v345
      %vm363 = vcmask 1043456
      %v364 = vsel %vm363, %v358, %v362
      %v367 = vsel %vm355, %v329, %v346
      %v370 = vsel %vm359, %v347, %v348
      %v371 = vsel %vm363, %v367, %v370
      %v374 = vsel %vm355, %v331, %v349
      %v377 = vsel %vm359, %v350, %v351
      %v378 = vsel %vm363, %v374, %v377
      %v381 = vsel %vm355, %v333, %v352
      %v384 = vsel %vm359, %v353, %v354
      %v385 = vsel %vm363, %v381, %v384
      %390 = vst [vmem:[#allocation2] sm:$0xff] %v364
      %391 = vst [vmem:[#allocation2 + $0x8] sm:$0xff] %v371
      %392 = vst [vmem:[#allocation2 + $0x10] sm:$0xff] %v378
      %393 = vst [vmem:[#allocation2 + $0x18] sm:$0xff] %v385
      %394 = vst [vmem:[#allocation2 + $0x20] sm:$0x3f] 0
      %v395 = vld [vmem:[#allocation2] sm:$0xff]
      %v396 = vld [vmem:[#allocation2 + $0x8] sm:$0xff]
      %v397 = vld [vmem:[#allocation2 + $0x10] sm:$0xff]
      %v398 = vld [vmem:[#allocation2 + $0x18] sm:$0xff]
      %v399 = vld [vmem:[#allocation2 + $0x20] sm:$0x3f]
      %v400 = vld [vmem:[%s3] sm:$0xff]
      %v401 = vld [vmem:[%s3 + $0x8] sm:$0xff]
      %v402 = vld [vmem:[%s3 + $0x10] sm:$0xff]
      %v403 = vld [vmem:[%s3 + $0x18] sm:$0xff]
      %v404 = vld [vmem:[%s3 + $0x20] sm:$0xff]
      %v405 = vld [vmem:[%s3 + $0x28] sm:$0xff]
      %v406 = vld [vmem:[%s3 + $0x30] sm:$0xff]
      %v407 = vld [vmem:[%s3 + $0x38] sm:$0xff]
      %409 = vst [vmem:[#allocation1] ss:$2 sm:$0xff] %v395
      %s411 = scalar_lea.vmem [#allocation1], 16
      %412 = vst [vmem:[%s411] ss:$2 sm:$0xff] %v396
      %s414 = scalar_lea.vmem [#allocation1], 32
      %415 = vst [vmem:[%s414] ss:$2 sm:$0xff] %v397
      %s417 = scalar_lea.vmem [#allocation1], 48
      %418 = vst [vmem:[%s417] ss:$2 sm:$0xff] %v398
      %v419 = vld.sshfl [vmem:[#allocation1] sm:$0xff pattern:$0x75643120]
      %v420 = vld.sshfl [vmem:[#allocation1 + $0x8] sm:$0xff pattern:$0x75643120]
      %v421 = vld.sshfl [vmem:[#allocation1 + $0x10] sm:$0xff pattern:$0x75643120]
      %v422 = vld.sshfl [vmem:[#allocation1 + $0x18] sm:$0xff pattern:$0x75643120]
      %v423 = vld.sshfl [vmem:[#allocation1 + $0x20] sm:$0xff pattern:$0x75643120]
      %v424 = vld.sshfl [vmem:[#allocation1 + $0x28] sm:$0xff pattern:$0x75643120]
      %v425 = vld.sshfl [vmem:[#allocation1 + $0x30] sm:$0xff pattern:$0x75643120]
      %v426 = vld.sshfl [vmem:[#allocation1 + $0x38] sm:$0xff pattern:$0x75643120]
      %435 = vst [vmem:[#allocation3] sm:$0x33] %v419
      %436 = vst [vmem:[#allocation3 + $0x8] sm:$0x33] %v420
      %437 = vst [vmem:[#allocation3 + $0x10] sm:$0x33] %v421
      %438 = vst [vmem:[#allocation3 + $0x18] sm:$0x33] %v422
      %439 = vst [vmem:[#allocation3 + $0x20] sm:$0x33] %v423
      %440 = vst [vmem:[#allocation3 + $0x28] sm:$0x33] %v424
      %441 = vst [vmem:[#allocation3 + $0x30] sm:$0x33] %v425
      %442 = vst [vmem:[#allocation3 + $0x38] sm:$0x33] %v426
      %v451 = vunpack.c.l.b16 %v400
      %v452 = vunpack.c.h.b16 %v400
      %v453 = vunpack.c.l.b16 %v401
      %v454 = vunpack.c.h.b16 %v401
      %v455 = vunpack.c.l.b16 %v402
      %v456 = vunpack.c.h.b16 %v402
      %v457 = vunpack.c.l.b16 %v403
      %v458 = vunpack.c.h.b16 %v403
      %v459 = vunpack.c.l.b16 %v404
      %v460 = vunpack.c.h.b16 %v404
      %v461 = vunpack.c.l.b16 %v405
      %v462 = vunpack.c.h.b16 %v405
      %v463 = vunpack.c.l.b16 %v406
      %v464 = vunpack.c.h.b16 %v406
      %v465 = vunpack.c.l.b16 %v407
      %v466 = vunpack.c.h.b16 %v407
      %v467 = vpack.c.b16 %v451, %v451
      %v468 = vpack.c.b16 %v452, %v452
      %v469 = vpack.c.b16 %v453, %v453
      %v470 = vpack.c.b16 %v454, %v454
      %v471 = vpack.c.b16 %v455, %v455
      %v472 = vpack.c.b16 %v456, %v456
      %v473 = vpack.c.b16 %v457, %v457
      %v474 = vpack.c.b16 %v458, %v458
      %v475 = vpack.c.b16 %v459, %v459
      %v476 = vpack.c.b16 %v460, %v460
      %v477 = vpack.c.b16 %v461, %v461
      %v478 = vpack.c.b16 %v462, %v462
      %v479 = vpack.c.b16 %v463, %v463
      %v480 = vpack.c.b16 %v464, %v464
      %v481 = vpack.c.b16 %v465, %v465
      %v482 = vpack.c.b16 %v466, %v466
      %v484 = vshrl.u32 %v467, 16
      %v485 = vpack.i.b16 %v484, %v484
      %v487 = vperm.slane %v485, 0
      %v489 = vshrl.u32 %v468, 16
      %v490 = vpack.i.b16 %v489, %v489
      %v492 = vperm.slane %v490, 0
      %v494 = vshrl.u32 %v469, 16
      %v495 = vpack.i.b16 %v494, %v494
      %v497 = vperm.slane %v495, 0
      %v499 = vshrl.u32 %v470, 16
      %v500 = vpack.i.b16 %v499, %v499
      %v502 = vperm.slane %v500, 0
      %v504 = vshrl.u32 %v471, 16
      %v505 = vpack.i.b16 %v504, %v504
      %v507 = vperm.slane %v505, 0
      %v509 = vshrl.u32 %v472, 16
      %v510 = vpack.i.b16 %v509, %v509
      %v512 = vperm.slane %v510, 0
      %v514 = vshrl.u32 %v473, 16
      %v515 = vpack.i.b16 %v514, %v514
      %v517 = vperm.slane %v515, 0
      %v519 = vshrl.u32 %v474, 16
      %v520 = vpack.i.b16 %v519, %v519
      %v522 = vperm.slane %v520, 0
      %v524 = vshrl.u32 %v475, 16
      %v525 = vpack.i.b16 %v524, %v524
      %v527 = vperm.slane %v525, 0
      %v529 = vshrl.u32 %v476, 16
      %v530 = vpack.i.b16 %v529, %v529
      %v532 = vperm.slane %v530, 0
      %v534 = vshrl.u32 %v477, 16
      %v535 = vpack.i.b16 %v534, %v534
      %v537 = vperm.slane %v535, 0
      %v539 = vshrl.u32 %v478, 16
      %v540 = vpack.i.b16 %v539, %v539
      %v542 = vperm.slane %v540, 0
      %v544 = vshrl.u32 %v479, 16
      %v545 = vpack.i.b16 %v544, %v544
      %v547 = vperm.slane %v545, 0
      %v549 = vshrl.u32 %v480, 16
      %v550 = vpack.i.b16 %v549, %v549
      %v552 = vperm.slane %v550, 0
      %v554 = vshrl.u32 %v481, 16
      %v555 = vpack.i.b16 %v554, %v554
      %v557 = vperm.slane %v555, 0
      %v559 = vshrl.u32 %v482, 16
      %v560 = vpack.i.b16 %v559, %v559
      %v562 = vperm.slane %v560, 0
      %v563 = vunpack.c.l.bf16 %v395
      %v564 = vunpack.c.h.bf16 %v395
      %v565 = vunpack.c.l.bf16 %v396
      %v566 = vunpack.c.h.bf16 %v396
      %v567 = vunpack.c.l.bf16 %v397
      %v568 = vunpack.c.h.bf16 %v397
      %v569 = vunpack.c.l.bf16 %v398
      %v570 = vunpack.c.h.bf16 %v398
      %v571 = vunpack.c.l.bf16 %v399
      %v572 = vunpack.c.l.bf16 %v487
      %v573 = vunpack.c.l.bf16 %v492
      %v574 = vunpack.c.l.bf16 %v497
      %v575 = vunpack.c.l.bf16 %v502
      %v576 = vunpack.c.l.bf16 %v507
      %v577 = vunpack.c.l.bf16 %v512
      %v578 = vunpack.c.l.bf16 %v517
      %v579 = vunpack.c.l.bf16 %v522
      %v580 = vunpack.c.l.bf16 %v527
      %v581 = vunpack.c.l.bf16 %v532
      %v582 = vunpack.c.l.bf16 %v537
      %v583 = vunpack.c.l.bf16 %v542
      %v584 = vunpack.c.l.bf16 %v547
      %v585 = vunpack.c.l.bf16 %v552
      %v586 = vunpack.c.l.bf16 %v557
      %v587 = vunpack.c.l.bf16 %v562
      %v604 = vrot.slane %v573, 4
      %v605 = vrot.slane %v575, 4
      %v606 = vrot.slane %v577, 4
      %v607 = vrot.slane %v579, 4
      %v608 = vrot.slane %v581, 4
      %v609 = vrot.slane %v583, 4
      %v610 = vrot.slane %v585, 4
      %v611 = vrot.slane %v587, 4
      %v612 = vsel %vm363, %v572, %v604
      %v613 = vsel %vm363, %v574, %v605
      %v614 = vsel %vm363, %v576, %v606
      %v615 = vsel %vm363, %v578, %v607
      %v616 = vsel %vm363, %v580, %v608
      %v617 = vsel %vm363, %v582, %v609
      %v618 = vsel %vm363, %v584, %v610
      %v619 = vsel %vm363, %v586, %v611
      %620 = vrot.lane.b32.xlu0 %v612, 1
      %v621 = vpop.permute.xlu0 %620
      %622 = vrot.lane.b32.xlu0 %v613, 1
      %v623 = vpop.permute.xlu0 %622
      %624 = vrot.lane.b32.xlu0 %v614, 1
      %v625 = vpop.permute.xlu0 %624
      %626 = vrot.lane.b32.xlu0 %v615, 1
      %v627 = vpop.permute.xlu0 %626
      %628 = vrot.lane.b32.xlu0 %v616, 1
      %v629 = vpop.permute.xlu0 %628
      %630 = vrot.lane.b32.xlu0 %v617, 1
      %v631 = vpop.permute.xlu0 %630
      %632 = vrot.lane.b32.xlu0 %v618, 1
      %v633 = vpop.permute.xlu0 %632
      %634 = vrot.lane.b32.xlu0 %v619, 1
      %v635 = vpop.permute.xlu0 %634
      %v636 = vrot.slane %v621, 4
      %v637 = vrot.slane %v623, 4
      %v638 = vrot.slane %v625, 4
      %v639 = vrot.slane %v627, 4
      %v640 = vrot.slane %v629, 4
      %v641 = vrot.slane %v631, 4
      %v642 = vrot.slane %v633, 4
      %v643 = vrot.slane %v635, 4
      %vm644 = vcmask 7168
      %v645 = vsel %vm644, %v636, %v621
      %v646 = vsel %vm363, %v636, %v637
      %v647 = vsel %vm644, %v646, %v623
      %v648 = vsel %vm363, %v637, %v638
      %v649 = vsel %vm644, %v648, %v625
      %v650 = vsel %vm363, %v638, %v639
      %v651 = vsel %vm644, %v650, %v627
      %v652 = vsel %vm363, %v639, %v640
      %v653 = vsel %vm644, %v652, %v629
      %v654 = vsel %vm363, %v640, %v641
      %v655 = vsel %vm644, %v654, %v631
      %v656 = vsel %vm363, %v641, %v642
      %v657 = vsel %vm644, %v656, %v633
      %v658 = vsel %vm363, %v642, %v643
      %v659 = vsel %vm644, %v658, %v635
      %v669 = vmul.f32 %v563, %v645
      %v670 = vmul.f32 %v564, %v647
      %v671 = vmul.f32 %v565, %v649
      %v672 = vmul.f32 %v566, %v651
      %v673 = vmul.f32 %v567, %v653
      %v674 = vmul.f32 %v568, %v655
      %v675 = vmul.f32 %v569, %v657
      %v676 = vmul.f32 %v570, %v659
      %v677 = vmul.f32 %v571, %v643
      %687 = vst [vmem:[#allocation1] ss:$2 sm:$0xff] %v669
      %s688 = scalar_lea.vmem [#allocation1], 16
      %689 = vst [vmem:[%s688] ss:$2 sm:$0xff] %v670
      %s690 = scalar_lea.vmem [#allocation1], 32
      %691 = vst [vmem:[%s690] ss:$2 sm:$0xff] %v671
      %s692 = scalar_lea.vmem [#allocation1], 48
      %693 = vst [vmem:[%s692] ss:$2 sm:$0xff] %v672
      %v694 = vld.sshfl [vmem:[#allocation1] sm:$0xff pattern:$0x75316420]
      %v695 = vld.sshfl [vmem:[#allocation1 + $0x8] sm:$0xff pattern:$0x75316420]
      %v696 = vld.sshfl [vmem:[#allocation1 + $0x10] sm:$0xff pattern:$0x75316420]
      %v697 = vld.sshfl [vmem:[#allocation1 + $0x18] sm:$0xff pattern:$0x75316420]
      %v698 = vld.sshfl [vmem:[#allocation1 + $0x20] sm:$0xff pattern:$0x75316420]
      %v699 = vld.sshfl [vmem:[#allocation1 + $0x28] sm:$0xff pattern:$0x75316420]
      %v700 = vld.sshfl [vmem:[#allocation1 + $0x30] sm:$0xff pattern:$0x75316420]
      %v701 = vld.sshfl [vmem:[#allocation1 + $0x38] sm:$0xff pattern:$0x75316420]
      %702 = vst [vmem:[#allocation1] ss:$2 sm:$0xff] %v673
      %703 = vst [vmem:[%s688] ss:$2 sm:$0xff] %v674
      %704 = vst [vmem:[%s690] ss:$2 sm:$0xff] %v675
      %705 = vst [vmem:[%s692] ss:$2 sm:$0xff] %v676
      %v706 = vld.sshfl [vmem:[#allocation1] sm:$0xff pattern:$0x75316420]
      %v707 = vld.sshfl [vmem:[#allocation1 + $0x8] sm:$0xff pattern:$0x75316420]
      %v708 = vld.sshfl [vmem:[#allocation1 + $0x10] sm:$0xff pattern:$0x75316420]
      %v709 = vld.sshfl [vmem:[#allocation1 + $0x18] sm:$0xff pattern:$0x75316420]
      %v710 = vld.sshfl [vmem:[#allocation1 + $0x20] sm:$0xff pattern:$0x75316420]
      %v711 = vld.sshfl [vmem:[#allocation1 + $0x28] sm:$0xff pattern:$0x75316420]
      %v712 = vld.sshfl [vmem:[#allocation1 + $0x30] sm:$0xff pattern:$0x75316420]
      %v713 = vld.sshfl [vmem:[#allocation1 + $0x38] sm:$0xff pattern:$0x75316420]
      %714 = vst [vmem:[#allocation1] ss:$2 sm:$0xff] %v677
      %v715 = vld.sshfl [vmem:[#allocation1] sm:$0xff pattern:$0x75316420]
      %v733 = vpack.c.bf16 %v695, %v694
      %v734 = vpack.c.bf16 %v697, %v696
      %v735 = vpack.c.bf16 %v699, %v698
      %v736 = vpack.c.bf16 %v701, %v700
      %v737 = vpack.c.bf16 %v707, %v706
      %v738 = vpack.c.bf16 %v709, %v708
      %v739 = vpack.c.bf16 %v711, %v710
      %v740 = vpack.c.bf16 %v713, %v712
      %v741 = vpack.c.bf16 %v715, %v715
      %v751 = vrot.slane %v733, 6
      %v752 = vrot.slane %v734, 6
      %v753 = vrot.slane %v735, 6
      %v754 = vrot.slane %v736, 6
      %v755 = vrot.slane %v737, 6
      %v756 = vrot.slane %v738, 6
      %v757 = vrot.slane %v739, 6
      %v758 = vrot.slane %v740, 6
      %v759 = vrot.slane %v741, 6
      %760 = vrot.lane.b32.xlu0 %v751, 127
      %v761 = vpop.permute.xlu0 %760
      %762 = vrot.lane.b32.xlu0 %v752, 127
      %v763 = vpop.permute.xlu0 %762
      %764 = vrot.lane.b32.xlu0 %v753, 127
      %v765 = vpop.permute.xlu0 %764
      %766 = vrot.lane.b32.xlu0 %v754, 127
      %v767 = vpop.permute.xlu0 %766
      %768 = vrot.lane.b32.xlu0 %v755, 127
      %v769 = vpop.permute.xlu0 %768
      %770 = vrot.lane.b32.xlu0 %v756, 127
      %v771 = vpop.permute.xlu0 %770
      %772 = vrot.lane.b32.xlu0 %v757, 127
      %v773 = vpop.permute.xlu0 %772
      %774 = vrot.lane.b32.xlu0 %v758, 127
      %v775 = vpop.permute.xlu0 %774
      %776 = vrot.lane.b32.xlu0 %v759, 127
      %v777 = vpop.permute.xlu0 %776
      %v778 = vrot.slane %v761, 4
      %v779 = vrot.slane %v763, 4
      %v780 = vrot.slane %v765, 4
      %v781 = vrot.slane %v767, 4
      %v782 = vrot.slane %v769, 4
      %v783 = vrot.slane %v771, 4
      %v784 = vrot.slane %v773, 4
      %v785 = vrot.slane %v775, 4
      %v786 = vrot.slane %v777, 4
      %vm787 = vcmask 1043456
      %v788 = vsel %vm787, %v778, %v779
      %vm789 = vcmask 1039360
      %v790 = vsel %vm789, %v761, %v788
      %v791 = vsel %vm787, %v779, %v780
      %v792 = vsel %vm789, %v763, %v791
      %v793 = vsel %vm787, %v780, %v781
      %v794 = vsel %vm789, %v765, %v793
      %v795 = vsel %vm787, %v781, %v782
      %v796 = vsel %vm789, %v767, %v795
      %v797 = vsel %vm787, %v782, %v783
      %v798 = vsel %vm789, %v769, %v797
      %v799 = vsel %vm787, %v783, %v784
      %v800 = vsel %vm789, %v771, %v799
      %v801 = vsel %vm787, %v784, %v785
      %v802 = vsel %vm789, %v773, %v801
      %v803 = vsel %vm787, %v785, %v786
      %v804 = vsel %vm789, %v775, %v803
      %813 = vst [vmem:[#allocation3] sm:$0xcc] %v790
      %814 = vst [vmem:[#allocation3 + $0x8] sm:$0xcc] %v792
      %815 = vst [vmem:[#allocation3 + $0x10] sm:$0xcc] %v794
      %816 = vst [vmem:[#allocation3 + $0x18] sm:$0xcc] %v796
      %817 = vst [vmem:[#allocation3 + $0x20] sm:$0xcc] %v798
      %818 = vst [vmem:[#allocation3 + $0x28] sm:$0xcc] %v800
      %819 = vst [vmem:[#allocation3 + $0x30] sm:$0xcc] %v802
      %820 = vst [vmem:[#allocation3 + $0x38] sm:$0xcc] %v804
      %v821 = vpack.i.b16 %v467, %v467
      %v823 = vperm.slane %v821, 1
      %v824 = vpack.i.b16 %v468, %v468
      %v826 = vperm.slane %v824, 1
      %v827 = vpack.i.b16 %v469, %v469
      %v829 = vperm.slane %v827, 1
      %v830 = vpack.i.b16 %v470, %v470
      %v832 = vperm.slane %v830, 1
      %v833 = vpack.i.b16 %v471, %v471
      %v835 = vperm.slane %v833, 1
      %v836 = vpack.i.b16 %v472, %v472
      %v838 = vperm.slane %v836, 1
      %v839 = vpack.i.b16 %v473, %v473
      %v841 = vperm.slane %v839, 1
      %v842 = vpack.i.b16 %v474, %v474
      %v844 = vperm.slane %v842, 1
      %v845 = vpack.i.b16 %v475, %v475
      %v847 = vperm.slane %v845, 1
      %v848 = vpack.i.b16 %v476, %v476
      %v850 = vperm.slane %v848, 1
      %v851 = vpack.i.b16 %v477, %v477
      %v853 = vperm.slane %v851, 1
      %v854 = vpack.i.b16 %v478, %v478
      %v856 = vperm.slane %v854, 1
      %v857 = vpack.i.b16 %v479, %v479
      %v859 = vperm.slane %v857, 1
      %v860 = vpack.i.b16 %v480, %v480
      %v862 = vperm.slane %v860, 1
      %v863 = vpack.i.b16 %v481, %v481
      %v865 = vperm.slane %v863, 1
      %v866 = vpack.i.b16 %v482, %v482
      %v868 = vperm.slane %v866, 1
      %v869 = vunpack.c.l.bf16 %v823
      %v870 = vunpack.c.l.bf16 %v826
      %v871 = vunpack.c.l.bf16 %v829
      %v872 = vunpack.c.l.bf16 %v832
      %v873 = vunpack.c.l.bf16 %v835
      %v874 = vunpack.c.l.bf16 %v838
      %v875 = vunpack.c.l.bf16 %v841
      %v876 = vunpack.c.l.bf16 %v844
      %v877 = vunpack.c.l.bf16 %v847
      %v878 = vunpack.c.l.bf16 %v850
      %v879 = vunpack.c.l.bf16 %v853
      %v880 = vunpack.c.l.bf16 %v856
      %v881 = vunpack.c.l.bf16 %v859
      %v882 = vunpack.c.l.bf16 %v862
      %v883 = vunpack.c.l.bf16 %v865
      %v884 = vunpack.c.l.bf16 %v868
      %v901 = vrot.slane %v870, 4
      %v902 = vrot.slane %v872, 4
      %v903 = vrot.slane %v874, 4
      %v904 = vrot.slane %v876, 4
      %v905 = vrot.slane %v878, 4
      %v906 = vrot.slane %v880, 4
      %v907 = vrot.slane %v882, 4
      %v908 = vrot.slane %v884, 4
      %v909 = vsel %vm363, %v869, %v901
      %v910 = vsel %vm363, %v871, %v902
      %v911 = vsel %vm363, %v873, %v903
      %v912 = vsel %vm363, %v875, %v904
      %v913 = vsel %vm363, %v877, %v905
      %v914 = vsel %vm363, %v879, %v906
      %v915 = vsel %vm363, %v881, %v907
      %v916 = vsel %vm363, %v883, %v908
      %917 = vrot.lane.b32.xlu0 %v909, 16
      %v918 = vpop.permute.xlu0 %917
      %919 = vrot.lane.b32.xlu0 %v910, 16
      %v920 = vpop.permute.xlu0 %919
      %921 = vrot.lane.b32.xlu0 %v911, 16
      %v922 = vpop.permute.xlu0 %921
      %923 = vrot.lane.b32.xlu0 %v912, 16
      %v924 = vpop.permute.xlu0 %923
      %925 = vrot.lane.b32.xlu0 %v913, 16
      %v926 = vpop.permute.xlu0 %925
      %927 = vrot.lane.b32.xlu0 %v914, 16
      %v928 = vpop.permute.xlu0 %927
      %929 = vrot.lane.b32.xlu0 %v915, 16
      %v930 = vpop.permute.xlu0 %929
      %931 = vrot.lane.b32.xlu0 %v916, 16
      %v932 = vpop.permute.xlu0 %931
      %v933 = vrot.slane %v918, 4
      %v934 = vrot.slane %v920, 4
      %v935 = vrot.slane %v922, 4
      %v936 = vrot.slane %v924, 4
      %v937 = vrot.slane %v926, 4
      %v938 = vrot.slane %v928, 4
      %v939 = vrot.slane %v930, 4
      %v940 = vrot.slane %v932, 4
      %vm941 = vcmask 130048
      %v942 = vsel %vm941, %v933, %v918
      %v943 = vsel %vm363, %v933, %v934
      %v944 = vsel %vm941, %v943, %v920
      %v945 = vsel %vm363, %v934, %v935
      %v946 = vsel %vm941, %v945, %v922
      %v947 = vsel %vm363, %v935, %v936
      %v948 = vsel %vm941, %v947, %v924
      %v949 = vsel %vm363, %v936, %v937
      %v950 = vsel %vm941, %v949, %v926
      %v951 = vsel %vm363, %v937, %v938
      %v952 = vsel %vm941, %v951, %v928
      %v953 = vsel %vm363, %v938, %v939
      %v954 = vsel %vm941, %v953, %v930
      %v955 = vsel %vm363, %v939, %v940
      %v956 = vsel %vm941, %v955, %v932
      %v966 = vmul.f32 %v563, %v942
      %v967 = vmul.f32 %v564, %v944
      %v968 = vmul.f32 %v565, %v946
      %v969 = vmul.f32 %v566, %v948
      %v970 = vmul.f32 %v567, %v950
      %v971 = vmul.f32 %v568, %v952
      %v972 = vmul.f32 %v569, %v954
      %v973 = vmul.f32 %v570, %v956
      %v974 = vmul.f32 %v571, %v940
      %984 = vst [vmem:[#allocation1] ss:$2 sm:$0xff] %v966
      %s985 = scalar_lea.vmem [#allocation1], 16
      %986 = vst [vmem:[%s985] ss:$2 sm:$0xff] %v967
      %s987 = scalar_lea.vmem [#allocation1], 32
      %988 = vst [vmem:[%s987] ss:$2 sm:$0xff] %v968
      %s989 = scalar_lea.vmem [#allocation1], 48
      %990 = vst [vmem:[%s989] ss:$2 sm:$0xff] %v969
      %v991 = vld.sshfl [vmem:[#allocation1] sm:$0xff pattern:$0x75316420]
      %v992 = vld.sshfl [vmem:[#allocation1 + $0x8] sm:$0xff pattern:$0x75316420]
      %v993 = vld.sshfl [vmem:[#allocation1 + $0x10] sm:$0xff pattern:$0x75316420]
      %v994 = vld.sshfl [vmem:[#allocation1 + $0x18] sm:$0xff pattern:$0x75316420]
      %v995 = vld.sshfl [vmem:[#allocation1 + $0x20] sm:$0xff pattern:$0x75316420]
      %v996 = vld.sshfl [vmem:[#allocation1 + $0x28] sm:$0xff pattern:$0x75316420]
      %v997 = vld.sshfl [vmem:[#allocation1 + $0x30] sm:$0xff pattern:$0x75316420]
      %v998 = vld.sshfl [vmem:[#allocation1 + $0x38] sm:$0xff pattern:$0x75316420]
      %999 = vst [vmem:[#allocation1] ss:$2 sm:$0xff] %v970
      %1000 = vst [vmem:[%s985] ss:$2 sm:$0xff] %v971
      %1001 = vst [vmem:[%s987] ss:$2 sm:$0xff] %v972
      %1002 = vst [vmem:[%s989] ss:$2 sm:$0xff] %v973
      %v1003 = vld.sshfl [vmem:[#allocation1] sm:$0xff pattern:$0x75316420]
      %v1004 = vld.sshfl [vmem:[#allocation1 + $0x8] sm:$0xff pattern:$0x75316420]
      %v1005 = vld.sshfl [vmem:[#allocation1 + $0x10] sm:$0xff pattern:$0x75316420]
      %v1006 = vld.sshfl [vmem:[#allocation1 + $0x18] sm:$0xff pattern:$0x75316420]
      %v1007 = vld.sshfl [vmem:[#allocation1 + $0x20] sm:$0xff pattern:$0x75316420]
      %v1008 = vld.sshfl [vmem:[#allocation1 + $0x28] sm:$0xff pattern:$0x75316420]
      %v1009 = vld.sshfl [vmem:[#allocation1 + $0x30] sm:$0xff pattern:$0x75316420]
      %v1010 = vld.sshfl [vmem:[#allocation1 + $0x38] sm:$0xff pattern:$0x75316420]
      %1011 = vst [vmem:[#allocation1] ss:$2 sm:$0xff] %v974
      %v1012 = vld.sshfl [vmem:[#allocation1] sm:$0xff pattern:$0x75316420]
      %v1030 = vpack.c.bf16 %v992, %v991
      %v1031 = vpack.c.bf16 %v994, %v993
      %v1032 = vpack.c.bf16 %v996, %v995
      %v1033 = vpack.c.bf16 %v998, %v997
      %v1034 = vpack.c.bf16 %v1004, %v1003
      %v1035 = vpack.c.bf16 %v1006, %v1005
      %v1036 = vpack.c.bf16 %v1008, %v1007
      %v1037 = vpack.c.bf16 %v1010, %v1009
      %v1038 = vpack.c.bf16 %v1012, %v1012
      %1048 = vrot.lane.b32.xlu0 %v1030, 112
      %v1049 = vpop.permute.xlu0 %1048
      %1050 = vrot.lane.b32.xlu0 %v1031, 112
      %v1051 = vpop.permute.xlu0 %1050
      %1052 = vrot.lane.b32.xlu0 %v1032, 112
      %v1053 = vpop.permute.xlu0 %1052
      %1054 = vrot.lane.b32.xlu0 %v1033, 112
      %v1055 = vpop.permute.xlu0 %1054
      %1056 = vrot.lane.b32.xlu0 %v1034, 112
      %v1057 = vpop.permute.xlu0 %1056
      %1058 = vrot.lane.b32.xlu0 %v1035, 112
      %v1059 = vpop.permute.xlu0 %1058
      %1060 = vrot.lane.b32.xlu0 %v1036, 112
      %v1061 = vpop.permute.xlu0 %1060
      %1062 = vrot.lane.b32.xlu0 %v1037, 112
      %v1063 = vpop.permute.xlu0 %1062
      %1064 = vrot.lane.b32.xlu0 %v1038, 112
      %v1065 = vpop.permute.xlu0 %1064
      %v1066 = vrot.slane %v1049, 4
      %v1067 = vrot.slane %v1051, 4
      %v1068 = vrot.slane %v1053, 4
      %v1069 = vrot.slane %v1055, 4
      %v1070 = vrot.slane %v1057, 4
      %v1071 = vrot.slane %v1059, 4
      %v1072 = vrot.slane %v1061, 4
      %v1073 = vrot.slane %v1063, 4
      %v1074 = vrot.slane %v1065, 4
      %v1075 = vsel %vm787, %v1066, %v1067
      %vm1076 = vcmask 916480
      %v1077 = vsel %vm1076, %v1049, %v1075
      %v1078 = vsel %vm787, %v1067, %v1068
      %v1079 = vsel %vm1076, %v1051, %v1078
      %v1080 = vsel %vm787, %v1068, %v1069
      %v1081 = vsel %vm1076, %v1053, %v1080
      %v1082 = vsel %vm787, %v1069, %v1070
      %v1083 = vsel %vm1076, %v1055, %v1082
      %v1084 = vsel %vm787, %v1070, %v1071
      %v1085 = vsel %vm1076, %v1057, %v1084
      %v1086 = vsel %vm787, %v1071, %v1072
      %v1087 = vsel %vm1076, %v1059, %v1086
      %v1088 = vsel %vm787, %v1072, %v1073
      %v1089 = vsel %vm1076, %v1061, %v1088
      %v1090 = vsel %vm787, %v1073, %v1074
      %v1091 = vsel %vm1076, %v1063, %v1090
      %1100 = vst [vmem:[#allocation3 + $0x40] sm:$0x33] %v1077
      %1101 = vst [vmem:[#allocation3 + $0x48] sm:$0x33] %v1079
      %1102 = vst [vmem:[#allocation3 + $0x50] sm:$0x33] %v1081
      %1103 = vst [vmem:[#allocation3 + $0x58] sm:$0x33] %v1083
      %1104 = vst [vmem:[#allocation3 + $0x60] sm:$0x33] %v1085
      %1105 = vst [vmem:[#allocation3 + $0x68] sm:$0x33] %v1087
      %1106 = vst [vmem:[#allocation3 + $0x70] sm:$0x33] %v1089
      %1107 = vst [vmem:[#allocation3 + $0x78] sm:$0x33] %v1091
      %v1108 = vperm.slane %v485, 1
      %v1109 = vperm.slane %v490, 1
      %v1110 = vperm.slane %v495, 1
      %v1111 = vperm.slane %v500, 1
      %v1112 = vperm.slane %v505, 1
      %v1113 = vperm.slane %v510, 1
      %v1114 = vperm.slane %v515, 1
      %v1115 = vperm.slane %v520, 1
      %v1116 = vperm.slane %v525, 1
      %v1117 = vperm.slane %v530, 1
      %v1118 = vperm.slane %v535, 1
      %v1119 = vperm.slane %v540, 1
      %v1120 = vperm.slane %v545, 1
      %v1121 = vperm.slane %v550, 1
      %v1122 = vperm.slane %v555, 1
      %v1123 = vperm.slane %v560, 1
      %v1124 = vunpack.c.l.bf16 %v1108
      %v1125 = vunpack.c.l.bf16 %v1109
      %v1126 = vunpack.c.l.bf16 %v1110
      %v1127 = vunpack.c.l.bf16 %v1111
      %v1128 = vunpack.c.l.bf16 %v1112
      %v1129 = vunpack.c.l.bf16 %v1113
      %v1130 = vunpack.c.l.bf16 %v1114
      %v1131 = vunpack.c.l.bf16 %v1115
      %v1132 = vunpack.c.l.bf16 %v1116
      %v1133 = vunpack.c.l.bf16 %v1117
      %v1134 = vunpack.c.l.bf16 %v1118
      %v1135 = vunpack.c.l.bf16 %v1119
      %v1136 = vunpack.c.l.bf16 %v1120
      %v1137 = vunpack.c.l.bf16 %v1121
      %v1138 = vunpack.c.l.bf16 %v1122
      %v1139 = vunpack.c.l.bf16 %v1123
      %v1156 = vrot.slane %v1125, 4
      %v1157 = vrot.slane %v1127, 4
      %v1158 = vrot.slane %v1129, 4
      %v1159 = vrot.slane %v1131, 4
      %v1160 = vrot.slane %v1133, 4
      %v1161 = vrot.slane %v1135, 4
      %v1162 = vrot.slane %v1137, 4
      %v1163 = vrot.slane %v1139, 4
      %v1164 = vsel %vm363, %v1124, %v1156
      %v1165 = vsel %vm363, %v1126, %v1157
      %v1166 = vsel %vm363, %v1128, %v1158
      %v1167 = vsel %vm363, %v1130, %v1159
      %v1168 = vsel %vm363, %v1132, %v1160
      %v1169 = vsel %vm363, %v1134, %v1161
      %v1170 = vsel %vm363, %v1136, %v1162
      %v1171 = vsel %vm363, %v1138, %v1163
      %1172 = vrot.lane.b32.xlu0 %v1164, 17
      %v1173 = vpop.permute.xlu0 %1172
      %1174 = vrot.lane.b32.xlu0 %v1165, 17
      %v1175 = vpop.permute.xlu0 %1174
      %1176 = vrot.lane.b32.xlu0 %v1166, 17
      %v1177 = vpop.permute.xlu0 %1176
      %1178 = vrot.lane.b32.xlu0 %v1167, 17
      %v1179 = vpop.permute.xlu0 %1178
      %1180 = vrot.lane.b32.xlu0 %v1168, 17
      %v1181 = vpop.permute.xlu0 %1180
      %1182 = vrot.lane.b32.xlu0 %v1169, 17
      %v1183 = vpop.permute.xlu0 %1182
      %1184 = vrot.lane.b32.xlu0 %v1170, 17
      %v1185 = vpop.permute.xlu0 %1184
      %1186 = vrot.lane.b32.xlu0 %v1171, 17
      %v1187 = vpop.permute.xlu0 %1186
      %v1188 = vrot.slane %v1173, 4
      %v1189 = vrot.slane %v1175, 4
      %v1190 = vrot.slane %v1177, 4
      %v1191 = vrot.slane %v1179, 4
      %v1192 = vrot.slane %v1181, 4
      %v1193 = vrot.slane %v1183, 4
      %v1194 = vrot.slane %v1185, 4
      %v1195 = vrot.slane %v1187, 4
      %vm1196 = vcmask 138240
      %v1197 = vsel %vm1196, %v1188, %v1173
      %v1198 = vsel %vm363, %v1188, %v1189
      %v1199 = vsel %vm1196, %v1198, %v1175
      %v1200 = vsel %vm363, %v1189, %v1190
      %v1201 = vsel %vm1196, %v1200, %v1177
      %v1202 = vsel %vm363, %v1190, %v1191
      %v1203 = vsel %vm1196, %v1202, %v1179
      %v1204 = vsel %vm363, %v1191, %v1192
      %v1205 = vsel %vm1196, %v1204, %v1181
      %v1206 = vsel %vm363, %v1192, %v1193
      %v1207 = vsel %vm1196, %v1206, %v1183
      %v1208 = vsel %vm363, %v1193, %v1194
      %v1209 = vsel %vm1196, %v1208, %v1185
      %v1210 = vsel %vm363, %v1194, %v1195
      %v1211 = vsel %vm1196, %v1210, %v1187
      %v1221 = vmul.f32 %v563, %v1197
      %v1222 = vmul.f32 %v564, %v1199
      %v1223 = vmul.f32 %v565, %v1201
      %v1224 = vmul.f32 %v566, %v1203
      %v1225 = vmul.f32 %v567, %v1205
      %v1226 = vmul.f32 %v568, %v1207
      %v1227 = vmul.f32 %v569, %v1209
      %v1228 = vmul.f32 %v570, %v1211
      %v1229 = vmul.f32 %v571, %v1195
      %1239 = vst [vmem:[#allocation1] ss:$2 sm:$0xff] %v1221
      %s1240 = scalar_lea.vmem [#allocation1], 16
      %1241 = vst [vmem:[%s1240] ss:$2 sm:$0xff] %v1222
      %s1242 = scalar_lea.vmem [#allocation1], 32
      %1243 = vst [vmem:[%s1242] ss:$2 sm:$0xff] %v1223
      %s1244 = scalar_lea.vmem [#allocation1], 48
      %1245 = vst [vmem:[%s1244] ss:$2 sm:$0xff] %v1224
      %v1246 = vld.sshfl [vmem:[#allocation1] sm:$0xff pattern:$0x75316420]
      %v1247 = vld.sshfl [vmem:[#allocation1 + $0x8] sm:$0xff pattern:$0x75316420]
      %v1248 = vld.sshfl [vmem:[#allocation1 + $0x10] sm:$0xff pattern:$0x75316420]
      %v1249 = vld.sshfl [vmem:[#allocation1 + $0x18] sm:$0xff pattern:$0x75316420]
      %v1250 = vld.sshfl [vmem:[#allocation1 + $0x20] sm:$0xff pattern:$0x75316420]
      %v1251 = vld.sshfl [vmem:[#allocation1 + $0x28] sm:$0xff pattern:$0x75316420]
      %v1252 = vld.sshfl [vmem:[#allocation1 + $0x30] sm:$0xff pattern:$0x75316420]
      %v1253 = vld.sshfl [vmem:[#allocation1 + $0x38] sm:$0xff pattern:$0x75316420]
      %1254 = vst [vmem:[#allocation1] ss:$2 sm:$0xff] %v1225
      %1255 = vst [vmem:[%s1240] ss:$2 sm:$0xff] %v1226
      %1256 = vst [vmem:[%s1242] ss:$2 sm:$0xff] %v1227
      %1257 = vst [vmem:[%s1244] ss:$2 sm:$0xff] %v1228
      %v1258 = vld.sshfl [vmem:[#allocation1] sm:$0xff pattern:$0x75316420]
      %v1259 = vld.sshfl [vmem:[#allocation1 + $0x8] sm:$0xff pattern:$0x75316420]
      %v1260 = vld.sshfl [vmem:[#allocation1 + $0x10] sm:$0xff pattern:$0x75316420]
      %v1261 = vld.sshfl [vmem:[#allocation1 + $0x18] sm:$0xff pattern:$0x75316420]
      %v1262 = vld.sshfl [vmem:[#allocation1 + $0x20] sm:$0xff pattern:$0x75316420]
      %v1263 = vld.sshfl [vmem:[#allocation1 + $0x28] sm:$0xff pattern:$0x75316420]
      %v1264 = vld.sshfl [vmem:[#allocation1 + $0x30] sm:$0xff pattern:$0x75316420]
      %v1265 = vld.sshfl [vmem:[#allocation1 + $0x38] sm:$0xff pattern:$0x75316420]
      %1266 = vst [vmem:[#allocation1] ss:$2 sm:$0xff] %v1229
      %v1267 = vld.sshfl [vmem:[#allocation1] sm:$0xff pattern:$0x75316420]
      %v1285 = vpack.c.bf16 %v1247, %v1246
      %v1286 = vpack.c.bf16 %v1249, %v1248
      %v1287 = vpack.c.bf16 %v1251, %v1250
      %v1288 = vpack.c.bf16 %v1253, %v1252
      %v1289 = vpack.c.bf16 %v1259, %v1258
      %v1290 = vpack.c.bf16 %v1261, %v1260
      %v1291 = vpack.c.bf16 %v1263, %v1262
      %v1292 = vpack.c.bf16 %v1265, %v1264
      %v1293 = vpack.c.bf16 %v1267, %v1267
      %v1303 = vrot.slane %v1285, 6
      %v1304 = vrot.slane %v1286, 6
      %v1305 = vrot.slane %v1287, 6
      %v1306 = vrot.slane %v1288, 6
      %v1307 = vrot.slane %v1289, 6
      %v1308 = vrot.slane %v1290, 6
      %v1309 = vrot.slane %v1291, 6
      %v1310 = vrot.slane %v1292, 6
      %v1311 = vrot.slane %v1293, 6
      %1312 = vrot.lane.b32.xlu0 %v1303, 111
      %v1313 = vpop.permute.xlu0 %1312
      %1314 = vrot.lane.b32.xlu0 %v1304, 111
      %v1315 = vpop.permute.xlu0 %1314
      %1316 = vrot.lane.b32.xlu0 %v1305, 111
      %v1317 = vpop.permute.xlu0 %1316
      %1318 = vrot.lane.b32.xlu0 %v1306, 111
      %v1319 = vpop.permute.xlu0 %1318
      %1320 = vrot.lane.b32.xlu0 %v1307, 111
      %v1321 = vpop.permute.xlu0 %1320
      %1322 = vrot.lane.b32.xlu0 %v1308, 111
      %v1323 = vpop.permute.xlu0 %1322
      %1324 = vrot.lane.b32.xlu0 %v1309, 111
      %v1325 = vpop.permute.xlu0 %1324
      %1326 = vrot.lane.b32.xlu0 %v1310, 111
      %v1327 = vpop.permute.xlu0 %1326
      %1328 = vrot.lane.b32.xlu0 %v1311, 111
      %v1329 = vpop.permute.xlu0 %1328
      %v1330 = vrot.slane %v1313, 4
      %v1331 = vrot.slane %v1315, 4
      %v1332 = vrot.slane %v1317, 4
      %v1333 = vrot.slane %v1319, 4
      %v1334 = vrot.slane %v1321, 4
      %v1335 = vrot.slane %v1323, 4
      %v1336 = vrot.slane %v1325, 4
      %v1337 = vrot.slane %v1327, 4
      %v1338 = vrot.slane %v1329, 4
      %v1339 = vsel %vm787, %v1330, %v1331
      %vm1340 = vcmask 908288
      %v1341 = vsel %vm1340, %v1313, %v1339
      %v1342 = vsel %vm787, %v1331, %v1332
      %v1343 = vsel %vm1340, %v1315, %v1342
      %v1344 = vsel %vm787, %v1332, %v1333
      %v1345 = vsel %vm1340, %v1317, %v1344
      %v1346 = vsel %vm787, %v1333, %v1334
      %v1347 = vsel %vm1340, %v1319, %v1346
      %v1348 = vsel %vm787, %v1334, %v1335
      %v1349 = vsel %vm1340, %v1321, %v1348
      %v1350 = vsel %vm787, %v1335, %v1336
      %v1351 = vsel %vm1340, %v1323, %v1350
      %v1352 = vsel %vm787, %v1336, %v1337
      %v1353 = vsel %vm1340, %v1325, %v1352
      %v1354 = vsel %vm787, %v1337, %v1338
      %v1355 = vsel %vm1340, %v1327, %v1354
      %1364 = vst [vmem:[#allocation3 + $0x40] sm:$0xcc] %v1341
      %1365 = vst [vmem:[#allocation3 + $0x48] sm:$0xcc] %v1343
      %1366 = vst [vmem:[#allocation3 + $0x50] sm:$0xcc] %v1345
      %1367 = vst [vmem:[#allocation3 + $0x58] sm:$0xcc] %v1347
      %1368 = vst [vmem:[#allocation3 + $0x60] sm:$0xcc] %v1349
      %1369 = vst [vmem:[#allocation3 + $0x68] sm:$0xcc] %v1351
      %1370 = vst [vmem:[#allocation3 + $0x70] sm:$0xcc] %v1353
      %1371 = vst [vmem:[#allocation3 + $0x78] sm:$0xcc] %v1355
      %v1372 = vperm.slane %v821, 2
      %v1373 = vperm.slane %v824, 2
      %v1374 = vperm.slane %v827, 2
      %v1375 = vperm.slane %v830, 2
      %v1376 = vperm.slane %v833, 2
      %v1377 = vperm.slane %v836, 2
      %v1378 = vperm.slane %v839, 2
      %v1379 = vperm.slane %v842, 2
      %v1380 = vperm.slane %v845, 2
      %v1381 = vperm.slane %v848, 2
      %v1382 = vperm.slane %v851, 2
      %v1383 = vperm.slane %v854, 2
      %v1384 = vperm.slane %v857, 2
      %v1385 = vperm.slane %v860, 2
      %v1386 = vperm.slane %v863, 2
      %v1387 = vperm.slane %v866, 2
      %v1393 = vrot.slane %v395, 4
      %v1394 = vrot.slane %v396, 4
      %v1395 = vrot.slane %v397, 4
      %v1396 = vrot.slane %v398, 4
      %v1397 = vrot.slane %v399, 4
      %v1398 = vsel %vm787, %v1393, %v1394
      %v1399 = vsel %vm787, %v1394, %v1395
      %v1400 = vsel %vm787, %v1395, %v1396
      %v1401 = vsel %vm787, %v1396, %v1397
      %v1406 = vunpack.c.l.bf16 %v1398
      %v1407 = vunpack.c.h.bf16 %v1398
      %v1408 = vunpack.c.l.bf16 %v1399
      %v1409 = vunpack.c.h.bf16 %v1399
      %v1410 = vunpack.c.l.bf16 %v1400
      %v1411 = vunpack.c.h.bf16 %v1400
      %v1412 = vunpack.c.l.bf16 %v1401
      %v1413 = vunpack.c.h.bf16 %v1401
      %v1414 = vunpack.c.l.bf16 %v1372
      %v1415 = vunpack.c.l.bf16 %v1373
      %v1416 = vunpack.c.l.bf16 %v1374
      %v1417 = vunpack.c.l.bf16 %v1375
      %v1418 = vunpack.c.l.bf16 %v1376
      %v1419 = vunpack.c.l.bf16 %v1377
      %v1420 = vunpack.c.l.bf16 %v1378
      %v1421 = vunpack.c.l.bf16 %v1379
      %v1422 = vunpack.c.l.bf16 %v1380
      %v1423 = vunpack.c.l.bf16 %v1381
      %v1424 = vunpack.c.l.bf16 %v1382
      %v1425 = vunpack.c.l.bf16 %v1383
      %v1426 = vunpack.c.l.bf16 %v1384
      %v1427 = vunpack.c.l.bf16 %v1385
      %v1428 = vunpack.c.l.bf16 %v1386
      %v1429 = vunpack.c.l.bf16 %v1387
      %v1446 = vrot.slane %v1415, 4
      %v1447 = vrot.slane %v1417, 4
      %v1448 = vrot.slane %v1419, 4
      %v1449 = vrot.slane %v1421, 4
      %v1450 = vrot.slane %v1423, 4
      %v1451 = vrot.slane %v1425, 4
      %v1452 = vrot.slane %v1427, 4
      %v1453 = vrot.slane %v1429, 4
      %v1454 = vsel %vm363, %v1414, %v1446
      %v1455 = vsel %vm363, %v1416, %v1447
      %v1456 = vsel %vm363, %v1418, %v1448
      %v1457 = vsel %vm363, %v1420, %v1449
      %v1458 = vsel %vm363, %v1422, %v1450
      %v1459 = vsel %vm363, %v1424, %v1451
      %v1460 = vsel %vm363, %v1426, %v1452
      %v1461 = vsel %vm363, %v1428, %v1453
      %v1470 = vmul.f32 %v1406, %v1454
      %v1471 = vmul.f32 %v1407, %v1455
      %v1472 = vmul.f32 %v1408, %v1456
      %v1473 = vmul.f32 %v1409, %v1457
      %v1474 = vmul.f32 %v1410, %v1458
      %v1475 = vmul.f32 %v1411, %v1459
      %v1476 = vmul.f32 %v1412, %v1460
      %v1477 = vmul.f32 %v1413, %v1461
      %1486 = vst [vmem:[#allocation1] ss:$2 sm:$0xff] %v1470
      %s1487 = scalar_lea.vmem [#allocation1], 16
      %1488 = vst [vmem:[%s1487] ss:$2 sm:$0xff] %v1471
      %s1489 = scalar_lea.vmem [#allocation1], 32
      %1490 = vst [vmem:[%s1489] ss:$2 sm:$0xff] %v1472
      %s1491 = scalar_lea.vmem [#allocation1], 48
      %1492 = vst [vmem:[%s1491] ss:$2 sm:$0xff] %v1473
      %v1493 = vld.sshfl [vmem:[#allocation1] sm:$0xff pattern:$0x75316420]
      %v1494 = vld.sshfl [vmem:[#allocation1 + $0x8] sm:$0xff pattern:$0x75316420]
      %v1495 = vld.sshfl [vmem:[#allocation1 + $0x10] sm:$0xff pattern:$0x75316420]
      %v1496 = vld.sshfl [vmem:[#allocation1 + $0x18] sm:$0xff pattern:$0x75316420]
      %v1497 = vld.sshfl [vmem:[#allocation1 + $0x20] sm:$0xff pattern:$0x75316420]
      %v1498 = vld.sshfl [vmem:[#allocation1 + $0x28] sm:$0xff pattern:$0x75316420]
      %v1499 = vld.sshfl [vmem:[#allocation1 + $0x30] sm:$0xff pattern:$0x75316420]
      %v1500 = vld.sshfl [vmem:[#allocation1 + $0x38] sm:$0xff pattern:$0x75316420]
      %1501 = vst [vmem:[#allocation1] ss:$2 sm:$0xff] %v1474
      %1502 = vst [vmem:[%s1487] ss:$2 sm:$0xff] %v1475
      %1503 = vst [vmem:[%s1489] ss:$2 sm:$0xff] %v1476
      %1504 = vst [vmem:[%s1491] ss:$2 sm:$0xff] %v1477
      %v1505 = vld.sshfl [vmem:[#allocation1] sm:$0xff pattern:$0x75316420]
      %v1506 = vld.sshfl [vmem:[#allocation1 + $0x8] sm:$0xff pattern:$0x75316420]
      %v1507 = vld.sshfl [vmem:[#allocation1 + $0x10] sm:$0xff pattern:$0x75316420]
      %v1508 = vld.sshfl [vmem:[#allocation1 + $0x18] sm:$0xff pattern:$0x75316420]
      %v1509 = vld.sshfl [vmem:[#allocation1 + $0x20] sm:$0xff pattern:$0x75316420]
      %v1510 = vld.sshfl [vmem:[#allocation1 + $0x28] sm:$0xff pattern:$0x75316420]
      %v1511 = vld.sshfl [vmem:[#allocation1 + $0x30] sm:$0xff pattern:$0x75316420]
      %v1512 = vld.sshfl [vmem:[#allocation1 + $0x38] sm:$0xff pattern:$0x75316420]
      %v1529 = vpack.c.bf16 %v1494, %v1493
      %v1530 = vpack.c.bf16 %v1496, %v1495
      %v1531 = vpack.c.bf16 %v1498, %v1497
      %v1532 = vpack.c.bf16 %v1500, %v1499
      %v1533 = vpack.c.bf16 %v1506, %v1505
      %v1534 = vpack.c.bf16 %v1508, %v1507
      %v1535 = vpack.c.bf16 %v1510, %v1509
      %v1536 = vpack.c.bf16 %v1512, %v1511
      %1537 = vst [vmem:[#allocation3 + $0x80] sm:$0x33] %v1529
      %1538 = vst [vmem:[#allocation3 + $0x88] sm:$0x33] %v1530
      %1539 = vst [vmem:[#allocation3 + $0x90] sm:$0x33] %v1531
      %1540 = vst [vmem:[#allocation3 + $0x98] sm:$0x33] %v1532
      %1541 = vst [vmem:[#allocation3 + $0xa0] sm:$0x33] %v1533
      %1542 = vst [vmem:[#allocation3 + $0xa8] sm:$0x33] %v1534
      %1543 = vst [vmem:[#allocation3 + $0xb0] sm:$0x33] %v1535
      %1544 = vst [vmem:[#allocation3 + $0xb8] sm:$0x33] %v1536
      %v1545 = vperm.slane %v485, 2
      %v1546 = vperm.slane %v490, 2
      %v1547 = vperm.slane %v495, 2
      %v1548 = vperm.slane %v500, 2
      %v1549 = vperm.slane %v505, 2
      %v1550 = vperm.slane %v510, 2
      %v1551 = vperm.slane %v515, 2
      %v1552 = vperm.slane %v520, 2
      %v1553 = vperm.slane %v525, 2
      %v1554 = vperm.slane %v530, 2
      %v1555 = vperm.slane %v535, 2
      %v1556 = vperm.slane %v540, 2
      %v1557 = vperm.slane %v545, 2
      %v1558 = vperm.slane %v550, 2
      %v1559 = vperm.slane %v555, 2
      %v1560 = vperm.slane %v560, 2
      %1561 = vrot.lane.b32.xlu0 %v395, 127
      %v1562 = vpop.permute.xlu0 %1561
      %1563 = vrot.lane.b32.xlu0 %v396, 127
      %v1564 = vpop.permute.xlu0 %1563
      %1565 = vrot.lane.b32.xlu0 %v397, 127
      %v1566 = vpop.permute.xlu0 %1565
      %1567 = vrot.lane.b32.xlu0 %v398, 127
      %v1568 = vpop.permute.xlu0 %1567
      %1569 = vrot.lane.b32.xlu0 %v399, 127
      %v1570 = vpop.permute.xlu0 %1569
      %v1571 = vrot.slane %v1562, 4
      %v1572 = vrot.slane %v1564, 4
      %v1573 = vrot.slane %v1566, 4
      %v1574 = vrot.slane %v1568, 4
      %v1575 = vrot.slane %v1570, 4
      %v1576 = vrot.slane %v1562, 6
      %v1577 = vrot.slane %v1564, 6
      %v1578 = vrot.slane %v1566, 6
      %v1579 = vrot.slane %v1568, 6
      %v1580 = vrot.slane %v1570, 6
      %v1581 = vsel %vm787, %v1571, %v1572
      %vm1582 = vcmask 1041408
      %v1583 = vsel %vm1582, %v1576, %v1577
      %v1584 = vsel %vm789, %v1581, %v1583
      %v1585 = vsel %vm787, %v1572, %v1573
      %v1586 = vsel %vm1582, %v1577, %v1578
      %v1587 = vsel %vm789, %v1585, %v1586
      %v1588 = vsel %vm787, %v1573, %v1574
      %v1589 = vsel %vm1582, %v1578, %v1579
      %v1590 = vsel %vm789, %v1588, %v1589
      %v1591 = vsel %vm787, %v1574, %v1575
      %v1592 = vsel %vm1582, %v1579, %v1580
      %v1593 = vsel %vm789, %v1591, %v1592
      %v1598 = vunpack.c.l.bf16 %v1584
      %v1599 = vunpack.c.h.bf16 %v1584
      %v1600 = vunpack.c.l.bf16 %v1587
      %v1601 = vunpack.c.h.bf16 %v1587
      %v1602 = vunpack.c.l.bf16 %v1590
      %v1603 = vunpack.c.h.bf16 %v1590
      %v1604 = vunpack.c.l.bf16 %v1593
      %v1605 = vunpack.c.h.bf16 %v1593
      %v1606 = vunpack.c.l.bf16 %v1545
      %v1607 = vunpack.c.l.bf16 %v1546
      %v1608 = vunpack.c.l.bf16 %v1547
      %v1609 = vunpack.c.l.bf16 %v1548
      %v1610 = vunpack.c.l.bf16 %v1549
      %v1611 = vunpack.c.l.bf16 %v1550
      %v1612 = vunpack.c.l.bf16 %v1551
      %v1613 = vunpack.c.l.bf16 %v1552
      %v1614 = vunpack.c.l.bf16 %v1553
      %v1615 = vunpack.c.l.bf16 %v1554
      %v1616 = vunpack.c.l.bf16 %v1555
      %v1617 = vunpack.c.l.bf16 %v1556
      %v1618 = vunpack.c.l.bf16 %v1557
      %v1619 = vunpack.c.l.bf16 %v1558
      %v1620 = vunpack.c.l.bf16 %v1559
      %v1621 = vunpack.c.l.bf16 %v1560
      %v1638 = vrot.slane %v1607, 4
      %v1639 = vrot.slane %v1609, 4
      %v1640 = vrot.slane %v1611, 4
      %v1641 = vrot.slane %v1613, 4
      %v1642 = vrot.slane %v1615, 4
      %v1643 = vrot.slane %v1617, 4
      %v1644 = vrot.slane %v1619, 4
      %v1645 = vrot.slane %v1621, 4
      %v1646 = vsel %vm363, %v1606, %v1638
      %v1647 = vsel %vm363, %v1608, %v1639
      %v1648 = vsel %vm363, %v1610, %v1640
      %v1649 = vsel %vm363, %v1612, %v1641
      %v1650 = vsel %vm363, %v1614, %v1642
      %v1651 = vsel %vm363, %v1616, %v1643
      %v1652 = vsel %vm363, %v1618, %v1644
      %v1653 = vsel %vm363, %v1620, %v1645
      %v1662 = vmul.f32 %v1598, %v1646
      %v1663 = vmul.f32 %v1599, %v1647
      %v1664 = vmul.f32 %v1600, %v1648
      %v1665 = vmul.f32 %v1601, %v1649
      %v1666 = vmul.f32 %v1602, %v1650
      %v1667 = vmul.f32 %v1603, %v1651
      %v1668 = vmul.f32 %v1604, %v1652
      %v1669 = vmul.f32 %v1605, %v1653
      %1678 = vst [vmem:[#allocation1] ss:$2 sm:$0xff] %v1662
      %s1679 = scalar_lea.vmem [#allocation1], 16
      %1680 = vst [vmem:[%s1679] ss:$2 sm:$0xff] %v1663
      %s1681 = scalar_lea.vmem [#allocation1], 32
      %1682 = vst [vmem:[%s1681] ss:$2 sm:$0xff] %v1664
      %s1683 = scalar_lea.vmem [#allocation1], 48
      %1684 = vst [vmem:[%s1683] ss:$2 sm:$0xff] %v1665
      %v1685 = vld.sshfl [vmem:[#allocation1] sm:$0xff pattern:$0x75316420]
      %v1686 = vld.sshfl [vmem:[#allocation1 + $0x8] sm:$0xff pattern:$0x75316420]
      %v1687 = vld.sshfl [vmem:[#allocation1 + $0x10] sm:$0xff pattern:$0x75316420]
      %v1688 = vld.sshfl [vmem:[#allocation1 + $0x18] sm:$0xff pattern:$0x75316420]
      %v1689 = vld.sshfl [vmem:[#allocation1 + $0x20] sm:$0xff pattern:$0x75316420]
      %v1690 = vld.sshfl [vmem:[#allocation1 + $0x28] sm:$0xff pattern:$0x75316420]
      %v1691 = vld.sshfl [vmem:[#allocation1 + $0x30] sm:$0xff pattern:$0x75316420]
      %v1692 = vld.sshfl [vmem:[#allocation1 + $0x38] sm:$0xff pattern:$0x75316420]
      %1693 = vst [vmem:[#allocation1] ss:$2 sm:$0xff] %v1666
      %1694 = vst [vmem:[%s1679] ss:$2 sm:$0xff] %v1667
      %1695 = vst [vmem:[%s1681] ss:$2 sm:$0xff] %v1668
      %1696 = vst [vmem:[%s1683] ss:$2 sm:$0xff] %v1669
      %v1697 = vld.sshfl [vmem:[#allocation1] sm:$0xff pattern:$0x75316420]
      %v1698 = vld.sshfl [vmem:[#allocation1 + $0x8] sm:$0xff pattern:$0x75316420]
      %v1699 = vld.sshfl [vmem:[#allocation1 + $0x10] sm:$0xff pattern:$0x75316420]
      %v1700 = vld.sshfl [vmem:[#allocation1 + $0x18] sm:$0xff pattern:$0x75316420]
      %v1701 = vld.sshfl [vmem:[#allocation1 + $0x20] sm:$0xff pattern:$0x75316420]
      %v1702 = vld.sshfl [vmem:[#allocation1 + $0x28] sm:$0xff pattern:$0x75316420]
      %v1703 = vld.sshfl [vmem:[#allocation1 + $0x30] sm:$0xff pattern:$0x75316420]
      %v1704 = vld.sshfl [vmem:[#allocation1 + $0x38] sm:$0xff pattern:$0x75316420]
      %v1721 = vpack.c.bf16 %v1686, %v1685
      %v1722 = vpack.c.bf16 %v1688, %v1687
      %v1723 = vpack.c.bf16 %v1690, %v1689
      %v1724 = vpack.c.bf16 %v1692, %v1691
      %v1725 = vpack.c.bf16 %v1698, %v1697
      %v1726 = vpack.c.bf16 %v1700, %v1699
      %v1727 = vpack.c.bf16 %v1702, %v1701
      %v1728 = vpack.c.bf16 %v1704, %v1703
      %v1737 = vrot.slane %v1721, 6
      %v1738 = vrot.slane %v1722, 6
      %v1739 = vrot.slane %v1723, 6
      %v1740 = vrot.slane %v1724, 6
      %v1741 = vrot.slane %v1725, 6
      %v1742 = vrot.slane %v1726, 6
      %v1743 = vrot.slane %v1727, 6
      %v1744 = vrot.slane %v1728, 6
      %1753 = vst [vmem:[#allocation3 + $0x80] sm:$0xcc] %v1737
      %1754 = vst [vmem:[#allocation3 + $0x88] sm:$0xcc] %v1738
      %1755 = vst [vmem:[#allocation3 + $0x90] sm:$0xcc] %v1739
      %1756 = vst [vmem:[#allocation3 + $0x98] sm:$0xcc] %v1740
      %1757 = vst [vmem:[#allocation3 + $0xa0] sm:$0xcc] %v1741
      %1758 = vst [vmem:[#allocation3 + $0xa8] sm:$0xcc] %v1742
      %1759 = vst [vmem:[#allocation3 + $0xb0] sm:$0xcc] %v1743
      %1760 = vst [vmem:[#allocation3 + $0xb8] sm:$0xcc] %v1744
      %v1761 = vperm.slane %v821, 3
      %v1762 = vperm.slane %v824, 3
      %v1763 = vperm.slane %v827, 3
      %v1764 = vperm.slane %v830, 3
      %v1765 = vperm.slane %v833, 3
      %v1766 = vperm.slane %v836, 3
      %v1767 = vperm.slane %v839, 3
      %v1768 = vperm.slane %v842, 3
      %v1769 = vperm.slane %v845, 3
      %v1770 = vperm.slane %v848, 3
      %v1771 = vperm.slane %v851, 3
      %v1772 = vperm.slane %v854, 3
      %v1773 = vperm.slane %v857, 3
      %v1774 = vperm.slane %v860, 3
      %v1775 = vperm.slane %v863, 3
      %v1776 = vperm.slane %v866, 3
      %1777 = vrot.lane.b32.xlu0 %v395, 112
      %v1778 = vpop.permute.xlu0 %1777
      %1779 = vrot.lane.b32.xlu0 %v396, 112
      %v1780 = vpop.permute.xlu0 %1779
      %1781 = vrot.lane.b32.xlu0 %v397, 112
      %v1782 = vpop.permute.xlu0 %1781
      %1783 = vrot.lane.b32.xlu0 %v398, 112
      %v1784 = vpop.permute.xlu0 %1783
      %1785 = vrot.lane.b32.xlu0 %v399, 112
      %v1786 = vpop.permute.xlu0 %1785
      %v1787 = vrot.slane %v1778, 4
      %v1788 = vrot.slane %v1780, 4
      %v1789 = vrot.slane %v1782, 4
      %v1790 = vrot.slane %v1784, 4
      %v1791 = vrot.slane %v1786, 4
      %v1792 = vrot.slane %v1778, 6
      %v1793 = vrot.slane %v1780, 6
      %v1794 = vrot.slane %v1782, 6
      %v1795 = vrot.slane %v1784, 6
      %v1796 = vrot.slane %v1786, 6
      %v1797 = vsel %vm787, %v1787, %v1788
      %v1798 = vsel %vm1582, %v1792, %v1793
      %v1799 = vsel %vm1076, %v1797, %v1798
      %v1800 = vsel %vm787, %v1788, %v1789
      %v1801 = vsel %vm1582, %v1793, %v1794
      %v1802 = vsel %vm1076, %v1800, %v1801
      %v1803 = vsel %vm787, %v1789, %v1790
      %v1804 = vsel %vm1582, %v1794, %v1795
      %v1805 = vsel %vm1076, %v1803, %v1804
      %v1806 = vsel %vm787, %v1790, %v1791
      %v1807 = vsel %vm1582, %v1795, %v1796
      %v1808 = vsel %vm1076, %v1806, %v1807
      %v1813 = vunpack.c.l.bf16 %v1799
      %v1814 = vunpack.c.h.bf16 %v1799
      %v1815 = vunpack.c.l.bf16 %v1802
      %v1816 = vunpack.c.h.bf16 %v1802
      %v1817 = vunpack.c.l.bf16 %v1805
      %v1818 = vunpack.c.h.bf16 %v1805
      %v1819 = vunpack.c.l.bf16 %v1808
      %v1820 = vunpack.c.h.bf16 %v1808
      %v1821 = vunpack.c.l.bf16 %v1761
      %v1822 = vunpack.c.l.bf16 %v1762
      %v1823 = vunpack.c.l.bf16 %v1763
      %v1824 = vunpack.c.l.bf16 %v1764
      %v1825 = vunpack.c.l.bf16 %v1765
      %v1826 = vunpack.c.l.bf16 %v1766
      %v1827 = vunpack.c.l.bf16 %v1767
      %v1828 = vunpack.c.l.bf16 %v1768
      %v1829 = vunpack.c.l.bf16 %v1769
      %v1830 = vunpack.c.l.bf16 %v1770
      %v1831 = vunpack.c.l.bf16 %v1771
      %v1832 = vunpack.c.l.bf16 %v1772
      %v1833 = vunpack.c.l.bf16 %v1773
      %v1834 = vunpack.c.l.bf16 %v1774
      %v1835 = vunpack.c.l.bf16 %v1775
      %v1836 = vunpack.c.l.bf16 %v1776
      %v1853 = vrot.slane %v1822, 4
      %v1854 = vrot.slane %v1824, 4
      %v1855 = vrot.slane %v1826, 4
      %v1856 = vrot.slane %v1828, 4
      %v1857 = vrot.slane %v1830, 4
      %v1858 = vrot.slane %v1832, 4
      %v1859 = vrot.slane %v1834, 4
      %v1860 = vrot.slane %v1836, 4
      %v1861 = vsel %vm363, %v1821, %v1853
      %v1862 = vsel %vm363, %v1823, %v1854
      %v1863 = vsel %vm363, %v1825, %v1855
      %v1864 = vsel %vm363, %v1827, %v1856
      %v1865 = vsel %vm363, %v1829, %v1857
      %v1866 = vsel %vm363, %v1831, %v1858
      %v1867 = vsel %vm363, %v1833, %v1859
      %v1868 = vsel %vm363, %v1835, %v1860
      %v1877 = vmul.f32 %v1813, %v1861
      %v1878 = vmul.f32 %v1814, %v1862
      %v1879 = vmul.f32 %v1815, %v1863
      %v1880 = vmul.f32 %v1816, %v1864
      %v1881 = vmul.f32 %v1817, %v1865
      %v1882 = vmul.f32 %v1818, %v1866
      %v1883 = vmul.f32 %v1819, %v1867
      %v1884 = vmul.f32 %v1820, %v1868
      %1893 = vst [vmem:[#allocation1] ss:$2 sm:$0xff] %v1877
      %s1894 = scalar_lea.vmem [#allocation1], 16
      %1895 = vst [vmem:[%s1894] ss:$2 sm:$0xff] %v1878
      %s1896 = scalar_lea.vmem [#allocation1], 32
      %1897 = vst [vmem:[%s1896] ss:$2 sm:$0xff] %v1879
      %s1898 = scalar_lea.vmem [#allocation1], 48
      %1899 = vst [vmem:[%s1898] ss:$2 sm:$0xff] %v1880
      %v1900 = vld.sshfl [vmem:[#allocation1] sm:$0xff pattern:$0x75316420]
      %v1901 = vld.sshfl [vmem:[#allocation1 + $0x8] sm:$0xff pattern:$0x75316420]
      %v1902 = vld.sshfl [vmem:[#allocation1 + $0x10] sm:$0xff pattern:$0x75316420]
      %v1903 = vld.sshfl [vmem:[#allocation1 + $0x18] sm:$0xff pattern:$0x75316420]
      %v1904 = vld.sshfl [vmem:[#allocation1 + $0x20] sm:$0xff pattern:$0x75316420]
      %v1905 = vld.sshfl [vmem:[#allocation1 + $0x28] sm:$0xff pattern:$0x75316420]
      %v1906 = vld.sshfl [vmem:[#allocation1 + $0x30] sm:$0xff pattern:$0x75316420]
      %v1907 = vld.sshfl [vmem:[#allocation1 + $0x38] sm:$0xff pattern:$0x75316420]
      %1908 = vst [vmem:[#allocation1] ss:$2 sm:$0xff] %v1881
      %1909 = vst [vmem:[%s1894] ss:$2 sm:$0xff] %v1882
      %1910 = vst [vmem:[%s1896] ss:$2 sm:$0xff] %v1883
      %1911 = vst [vmem:[%s1898] ss:$2 sm:$0xff] %v1884
      %v1912 = vld.sshfl [vmem:[#allocation1] sm:$0xff pattern:$0x75316420]
      %v1913 = vld.sshfl [vmem:[#allocation1 + $0x8] sm:$0xff pattern:$0x75316420]
      %v1914 = vld.sshfl [vmem:[#allocation1 + $0x10] sm:$0xff pattern:$0x75316420]
      %v1915 = vld.sshfl [vmem:[#allocation1 + $0x18] sm:$0xff pattern:$0x75316420]
      %v1916 = vld.sshfl [vmem:[#allocation1 + $0x20] sm:$0xff pattern:$0x75316420]
      %v1917 = vld.sshfl [vmem:[#allocation1 + $0x28] sm:$0xff pattern:$0x75316420]
      %v1918 = vld.sshfl [vmem:[#allocation1 + $0x30] sm:$0xff pattern:$0x75316420]
      %v1919 = vld.sshfl [vmem:[#allocation1 + $0x38] sm:$0xff pattern:$0x75316420]
      %v1936 = vpack.c.bf16 %v1901, %v1900
      %v1937 = vpack.c.bf16 %v1903, %v1902
      %v1938 = vpack.c.bf16 %v1905, %v1904
      %v1939 = vpack.c.bf16 %v1907, %v1906
      %v1940 = vpack.c.bf16 %v1913, %v1912
      %v1941 = vpack.c.bf16 %v1915, %v1914
      %v1942 = vpack.c.bf16 %v1917, %v1916
      %v1943 = vpack.c.bf16 %v1919, %v1918
      %1944 = vst [vmem:[#allocation3 + $0xc0] sm:$0x33] %v1936
      %1945 = vst [vmem:[#allocation3 + $0xc8] sm:$0x33] %v1937
      %1946 = vst [vmem:[#allocation3 + $0xd0] sm:$0x33] %v1938
      %1947 = vst [vmem:[#allocation3 + $0xd8] sm:$0x33] %v1939
      %1948 = vst [vmem:[#allocation3 + $0xe0] sm:$0x33] %v1940
      %1949 = vst [vmem:[#allocation3 + $0xe8] sm:$0x33] %v1941
      %1950 = vst [vmem:[#allocation3 + $0xf0] sm:$0x33] %v1942
      %1951 = vst [vmem:[#allocation3 + $0xf8] sm:$0x33] %v1943
      %v1952 = vperm.slane %v485, 3
      %v1953 = vperm.slane %v490, 3
      %v1954 = vperm.slane %v495, 3
      %v1955 = vperm.slane %v500, 3
      %v1956 = vperm.slane %v505, 3
      %v1957 = vperm.slane %v510, 3
      %v1958 = vperm.slane %v515, 3
      %v1959 = vperm.slane %v520, 3
      %v1960 = vperm.slane %v525, 3
      %v1961 = vperm.slane %v530, 3
      %v1962 = vperm.slane %v535, 3
      %v1963 = vperm.slane %v540, 3
      %v1964 = vperm.slane %v545, 3
      %v1965 = vperm.slane %v550, 3
      %v1966 = vperm.slane %v555, 3
      %v1967 = vperm.slane %v560, 3
      %1968 = vrot.lane.b32.xlu0 %v395, 111
      %v1969 = vpop.permute.xlu0 %1968
      %1970 = vrot.lane.b32.xlu0 %v396, 111
      %v1971 = vpop.permute.xlu0 %1970
      %1972 = vrot.lane.b32.xlu0 %v397, 111
      %v1973 = vpop.permute.xlu0 %1972
      %1974 = vrot.lane.b32.xlu0 %v398, 111
      %v1975 = vpop.permute.xlu0 %1974
      %1976 = vrot.lane.b32.xlu0 %v399, 111
      %v1977 = vpop.permute.xlu0 %1976
      %v1978 = vrot.slane %v1969, 4
      %v1979 = vrot.slane %v1971, 4
      %v1980 = vrot.slane %v1973, 4
      %v1981 = vrot.slane %v1975, 4
      %v1982 = vrot.slane %v1977, 4
      %v1983 = vrot.slane %v1969, 6
      %v1984 = vrot.slane %v1971, 6
      %v1985 = vrot.slane %v1973, 6
      %v1986 = vrot.slane %v1975, 6
      %v1987 = vrot.slane %v1977, 6
      %v1988 = vsel %vm787, %v1978, %v1979
      %v1989 = vsel %vm1582, %v1983, %v1984
      %v1990 = vsel %vm1340, %v1988, %v1989
      %v1991 = vsel %vm787, %v1979, %v1980
      %v1992 = vsel %vm1582, %v1984, %v1985
      %v1993 = vsel %vm1340, %v1991, %v1992
      %v1994 = vsel %vm787, %v1980, %v1981
      %v1995 = vsel %vm1582, %v1985, %v1986
      %v1996 = vsel %vm1340, %v1994, %v1995
      %v1997 = vsel %vm787, %v1981, %v1982
      %v1998 = vsel %vm1582, %v1986, %v1987
      %v1999 = vsel %vm1340, %v1997, %v1998
      %v2004 = vunpack.c.l.bf16 %v1990
      %v2005 = vunpack.c.h.bf16 %v1990
      %v2006 = vunpack.c.l.bf16 %v1993
      %v2007 = vunpack.c.h.bf16 %v1993
      %v2008 = vunpack.c.l.bf16 %v1996
      %v2009 = vunpack.c.h.bf16 %v1996
      %v2010 = vunpack.c.l.bf16 %v1999
      %v2011 = vunpack.c.h.bf16 %v1999
      %v2012 = vunpack.c.l.bf16 %v1952
      %v2013 = vunpack.c.l.bf16 %v1953
      %v2014 = vunpack.c.l.bf16 %v1954
      %v2015 = vunpack.c.l.bf16 %v1955
      %v2016 = vunpack.c.l.bf16 %v1956
      %v2017 = vunpack.c.l.bf16 %v1957
      %v2018 = vunpack.c.l.bf16 %v1958
      %v2019 = vunpack.c.l.bf16 %v1959
      %v2020 = vunpack.c.l.bf16 %v1960
      %v2021 = vunpack.c.l.bf16 %v1961
      %v2022 = vunpack.c.l.bf16 %v1962
      %v2023 = vunpack.c.l.bf16 %v1963
      %v2024 = vunpack.c.l.bf16 %v1964
      %v2025 = vunpack.c.l.bf16 %v1965
      %v2026 = vunpack.c.l.bf16 %v1966
      %v2027 = vunpack.c.l.bf16 %v1967
      %v2044 = vrot.slane %v2013, 4
      %v2045 = vrot.slane %v2015, 4
      %v2046 = vrot.slane %v2017, 4
      %v2047 = vrot.slane %v2019, 4
      %v2048 = vrot.slane %v2021, 4
      %v2049 = vrot.slane %v2023, 4
      %v2050 = vrot.slane %v2025, 4
      %v2051 = vrot.slane %v2027, 4
      %v2052 = vsel %vm363, %v2012, %v2044
      %v2053 = vsel %vm363, %v2014, %v2045
      %v2054 = vsel %vm363, %v2016, %v2046
      %v2055 = vsel %vm363, %v2018, %v2047
      %v2056 = vsel %vm363, %v2020, %v2048
      %v2057 = vsel %vm363, %v2022, %v2049
      %v2058 = vsel %vm363, %v2024, %v2050
      %v2059 = vsel %vm363, %v2026, %v2051
      %v2068 = vmul.f32 %v2004, %v2052
      %v2069 = vmul.f32 %v2005, %v2053
      %v2070 = vmul.f32 %v2006, %v2054
      %v2071 = vmul.f32 %v2007, %v2055
      %v2072 = vmul.f32 %v2008, %v2056
      %v2073 = vmul.f32 %v2009, %v2057
      %v2074 = vmul.f32 %v2010, %v2058
      %v2075 = vmul.f32 %v2011, %v2059
      %2084 = vst [vmem:[#allocation1] ss:$2 sm:$0xff] %v2068
      %s2085 = scalar_lea.vmem [#allocation1], 16
      %2086 = vst [vmem:[%s2085] ss:$2 sm:$0xff] %v2069
      %s2087 = scalar_lea.vmem [#allocation1], 32
      %2088 = vst [vmem:[%s2087] ss:$2 sm:$0xff] %v2070
      %s2089 = scalar_lea.vmem [#allocation1], 48
      %2090 = vst [vmem:[%s2089] ss:$2 sm:$0xff] %v2071
      %v2091 = vld.sshfl [vmem:[#allocation1] sm:$0xff pattern:$0x75316420]
      %v2092 = vld.sshfl [vmem:[#allocation1 + $0x8] sm:$0xff pattern:$0x75316420]
      %v2093 = vld.sshfl [vmem:[#allocation1 + $0x10] sm:$0xff pattern:$0x75316420]
      %v2094 = vld.sshfl [vmem:[#allocation1 + $0x18] sm:$0xff pattern:$0x75316420]
      %v2095 = vld.sshfl [vmem:[#allocation1 + $0x20] sm:$0xff pattern:$0x75316420]
      %v2096 = vld.sshfl [vmem:[#allocation1 + $0x28] sm:$0xff pattern:$0x75316420]
      %v2097 = vld.sshfl [vmem:[#allocation1 + $0x30] sm:$0xff pattern:$0x75316420]
      %v2098 = vld.sshfl [vmem:[#allocation1 + $0x38] sm:$0xff pattern:$0x75316420]
      %2099 = vst [vmem:[#allocation1] ss:$2 sm:$0xff] %v2072
      %2100 = vst [vmem:[%s2085] ss:$2 sm:$0xff] %v2073
      %2101 = vst [vmem:[%s2087] ss:$2 sm:$0xff] %v2074
      %2102 = vst [vmem:[%s2089] ss:$2 sm:$0xff] %v2075
      %v2103 = vld.sshfl [vmem:[#allocation1] sm:$0xff pattern:$0x75316420]
      %v2104 = vld.sshfl [vmem:[#allocation1 + $0x8] sm:$0xff pattern:$0x75316420]
      %v2105 = vld.sshfl [vmem:[#allocation1 + $0x10] sm:$0xff pattern:$0x75316420]
      %v2106 = vld.sshfl [vmem:[#allocation1 + $0x18] sm:$0xff pattern:$0x75316420]
      %v2107 = vld.sshfl [vmem:[#allocation1 + $0x20] sm:$0xff pattern:$0x75316420]
      %v2108 = vld.sshfl [vmem:[#allocation1 + $0x28] sm:$0xff pattern:$0x75316420]
      %v2109 = vld.sshfl [vmem:[#allocation1 + $0x30] sm:$0xff pattern:$0x75316420]
      %v2110 = vld.sshfl [vmem:[#allocation1 + $0x38] sm:$0xff pattern:$0x75316420]
      %v2127 = vpack.c.bf16 %v2092, %v2091
      %v2128 = vpack.c.bf16 %v2094, %v2093
      %v2129 = vpack.c.bf16 %v2096, %v2095
      %v2130 = vpack.c.bf16 %v2098, %v2097
      %v2131 = vpack.c.bf16 %v2104, %v2103
      %v2132 = vpack.c.bf16 %v2106, %v2105
      %v2133 = vpack.c.bf16 %v2108, %v2107
      %v2134 = vpack.c.bf16 %v2110, %v2109
      %v2143 = vrot.slane %v2127, 6
      %v2144 = vrot.slane %v2128, 6
      %v2145 = vrot.slane %v2129, 6
      %v2146 = vrot.slane %v2130, 6
      %v2147 = vrot.slane %v2131, 6
      %v2148 = vrot.slane %v2132, 6
      %v2149 = vrot.slane %v2133, 6
      %v2150 = vrot.slane %v2134, 6
      %2159 = vst [vmem:[#allocation3 + $0xc0] sm:$0xcc] %v2143
      %2160 = vst [vmem:[#allocation3 + $0xc8] sm:$0xcc] %v2144
      %2161 = vst [vmem:[#allocation3 + $0xd0] sm:$0xcc] %v2145
      %2162 = vst [vmem:[#allocation3 + $0xd8] sm:$0xcc] %v2146
      %2163 = vst [vmem:[#allocation3 + $0xe0] sm:$0xcc] %v2147
      %2164 = vst [vmem:[#allocation3 + $0xe8] sm:$0xcc] %v2148
      %2165 = vst [vmem:[#allocation3 + $0xf0] sm:$0xcc] %v2149
      %2166 = vst [vmem:[#allocation3 + $0xf8] sm:$0xcc] %v2150
      %v2167 = vld [vmem:[%s248] sm:$0xf]
      %v2168 = vld [vmem:[%s248 + $0x4] sm:$0xf]
      %v2169 = vld [vmem:[%s248 + $0x8] sm:$0xf]
      %v2170 = vld [vmem:[%s248 + $0xc] sm:$0xf]
      %v2171 = vld [vmem:[#allocation3] sm:$0xff]
      %v2172 = vld [vmem:[#allocation3 + $0x8] sm:$0xff]
      %v2173 = vld [vmem:[#allocation3 + $0x10] sm:$0xff]
      %v2174 = vld [vmem:[#allocation3 + $0x18] sm:$0xff]
      %v2175 = vld [vmem:[#allocation3 + $0x20] sm:$0xff]
      %v2176 = vld [vmem:[#allocation3 + $0x28] sm:$0xff]
      %v2177 = vld [vmem:[#allocation3 + $0x30] sm:$0xff]
      %v2178 = vld [vmem:[#allocation3 + $0x38] sm:$0xff]
      %v2179 = vld [vmem:[#allocation3 + $0x40] sm:$0xff]
      %v2180 = vld [vmem:[#allocation3 + $0x48] sm:$0xff]
      %v2181 = vld [vmem:[#allocation3 + $0x50] sm:$0xff]
      %v2182 = vld [vmem:[#allocation3 + $0x58] sm:$0xff]
      %v2183 = vld [vmem:[#allocation3 + $0x60] sm:$0xff]
      %v2184 = vld [vmem:[#allocation3 + $0x68] sm:$0xff]
      %v2185 = vld [vmem:[#allocation3 + $0x70] sm:$0xff]
      %v2186 = vld [vmem:[#allocation3 + $0x78] sm:$0xff]
      %v2187 = vld [vmem:[#allocation3 + $0x80] sm:$0xff]
      %v2188 = vld [vmem:[#allocation3 + $0x88] sm:$0xff]
      %v2189 = vld [vmem:[#allocation3 + $0x90] sm:$0xff]
      %v2190 = vld [vmem:[#allocation3 + $0x98] sm:$0xff]
      %v2191 = vld [vmem:[#allocation3 + $0xa0] sm:$0xff]
      %v2192 = vld [vmem:[#allocation3 + $0xa8] sm:$0xff]
      %v2193 = vld [vmem:[#allocation3 + $0xb0] sm:$0xff]
      %v2194 = vld [vmem:[#allocation3 + $0xb8] sm:$0xff]
      %v2195 = vld [vmem:[#allocation3 + $0xc0] sm:$0xff]
      %v2196 = vld [vmem:[#allocation3 + $0xc8] sm:$0xff]
      %v2197 = vld [vmem:[#allocation3 + $0xd0] sm:$0xff]
      %v2198 = vld [vmem:[#allocation3 + $0xd8] sm:$0xff]
      %v2199 = vld [vmem:[#allocation3 + $0xe0] sm:$0xff]
      %v2200 = vld [vmem:[#allocation3 + $0xe8] sm:$0xff]
      %v2201 = vld [vmem:[#allocation3 + $0xf0] sm:$0xff]
      %v2202 = vld [vmem:[#allocation3 + $0xf8] sm:$0xff]
      %v2207 = vunpack.c.l.b16 %v2167
      %v2208 = vunpack.c.l.b16 %v2168
      %v2209 = vunpack.c.l.b16 %v2169
      %v2210 = vunpack.c.l.b16 %v2170
      %v2211 = vpack.c.b16 %v2208, %v2207
      %v2212 = vpack.c.b16 %v2210, %v2209
      %v2245 = vunpack.c.l.b16 %v2171
      %v2246 = vunpack.c.h.b16 %v2171
      %v2247 = vunpack.c.l.b16 %v2172
      %v2248 = vunpack.c.h.b16 %v2172
      %v2249 = vunpack.c.l.b16 %v2173
      %v2250 = vunpack.c.h.b16 %v2173
      %v2251 = vunpack.c.l.b16 %v2174
      %v2252 = vunpack.c.h.b16 %v2174
      %v2253 = vunpack.c.l.b16 %v2175
      %v2254 = vunpack.c.h.b16 %v2175
      %v2255 = vunpack.c.l.b16 %v2176
      %v2256 = vunpack.c.h.b16 %v2176
      %v2257 = vunpack.c.l.b16 %v2177
      %v2258 = vunpack.c.h.b16 %v2177
      %v2259 = vunpack.c.l.b16 %v2178
      %v2260 = vunpack.c.h.b16 %v2178
      %v2261 = vunpack.c.l.b16 %v2179
      %v2262 = vunpack.c.h.b16 %v2179
      %v2263 = vunpack.c.l.b16 %v2180
      %v2264 = vunpack.c.h.b16 %v2180
      %v2265 = vunpack.c.l.b16 %v2181
      %v2266 = vunpack.c.h.b16 %v2181
      %v2267 = vunpack.c.l.b16 %v2182
      %v2268 = vunpack.c.h.b16 %v2182
      %v2269 = vunpack.c.l.b16 %v2183
      %v2270 = vunpack.c.h.b16 %v2183
      %v2271 = vunpack.c.l.b16 %v2184
      %v2272 = vunpack.c.h.b16 %v2184
      %v2273 = vunpack.c.l.b16 %v2185
      %v2274 = vunpack.c.h.b16 %v2185
      %v2275 = vunpack.c.l.b16 %v2186
      %v2276 = vunpack.c.h.b16 %v2186
      %v2277 = vunpack.c.l.b16 %v2187
      %v2278 = vunpack.c.h.b16 %v2187
      %v2279 = vunpack.c.l.b16 %v2188
      %v2280 = vunpack.c.h.b16 %v2188
      %v2281 = vunpack.c.l.b16 %v2189
      %v2282 = vunpack.c.h.b16 %v2189
      %v2283 = vunpack.c.l.b16 %v2190
      %v2284 = vunpack.c.h.b16 %v2190
      %v2285 = vunpack.c.l.b16 %v2191
      %v2286 = vunpack.c.h.b16 %v2191
      %v2287 = vunpack.c.l.b16 %v2192
      %v2288 = vunpack.c.h.b16 %v2192
      %v2289 = vunpack.c.l.b16 %v2193
      %v2290 = vunpack.c.h.b16 %v2193
      %v2291 = vunpack.c.l.b16 %v2194
      %v2292 = vunpack.c.h.b16 %v2194
      %v2293 = vunpack.c.l.b16 %v2195
      %v2294 = vunpack.c.h.b16 %v2195
      %v2295 = vunpack.c.l.b16 %v2196
      %v2296 = vunpack.c.h.b16 %v2196
      %v2297 = vunpack.c.l.b16 %v2197
      %v2298 = vunpack.c.h.b16 %v2197
      %v2299 = vunpack.c.l.b16 %v2198
      %v2300 = vunpack.c.h.b16 %v2198
      %v2301 = vunpack.c.l.b16 %v2199
      %v2302 = vunpack.c.h.b16 %v2199
      %v2303 = vunpack.c.l.b16 %v2200
      %v2304 = vunpack.c.h.b16 %v2200
      %v2305 = vunpack.c.l.b16 %v2201
      %v2306 = vunpack.c.h.b16 %v2201
      %v2307 = vunpack.c.l.b16 %v2202
      %v2308 = vunpack.c.h.b16 %v2202
      %v2309 = vpack.c.b16 %v2261, %v2245
      %v2310 = vpack.c.b16 %v2262, %v2246
      %v2311 = vpack.c.b16 %v2263, %v2247
      %v2312 = vpack.c.b16 %v2264, %v2248
      %v2313 = vpack.c.b16 %v2265, %v2249
      %v2314 = vpack.c.b16 %v2266, %v2250
      %v2315 = vpack.c.b16 %v2267, %v2251
      %v2316 = vpack.c.b16 %v2268, %v2252
      %v2317 = vpack.c.b16 %v2269, %v2253
      %v2318 = vpack.c.b16 %v2270, %v2254
      %v2319 = vpack.c.b16 %v2271, %v2255
      %v2320 = vpack.c.b16 %v2272, %v2256
      %v2321 = vpack.c.b16 %v2273, %v2257
      %v2322 = vpack.c.b16 %v2274, %v2258
      %v2323 = vpack.c.b16 %v2275, %v2259
      %v2324 = vpack.c.b16 %v2276, %v2260
      %v2325 = vpack.c.b16 %v2293, %v2277
      %v2326 = vpack.c.b16 %v2294, %v2278
      %v2327 = vpack.c.b16 %v2295, %v2279
      %v2328 = vpack.c.b16 %v2296, %v2280
      %v2329 = vpack.c.b16 %v2297, %v2281
      %v2330 = vpack.c.b16 %v2298, %v2282
      %v2331 = vpack.c.b16 %v2299, %v2283
      %v2332 = vpack.c.b16 %v2300, %v2284
      %v2333 = vpack.c.b16 %v2301, %v2285
      %v2334 = vpack.c.b16 %v2302, %v2286
      %v2335 = vpack.c.b16 %v2303, %v2287
      %v2336 = vpack.c.b16 %v2304, %v2288
      %v2337 = vpack.c.b16 %v2305, %v2289
      %v2338 = vpack.c.b16 %v2306, %v2290
      %v2339 = vpack.c.b16 %v2307, %v2291
      %v2340 = vpack.c.b16 %v2308, %v2292
      %vm2373 = vcmask 261120
      %v2375 = vsel %vm2373, %v2211, 0
      %v2378 = vsel %vm2373, %v2212, 0
      %2380 = vmatpush.bf16.msra.mxu0 0
      %2381 = vmatpush.bf16.msra.mxu0 0
      %2382 = vmatpush.bf16.msra.mxu0 0
      %2383 = vmatpush.bf16.msra.mxu0 0
      %2384 = vmatpush.bf16.msra.mxu0 0
      %2385 = vmatpush.bf16.msra.mxu0 0
      %2386 = vmatpush.bf16.msra.mxu0 %v2325
      %2387 = vmatpush.bf16.msra.mxu0 %v2309
      %2388 = vmatmul.bf16.gmra.mxu0 %v2375
      %v2389 = vpop.f32.mrf.mxu0
      %v2390 = vadd.f32 0.0, %v2389
      %v2391 = vpop.f32.mrf.mxu0
      %v2392 = vadd.f32 0.0, %v2391
      %2393 = vmatmul.bf16.gmra.mxu0 %v2378
      %v2394 = vpop.f32.mrf.mxu0
      %v2395 = vadd.f32 0.0, %v2394
      %v2396 = vpop.f32.mrf.mxu0
      %v2397 = vadd.f32 0.0, %v2396
      %2398 = vdwg.mxu0
      %2399 = vmatpush.bf16.msra.mxu0 0
      %2400 = vmatpush.bf16.msra.mxu0 0
      %2401 = vmatpush.bf16.msra.mxu0 0
      %2402 = vmatpush.bf16.msra.mxu0 0
      %2403 = vmatpush.bf16.msra.mxu0 0
      %2404 = vmatpush.bf16.msra.mxu0 0
      %2405 = vmatpush.bf16.msra.mxu0 %v2326
      %2406 = vmatpush.bf16.msra.mxu0 %v2310
      %2407 = vmatmul.bf16.gmra.mxu0 %v2375
      %v2408 = vpop.f32.mrf.mxu0
      %v2409 = vadd.f32 0.0, %v2408
      %v2410 = vpop.f32.mrf.mxu0
      %v2411 = vadd.f32 0.0, %v2410
      %2412 = vmatmul.bf16.gmra.mxu0 %v2378
      %v2413 = vpop.f32.mrf.mxu0
      %v2414 = vadd.f32 0.0, %v2413
      %v2415 = vpop.f32.mrf.mxu0
      %v2416 = vadd.f32 0.0, %v2415
      %2417 = vdwg.mxu0
      %2418 = vmatpush.bf16.msra.mxu0 0
      %2419 = vmatpush.bf16.msra.mxu0 0
      %2420 = vmatpush.bf16.msra.mxu0 0
      %2421 = vmatpush.bf16.msra.mxu0 0
      %2422 = vmatpush.bf16.msra.mxu0 0
      %2423 = vmatpush.bf16.msra.mxu0 0
      %2424 = vmatpush.bf16.msra.mxu0 %v2327
      %2425 = vmatpush.bf16.msra.mxu0 %v2311
      %2426 = vmatmul.bf16.gmra.mxu0 %v2375
      %v2427 = vpop.f32.mrf.mxu0
      %v2428 = vadd.f32 0.0, %v2427
      %v2429 = vpop.f32.mrf.mxu0
      %v2430 = vadd.f32 0.0, %v2429
      %2431 = vmatmul.bf16.gmra.mxu0 %v2378
      %v2432 = vpop.f32.mrf.mxu0
      %v2433 = vadd.f32 0.0, %v2432
      %v2434 = vpop.f32.mrf.mxu0
      %v2435 = vadd.f32 0.0, %v2434
      %2436 = vdwg.mxu0
      %2437 = vmatpush.bf16.msra.mxu0 0
      %2438 = vmatpush.bf16.msra.mxu0 0
      %2439 = vmatpush.bf16.msra.mxu0 0
      %2440 = vmatpush.bf16.msra.mxu0 0
      %2441 = vmatpush.bf16.msra.mxu0 0
      %2442 = vmatpush.bf16.msra.mxu0 0
      %2443 = vmatpush.bf16.msra.mxu0 %v2328
      %2444 = vmatpush.bf16.msra.mxu0 %v2312
      %2445 = vmatmul.bf16.gmra.mxu0 %v2375
      %v2446 = vpop.f32.mrf.mxu0
      %v2447 = vadd.f32 0.0, %v2446
      %v2448 = vpop.f32.mrf.mxu0
      %v2449 = vadd.f32 0.0, %v2448
      %2450 = vmatmul.bf16.gmra.mxu0 %v2378
      %v2451 = vpop.f32.mrf.mxu0
      %v2452 = vadd.f32 0.0, %v2451
      %v2453 = vpop.f32.mrf.mxu0
      %v2454 = vadd.f32 0.0, %v2453
      %2455 = vdwg.mxu0
      %2456 = vmatpush.bf16.msra.mxu0 0
      %2457 = vmatpush.bf16.msra.mxu0 0
      %2458 = vmatpush.bf16.msra.mxu0 0
      %2459 = vmatpush.bf16.msra.mxu0 0
      %2460 = vmatpush.bf16.msra.mxu0 0
      %2461 = vmatpush.bf16.msra.mxu0 0
      %2462 = vmatpush.bf16.msra.mxu0 %v2329
      %2463 = vmatpush.bf16.msra.mxu0 %v2313
      %2464 = vmatmul.bf16.gmra.mxu0 %v2375
      %v2465 = vpop.f32.mrf.mxu0
      %v2466 = vadd.f32 0.0, %v2465
      %v2467 = vpop.f32.mrf.mxu0
      %v2468 = vadd.f32 0.0, %v2467
      %2469 = vmatmul.bf16.gmra.mxu0 %v2378
      %v2470 = vpop.f32.mrf.mxu0
      %v2471 = vadd.f32 0.0, %v2470
      %v2472 = vpop.f32.mrf.mxu0
      %v2473 = vadd.f32 0.0, %v2472
      %2474 = vdwg.mxu0
      %2475 = vmatpush.bf16.msra.mxu0 0
      %2476 = vmatpush.bf16.msra.mxu0 0
      %2477 = vmatpush.bf16.msra.mxu0 0
      %2478 = vmatpush.bf16.msra.mxu0 0
      %2479 = vmatpush.bf16.msra.mxu0 0
      %2480 = vmatpush.bf16.msra.mxu0 0
      %2481 = vmatpush.bf16.msra.mxu0 %v2330
      %2482 = vmatpush.bf16.msra.mxu0 %v2314
      %2483 = vmatmul.bf16.gmra.mxu0 %v2375
      %v2484 = vpop.f32.mrf.mxu0
      %v2485 = vadd.f32 0.0, %v2484
      %v2486 = vpop.f32.mrf.mxu0
      %v2487 = vadd.f32 0.0, %v2486
      %2488 = vmatmul.bf16.gmra.mxu0 %v2378
      %v2489 = vpop.f32.mrf.mxu0
      %v2490 = vadd.f32 0.0, %v2489
      %v2491 = vpop.f32.mrf.mxu0
      %v2492 = vadd.f32 0.0, %v2491
      %2493 = vdwg.mxu0
      %2494 = vmatpush.bf16.msra.mxu0 0
      %2495 = vmatpush.bf16.msra.mxu0 0
      %2496 = vmatpush.bf16.msra.mxu0 0
      %2497 = vmatpush.bf16.msra.mxu0 0
      %2498 = vmatpush.bf16.msra.mxu0 0
      %2499 = vmatpush.bf16.msra.mxu0 0
      %2500 = vmatpush.bf16.msra.mxu0 %v2331
      %2501 = vmatpush.bf16.msra.mxu0 %v2315
      %2502 = vmatmul.bf16.gmra.mxu0 %v2375
      %v2503 = vpop.f32.mrf.mxu0
      %v2504 = vadd.f32 0.0, %v2503
      %v2505 = vpop.f32.mrf.mxu0
      %v2506 = vadd.f32 0.0, %v2505
      %2507 = vmatmul.bf16.gmra.mxu0 %v2378
      %v2508 = vpop.f32.mrf.mxu0
      %v2509 = vadd.f32 0.0, %v2508
      %v2510 = vpop.f32.mrf.mxu0
      %v2511 = vadd.f32 0.0, %v2510
      %2512 = vdwg.mxu0
      %2513 = vmatpush.bf16.msra.mxu0 0
      %2514 = vmatpush.bf16.msra.mxu0 0
      %2515 = vmatpush.bf16.msra.mxu0 0
      %2516 = vmatpush.bf16.msra.mxu0 0
      %2517 = vmatpush.bf16.msra.mxu0 0
      %2518 = vmatpush.bf16.msra.mxu0 0
      %2519 = vmatpush.bf16.msra.mxu0 %v2332
      %2520 = vmatpush.bf16.msra.mxu0 %v2316
      %2521 = vmatmul.bf16.gmra.mxu0 %v2375
      %v2522 = vpop.f32.mrf.mxu0
      %v2523 = vadd.f32 0.0, %v2522
      %v2524 = vpop.f32.mrf.mxu0
      %v2525 = vadd.f32 0.0, %v2524
      %2526 = vmatmul.bf16.gmra.mxu0 %v2378
      %v2527 = vpop.f32.mrf.mxu0
      %v2528 = vadd.f32 0.0, %v2527
      %v2529 = vpop.f32.mrf.mxu0
      %v2530 = vadd.f32 0.0, %v2529
      %2531 = vdwg.mxu0
      %2532 = vmatpush.bf16.msra.mxu0 0
      %2533 = vmatpush.bf16.msra.mxu0 0
      %2534 = vmatpush.bf16.msra.mxu0 0
      %2535 = vmatpush.bf16.msra.mxu0 0
      %2536 = vmatpush.bf16.msra.mxu0 0
      %2537 = vmatpush.bf16.msra.mxu0 0
      %2538 = vmatpush.bf16.msra.mxu0 %v2333
      %2539 = vmatpush.bf16.msra.mxu0 %v2317
      %2540 = vmatmul.bf16.gmra.mxu0 %v2375
      %v2541 = vpop.f32.mrf.mxu0
      %v2542 = vadd.f32 0.0, %v2541
      %v2543 = vpop.f32.mrf.mxu0
      %v2544 = vadd.f32 0.0, %v2543
      %2545 = vmatmul.bf16.gmra.mxu0 %v2378
      %v2546 = vpop.f32.mrf.mxu0
      %v2547 = vadd.f32 0.0, %v2546
      %v2548 = vpop.f32.mrf.mxu0
      %v2549 = vadd.f32 0.0, %v2548
      %2550 = vdwg.mxu0
      %2551 = vmatpush.bf16.msra.mxu0 0
      %2552 = vmatpush.bf16.msra.mxu0 0
      %2553 = vmatpush.bf16.msra.mxu0 0
      %2554 = vmatpush.bf16.msra.mxu0 0
      %2555 = vmatpush.bf16.msra.mxu0 0
      %2556 = vmatpush.bf16.msra.mxu0 0
      %2557 = vmatpush.bf16.msra.mxu0 %v2334
      %2558 = vmatpush.bf16.msra.mxu0 %v2318
      %2559 = vmatmul.bf16.gmra.mxu0 %v2375
      %v2560 = vpop.f32.mrf.mxu0
      %v2561 = vadd.f32 0.0, %v2560
      %v2562 = vpop.f32.mrf.mxu0
      %v2563 = vadd.f32 0.0, %v2562
      %2564 = vmatmul.bf16.gmra.mxu0 %v2378
      %v2565 = vpop.f32.mrf.mxu0
      %v2566 = vadd.f32 0.0, %v2565
      %v2567 = vpop.f32.mrf.mxu0
      %v2568 = vadd.f32 0.0, %v2567
      %2569 = vdwg.mxu0
      %2570 = vmatpush.bf16.msra.mxu0 0
      %2571 = vmatpush.bf16.msra.mxu0 0
      %2572 = vmatpush.bf16.msra.mxu0 0
      %2573 = vmatpush.bf16.msra.mxu0 0
      %2574 = vmatpush.bf16.msra.mxu0 0
      %2575 = vmatpush.bf16.msra.mxu0 0
      %2576 = vmatpush.bf16.msra.mxu0 %v2335
      %2577 = vmatpush.bf16.msra.mxu0 %v2319
      %2578 = vmatmul.bf16.gmra.mxu0 %v2375
      %v2579 = vpop.f32.mrf.mxu0
      %v2580 = vadd.f32 0.0, %v2579
      %v2581 = vpop.f32.mrf.mxu0
      %v2582 = vadd.f32 0.0, %v2581
      %2583 = vmatmul.bf16.gmra.mxu0 %v2378
      %v2584 = vpop.f32.mrf.mxu0
      %v2585 = vadd.f32 0.0, %v2584
      %v2586 = vpop.f32.mrf.mxu0
      %v2587 = vadd.f32 0.0, %v2586
      %2588 = vdwg.mxu0
      %2589 = vmatpush.bf16.msra.mxu0 0
      %2590 = vmatpush.bf16.msra.mxu0 0
      %2591 = vmatpush.bf16.msra.mxu0 0
      %2592 = vmatpush.bf16.msra.mxu0 0
      %2593 = vmatpush.bf16.msra.mxu0 0
      %2594 = vmatpush.bf16.msra.mxu0 0
      %2595 = vmatpush.bf16.msra.mxu0 %v2336
      %2596 = vmatpush.bf16.msra.mxu0 %v2320
      %2597 = vmatmul.bf16.gmra.mxu0 %v2375
      %v2598 = vpop.f32.mrf.mxu0
      %v2599 = vadd.f32 0.0, %v2598
      %v2600 = vpop.f32.mrf.mxu0
      %v2601 = vadd.f32 0.0, %v2600
      %2602 = vmatmul.bf16.gmra.mxu0 %v2378
      %v2603 = vpop.f32.mrf.mxu0
      %v2604 = vadd.f32 0.0, %v2603
      %v2605 = vpop.f32.mrf.mxu0
      %v2606 = vadd.f32 0.0, %v2605
      %2607 = vdwg.mxu0
      %2608 = vmatpush.bf16.msra.mxu0 0
      %2609 = vmatpush.bf16.msra.mxu0 0
      %2610 = vmatpush.bf16.msra.mxu0 0
      %2611 = vmatpush.bf16.msra.mxu0 0
      %2612 = vmatpush.bf16.msra.mxu0 0
      %2613 = vmatpush.bf16.msra.mxu0 0
      %2614 = vmatpush.bf16.msra.mxu0 %v2337
      %2615 = vmatpush.bf16.msra.mxu0 %v2321
      %2616 = vmatmul.bf16.gmra.mxu0 %v2375
      %v2617 = vpop.f32.mrf.mxu0
      %v2618 = vadd.f32 0.0, %v2617
      %v2619 = vpop.f32.mrf.mxu0
      %v2620 = vadd.f32 0.0, %v2619
      %2621 = vmatmul.bf16.gmra.mxu0 %v2378
      %v2622 = vpop.f32.mrf.mxu0
      %v2623 = vadd.f32 0.0, %v2622
      %v2624 = vpop.f32.mrf.mxu0
      %v2625 = vadd.f32 0.0, %v2624
      %2626 = vdwg.mxu0
      %2627 = vmatpush.bf16.msra.mxu0 0
      %2628 = vmatpush.bf16.msra.mxu0 0
      %2629 = vmatpush.bf16.msra.mxu0 0
      %2630 = vmatpush.bf16.msra.mxu0 0
      %2631 = vmatpush.bf16.msra.mxu0 0
      %2632 = vmatpush.bf16.msra.mxu0 0
      %2633 = vmatpush.bf16.msra.mxu0 %v2338
      %2634 = vmatpush.bf16.msra.mxu0 %v2322
      %2635 = vmatmul.bf16.gmra.mxu0 %v2375
      %v2636 = vpop.f32.mrf.mxu0
      %v2637 = vadd.f32 0.0, %v2636
      %v2638 = vpop.f32.mrf.mxu0
      %v2639 = vadd.f32 0.0, %v2638
      %2640 = vmatmul.bf16.gmra.mxu0 %v2378
      %v2641 = vpop.f32.mrf.mxu0
      %v2642 = vadd.f32 0.0, %v2641
      %v2643 = vpop.f32.mrf.mxu0
      %v2644 = vadd.f32 0.0, %v2643
      %2645 = vdwg.mxu0
      %2646 = vmatpush.bf16.msra.mxu0 0
      %2647 = vmatpush.bf16.msra.mxu0 0
      %2648 = vmatpush.bf16.msra.mxu0 0
      %2649 = vmatpush.bf16.msra.mxu0 0
      %2650 = vmatpush.bf16.msra.mxu0 0
      %2651 = vmatpush.bf16.msra.mxu0 0
      %2652 = vmatpush.bf16.msra.mxu0 %v2339
      %2653 = vmatpush.bf16.msra.mxu0 %v2323
      %2654 = vmatmul.bf16.gmra.mxu0 %v2375
      %v2655 = vpop.f32.mrf.mxu0
      %v2656 = vadd.f32 0.0, %v2655
      %v2657 = vpop.f32.mrf.mxu0
      %v2658 = vadd.f32 0.0, %v2657
      %2659 = vmatmul.bf16.gmra.mxu0 %v2378
      %v2660 = vpop.f32.mrf.mxu0
      %v2661 = vadd.f32 0.0, %v2660
      %v2662 = vpop.f32.mrf.mxu0
      %v2663 = vadd.f32 0.0, %v2662
      %2664 = vdwg.mxu0
      %2665 = vmatpush.bf16.msra.mxu0 0
      %2666 = vmatpush.bf16.msra.mxu0 0
      %2667 = vmatpush.bf16.msra.mxu0 0
      %2668 = vmatpush.bf16.msra.mxu0 0
      %2669 = vmatpush.bf16.msra.mxu0 0
      %2670 = vmatpush.bf16.msra.mxu0 0
      %2671 = vmatpush.bf16.msra.mxu0 %v2340
      %2672 = vmatpush.bf16.msra.mxu0 %v2324
      %2673 = vmatmul.bf16.gmra.mxu0 %v2375
      %v2674 = vpop.f32.mrf.mxu0
      %v2675 = vadd.f32 0.0, %v2674
      %v2676 = vpop.f32.mrf.mxu0
      %v2677 = vadd.f32 0.0, %v2676
      %2678 = vmatmul.bf16.gmra.mxu0 %v2378
      %v2679 = vpop.f32.mrf.mxu0
      %v2680 = vadd.f32 0.0, %v2679
      %v2681 = vpop.f32.mrf.mxu0
      %v2682 = vadd.f32 0.0, %v2681
      %2683 = vdwg.mxu0
      %v2684 = vld [vmem:[%s254] sm:$0xff]
      %v2685 = vld [vmem:[%s254 + $0x8] sm:$0xff]
      %v2686 = vld [vmem:[%s254 + $0x10] sm:$0xff]
      %v2687 = vld [vmem:[%s254 + $0x18] sm:$0xff]
      %v2688 = vadd.f32 %v2390, %v2409
      %v2689 = vadd.f32 %v2688, %v2428
      %v2690 = vadd.f32 %v2689, %v2447
      %v2691 = vadd.f32 %v2690, %v2466
      %v2692 = vadd.f32 %v2691, %v2485
      %v2693 = vadd.f32 %v2692, %v2504
      %v2694 = vadd.f32 %v2693, %v2523
      %v2695 = vadd.f32 %v2694, %v2542
      %v2696 = vadd.f32 %v2695, %v2561
      %v2697 = vadd.f32 %v2696, %v2580
      %v2698 = vadd.f32 %v2697, %v2599
      %v2699 = vadd.f32 %v2698, %v2618
      %v2700 = vadd.f32 %v2699, %v2637
      %v2701 = vadd.f32 %v2700, %v2656
      %v2702 = vadd.f32 %v2701, %v2675
      %2703 = vadd.xlane.f32.xlu0 %v2702
      %v2704 = vpop.xlane.xlu0 %2703
      %v2705 = vadd.f32 %v2392, %v2411
      %v2706 = vadd.f32 %v2705, %v2430
      %v2707 = vadd.f32 %v2706, %v2449
      %v2708 = vadd.f32 %v2707, %v2468
      %v2709 = vadd.f32 %v2708, %v2487
      %v2710 = vadd.f32 %v2709, %v2506
      %v2711 = vadd.f32 %v2710, %v2525
      %v2712 = vadd.f32 %v2711, %v2544
      %v2713 = vadd.f32 %v2712, %v2563
      %v2714 = vadd.f32 %v2713, %v2582
      %v2715 = vadd.f32 %v2714, %v2601
      %v2716 = vadd.f32 %v2715, %v2620
      %v2717 = vadd.f32 %v2716, %v2639
      %v2718 = vadd.f32 %v2717, %v2658
      %v2719 = vadd.f32 %v2718, %v2677
      %2720 = vadd.xlane.f32.xlu0 %v2719
      %v2721 = vpop.xlane.xlu0 %2720
      %v2722 = vadd.f32 %v2395, %v2414
      %v2723 = vadd.f32 %v2722, %v2433
      %v2724 = vadd.f32 %v2723, %v2452
      %v2725 = vadd.f32 %v2724, %v2471
      %v2726 = vadd.f32 %v2725, %v2490
      %v2727 = vadd.f32 %v2726, %v2509
      %v2728 = vadd.f32 %v2727, %v2528
      %v2729 = vadd.f32 %v2728, %v2547
      %v2730 = vadd.f32 %v2729, %v2566
      %v2731 = vadd.f32 %v2730, %v2585
      %v2732 = vadd.f32 %v2731, %v2604
      %v2733 = vadd.f32 %v2732, %v2623
      %v2734 = vadd.f32 %v2733, %v2642
      %v2735 = vadd.f32 %v2734, %v2661
      %v2736 = vadd.f32 %v2735, %v2680
      %2737 = vadd.xlane.f32.xlu0 %v2736
      %v2738 = vpop.xlane.xlu0 %2737
      %v2739 = vadd.f32 %v2397, %v2416
      %v2740 = vadd.f32 %v2739, %v2435
      %v2741 = vadd.f32 %v2740, %v2454
      %v2742 = vadd.f32 %v2741, %v2473
      %v2743 = vadd.f32 %v2742, %v2492
      %v2744 = vadd.f32 %v2743, %v2511
      %v2745 = vadd.f32 %v2744, %v2530
      %v2746 = vadd.f32 %v2745, %v2549
      %v2747 = vadd.f32 %v2746, %v2568
      %v2748 = vadd.f32 %v2747, %v2587
      %v2749 = vadd.f32 %v2748, %v2606
      %v2750 = vadd.f32 %v2749, %v2625
      %v2751 = vadd.f32 %v2750, %v2644
      %v2752 = vadd.f32 %v2751, %v2663
      %v2753 = vadd.f32 %v2752, %v2682
      %2754 = vadd.xlane.f32.xlu0 %v2753
      %v2755 = vpop.xlane.xlu0 %2754
      %v2756 = vmul.f32 %v2390, %v2390
      %v2757 = vmul.f32 %v2409, %v2409
      %v2758 = vmul.f32 %v2428, %v2428
      %v2759 = vmul.f32 %v2447, %v2447
      %v2760 = vmul.f32 %v2466, %v2466
      %v2761 = vmul.f32 %v2485, %v2485
      %v2762 = vmul.f32 %v2504, %v2504
      %v2763 = vmul.f32 %v2523, %v2523
      %v2764 = vmul.f32 %v2542, %v2542
      %v2765 = vmul.f32 %v2561, %v2561
      %v2766 = vmul.f32 %v2580, %v2580
      %v2767 = vmul.f32 %v2599, %v2599
      %v2768 = vmul.f32 %v2618, %v2618
      %v2769 = vmul.f32 %v2637, %v2637
      %v2770 = vmul.f32 %v2656, %v2656
      %v2771 = vmul.f32 %v2675, %v2675
      %v2772 = vmul.f32 %v2392, %v2392
      %v2773 = vmul.f32 %v2411, %v2411
      %v2774 = vmul.f32 %v2430, %v2430
      %v2775 = vmul.f32 %v2449, %v2449
      %v2776 = vmul.f32 %v2468, %v2468
      %v2777 = vmul.f32 %v2487, %v2487
      %v2778 = vmul.f32 %v2506, %v2506
      %v2779 = vmul.f32 %v2525, %v2525
      %v2780 = vmul.f32 %v2544, %v2544
      %v2781 = vmul.f32 %v2563, %v2563
      %v2782 = vmul.f32 %v2582, %v2582
      %v2783 = vmul.f32 %v2601, %v2601
      %v2784 = vmul.f32 %v2620, %v2620
      %v2785 = vmul.f32 %v2639, %v2639
      %v2786 = vmul.f32 %v2658, %v2658
      %v2787 = vmul.f32 %v2677, %v2677
      %v2788 = vmul.f32 %v2395, %v2395
      %v2789 = vmul.f32 %v2414, %v2414
      %v2790 = vmul.f32 %v2433, %v2433
      %v2791 = vmul.f32 %v2452, %v2452
      %v2792 = vmul.f32 %v2471, %v2471
      %v2793 = vmul.f32 %v2490, %v2490
      %v2794 = vmul.f32 %v2509, %v2509
      %v2795 = vmul.f32 %v2528, %v2528
      %v2796 = vmul.f32 %v2547, %v2547
      %v2797 = vmul.f32 %v2566, %v2566
      %v2798 = vmul.f32 %v2585, %v2585
      %v2799 = vmul.f32 %v2604, %v2604
      %v2800 = vmul.f32 %v2623, %v2623
      %v2801 = vmul.f32 %v2642, %v2642
      %v2802 = vmul.f32 %v2661, %v2661
      %v2803 = vmul.f32 %v2680, %v2680
      %v2804 = vmul.f32 %v2397, %v2397
      %v2805 = vmul.f32 %v2416, %v2416
      %v2806 = vmul.f32 %v2435, %v2435
      %v2807 = vmul.f32 %v2454, %v2454
      %v2808 = vmul.f32 %v2473, %v2473
      %v2809 = vmul.f32 %v2492, %v2492
      %v2810 = vmul.f32 %v2511, %v2511
      %v2811 = vmul.f32 %v2530, %v2530
      %v2812 = vmul.f32 %v2549, %v2549
      %v2813 = vmul.f32 %v2568, %v2568
      %v2814 = vmul.f32 %v2587, %v2587
      %v2815 = vmul.f32 %v2606, %v2606
      %v2816 = vmul.f32 %v2625, %v2625
      %v2817 = vmul.f32 %v2644, %v2644
      %v2818 = vmul.f32 %v2663, %v2663
      %v2819 = vmul.f32 %v2682, %v2682
      %v2820 = vadd.f32 %v2756, %v2757
      %v2821 = vadd.f32 %v2820, %v2758
      %v2822 = vadd.f32 %v2821, %v2759
      %v2823 = vadd.f32 %v2822, %v2760
      %v2824 = vadd.f32 %v2823, %v2761
      %v2825 = vadd.f32 %v2824, %v2762
      %v2826 = vadd.f32 %v2825, %v2763
      %v2827 = vadd.f32 %v2826, %v2764
      %v2828 = vadd.f32 %v2827, %v2765
      %v2829 = vadd.f32 %v2828, %v2766
      %v2830 = vadd.f32 %v2829, %v2767
      %v2831 = vadd.f32 %v2830, %v2768
      %v2832 = vadd.f32 %v2831, %v2769
      %v2833 = vadd.f32 %v2832, %v2770
      %v2834 = vadd.f32 %v2833, %v2771
      %2835 = vadd.xlane.f32.xlu0 %v2834
      %v2836 = vpop.xlane.xlu0 %2835
      %v2837 = vadd.f32 %v2772, %v2773
      %v2838 = vadd.f32 %v2837, %v2774
      %v2839 = vadd.f32 %v2838, %v2775
      %v2840 = vadd.f32 %v2839, %v2776
      %v2841 = vadd.f32 %v2840, %v2777
      %v2842 = vadd.f32 %v2841, %v2778
      %v2843 = vadd.f32 %v2842, %v2779
      %v2844 = vadd.f32 %v2843, %v2780
      %v2845 = vadd.f32 %v2844, %v2781
      %v2846 = vadd.f32 %v2845, %v2782
      %v2847 = vadd.f32 %v2846, %v2783
      %v2848 = vadd.f32 %v2847, %v2784
      %v2849 = vadd.f32 %v2848, %v2785
      %v2850 = vadd.f32 %v2849, %v2786
      %v2851 = vadd.f32 %v2850, %v2787
      %2852 = vadd.xlane.f32.xlu0 %v2851
      %v2853 = vpop.xlane.xlu0 %2852
      %v2854 = vadd.f32 %v2788, %v2789
      %v2855 = vadd.f32 %v2854, %v2790
      %v2856 = vadd.f32 %v2855, %v2791
      %v2857 = vadd.f32 %v2856, %v2792
      %v2858 = vadd.f32 %v2857, %v2793
      %v2859 = vadd.f32 %v2858, %v2794
      %v2860 = vadd.f32 %v2859, %v2795
      %v2861 = vadd.f32 %v2860, %v2796
      %v2862 = vadd.f32 %v2861, %v2797
      %v2863 = vadd.f32 %v2862, %v2798
      %v2864 = vadd.f32 %v2863, %v2799
      %v2865 = vadd.f32 %v2864, %v2800
      %v2866 = vadd.f32 %v2865, %v2801
      %v2867 = vadd.f32 %v2866, %v2802
      %v2868 = vadd.f32 %v2867, %v2803
      %2869 = vadd.xlane.f32.xlu0 %v2868
      %v2870 = vpop.xlane.xlu0 %2869
      %v2871 = vadd.f32 %v2804, %v2805
      %v2872 = vadd.f32 %v2871, %v2806
      %v2873 = vadd.f32 %v2872, %v2807
      %v2874 = vadd.f32 %v2873, %v2808
      %v2875 = vadd.f32 %v2874, %v2809
      %v2876 = vadd.f32 %v2875, %v2810
      %v2877 = vadd.f32 %v2876, %v2811
      %v2878 = vadd.f32 %v2877, %v2812
      %v2879 = vadd.f32 %v2878, %v2813
      %v2880 = vadd.f32 %v2879, %v2814
      %v2881 = vadd.f32 %v2880, %v2815
      %v2882 = vadd.f32 %v2881, %v2816
      %v2883 = vadd.f32 %v2882, %v2817
      %v2884 = vadd.f32 %v2883, %v2818
      %v2885 = vadd.f32 %v2884, %v2819
      %2886 = vadd.xlane.f32.xlu0 %v2885
      %v2887 = vpop.xlane.xlu0 %2886
      %v2888 = vmul.f32 %v2684, 2048.0
      %v2889 = vmul.f32 %v2685, 2048.0
      %v2890 = vmul.f32 %v2686, 2048.0
      %v2891 = vmul.f32 %v2687, 2048.0
      %v2892 = vadd.f32 %v2704, %v2888
      %v2893 = vadd.f32 %v2721, %v2889
      %v2894 = vadd.f32 %v2738, %v2890
      %v2895 = vadd.f32 %v2755, %v2891
      %v2896 = vmul.f32 %v2684, 2.0
      %v2897 = vmul.f32 %v2685, 2.0
      %v2898 = vmul.f32 %v2686, 2.0
      %v2899 = vmul.f32 %v2687, 2.0
      %v2900 = vmul.f32 %v2896, %v2704
      %v2901 = vmul.f32 %v2897, %v2721
      %v2902 = vmul.f32 %v2898, %v2738
      %v2903 = vmul.f32 %v2899, %v2755
      %v2904 = vadd.f32 %v2836, %v2900
      %v2905 = vadd.f32 %v2853, %v2901
      %v2906 = vadd.f32 %v2870, %v2902
      %v2907 = vadd.f32 %v2887, %v2903
      %v2908 = vmul.f32 %v2888, %v2684
      %v2909 = vmul.f32 %v2889, %v2685
      %v2910 = vmul.f32 %v2890, %v2686
      %v2911 = vmul.f32 %v2891, %v2687
      %v2912 = vadd.f32 %v2904, %v2908
      %v2913 = vadd.f32 %v2905, %v2909
      %v2914 = vadd.f32 %v2906, %v2910
      %v2915 = vadd.f32 %v2907, %v2911
      %v2916 = vsel %vm644, %v2892, 0.0
      %v2917 = vsel %vm644, %v2893, 0.0
      %v2918 = vadd.f32 %v2916, %v2917
      %v2919 = vsel %vm644, %v2894, 0.0
      %v2920 = vadd.f32 %v2918, %v2919
      %v2921 = vsel %vm644, %v2895, 0.0
      %v2922 = vadd.f32 %v2920, %v2921
      %v2923 = vrot.slane %v2922, 4
      %v2924 = vadd.f32 %v2922, %v2923
      %v2925 = vrot.slane %v2924, 2
      %v2926 = vadd.f32 %v2924, %v2925
      %v2927 = vrot.slane %v2926, 1
      %v2928 = vadd.f32 %v2926, %v2927
      %v2929 = vrcp.pop 65536.0
      %v2930 = vmul.f32 65536.0, %v2929
      %v2931 = vsub.f32 1.0, %v2930
      %v2932 = vmul.f32 %v2929, %v2931
      %v2933 = vadd.f32 %v2929, %v2932
      %vm2934 = vweird.f32 %v2929
      %v2935 = vsel %vm2934, %v2929, %v2933
      %v2936 = vmul.f32 %v2928, %v2935
      %v2937 = vsel %vm644, %v2912, 0.0
      %v2938 = vsel %vm644, %v2913, 0.0
      %v2939 = vadd.f32 %v2937, %v2938
      %v2940 = vsel %vm644, %v2914, 0.0
      %v2941 = vadd.f32 %v2939, %v2940
      %v2942 = vsel %vm644, %v2915, 0.0
      %v2943 = vadd.f32 %v2941, %v2942
      %v2944 = vrot.slane %v2943, 4
      %v2945 = vadd.f32 %v2943, %v2944
      %v2946 = vrot.slane %v2945, 2
      %v2947 = vadd.f32 %v2945, %v2946
      %v2948 = vrot.slane %v2947, 1
      %v2949 = vadd.f32 %v2947, %v2948
      %v2950 = vmul.f32 %v2949, %v2935
      %v2951 = vmul.f32 %v2936, %v2936
      %v2952 = vsub.f32 %v2950, %v2951
      %v2953 = vmax.f32 %v2952, 0.0
      %v2954 = vadd.f32 %v2953, 1e-05
      %v2955 = vrsqrt.pop %v2954
      %v2956 = vmul.f32 %v2955, %v2954
      %v2957 = vmul.f32 %v2956, %v2955
      %v2958 = vmul.f32 0.5, %v2957
      %v2959 = vsub.f32 1.5, %v2958
      %v2960 = vmul.f32 %v2955, %v2959
      %vm2961 = vweird.f32 %v2954
      %vm2962 = vweird.f32 %v2955
      %vm2963 = vmor %vm2961, %vm2962
      %v2964 = vsel %vm2963, %v2955, %v2960
      %2966 = vrot.lane.b32.xlu0 %v2964, 1
      %v2967 = vpop.permute.xlu0 %2966
      %v2969 = vmul.f32 %v2684, %v2967
      %v2970 = vmul.f32 %v2685, %v2967
      %v2971 = vmul.f32 %v2686, %v2967
      %v2972 = vmul.f32 %v2687, %v2967
      %v2973 = vsub.f32 %v2684, %v2936
      %v2974 = vsub.f32 %v2685, %v2936
      %v2975 = vsub.f32 %v2686, %v2936
      %v2976 = vsub.f32 %v2687, %v2936
      %2981 = vrot.lane.b32.xlu0 %v2969, 127
      %v2982 = vpop.permute.xlu0 %2981
      %2983 = vrot.lane.b32.xlu0 %v2970, 127
      %v2984 = vpop.permute.xlu0 %2983
      %2985 = vrot.lane.b32.xlu0 %v2971, 127
      %v2986 = vpop.permute.xlu0 %2985
      %2987 = vrot.lane.b32.xlu0 %v2972, 127
      %v2988 = vpop.permute.xlu0 %2987
      %v2993 = vmul.f32 %v2973, %v2982
      %v2994 = vmul.f32 %v2974, %v2984
      %v2995 = vmul.f32 %v2975, %v2986
      %v2996 = vmul.f32 %v2976, %v2988
      %3001 = vrot.lane.b32.xlu0 %v2684, 126
      %v3002 = vpop.permute.xlu0 %3001
      %3003 = vrot.lane.b32.xlu0 %v2685, 126
      %v3004 = vpop.permute.xlu0 %3003
      %3005 = vrot.lane.b32.xlu0 %v2686, 126
      %v3006 = vpop.permute.xlu0 %3005
      %3007 = vrot.lane.b32.xlu0 %v2687, 126
      %v3008 = vpop.permute.xlu0 %3007
      %v3013 = vadd.f32 %v2993, %v3002
      %v3014 = vadd.f32 %v2994, %v3004
      %v3015 = vadd.f32 %v2995, %v3006
      %v3016 = vadd.f32 %v2996, %v3008
      %3017 = vset.pattern.permute.xlu0 1
      %3018 = vperm.xlu0 %3017, %v2969
      %v3019 = vpop.permute.xlu0 %3018
      %3021 = vset.pattern.permute.xlu0 1
      %3022 = vperm.xlu0 %3021, %v2970
      %v3023 = vpop.permute.xlu0 %3022
      %3025 = vset.pattern.permute.xlu0 1
      %3026 = vperm.xlu0 %3025, %v2971
      %v3027 = vpop.permute.xlu0 %3026
      %3029 = vset.pattern.permute.xlu0 1
      %3030 = vperm.xlu0 %3029, %v2972
      %v3031 = vpop.permute.xlu0 %3030
      %v3033 = vmul.f32 %v2390, %v3019
      %v3034 = vmul.f32 %v2409, %v3019
      %v3035 = vmul.f32 %v2428, %v3019
      %v3036 = vmul.f32 %v2447, %v3019
      %v3037 = vmul.f32 %v2466, %v3019
      %v3038 = vmul.f32 %v2485, %v3019
      %v3039 = vmul.f32 %v2504, %v3019
      %v3040 = vmul.f32 %v2523, %v3019
      %v3041 = vmul.f32 %v2542, %v3019
      %v3042 = vmul.f32 %v2561, %v3019
      %v3043 = vmul.f32 %v2580, %v3019
      %v3044 = vmul.f32 %v2599, %v3019
      %v3045 = vmul.f32 %v2618, %v3019
      %v3046 = vmul.f32 %v2637, %v3019
      %v3047 = vmul.f32 %v2656, %v3019
      %v3048 = vmul.f32 %v2675, %v3019
      %v3049 = vmul.f32 %v2392, %v3023
      %v3050 = vmul.f32 %v2411, %v3023
      %v3051 = vmul.f32 %v2430, %v3023
      %v3052 = vmul.f32 %v2449, %v3023
      %v3053 = vmul.f32 %v2468, %v3023
      %v3054 = vmul.f32 %v2487, %v3023
      %v3055 = vmul.f32 %v2506, %v3023
      %v3056 = vmul.f32 %v2525, %v3023
      %v3057 = vmul.f32 %v2544, %v3023
      %v3058 = vmul.f32 %v2563, %v3023
      %v3059 = vmul.f32 %v2582, %v3023
      %v3060 = vmul.f32 %v2601, %v3023
      %v3061 = vmul.f32 %v2620, %v3023
      %v3062 = vmul.f32 %v2639, %v3023
      %v3063 = vmul.f32 %v2658, %v3023
      %v3064 = vmul.f32 %v2677, %v3023
      %v3065 = vmul.f32 %v2395, %v3027
      %v3066 = vmul.f32 %v2414, %v3027
      %v3067 = vmul.f32 %v2433, %v3027
      %v3068 = vmul.f32 %v2452, %v3027
      %v3069 = vmul.f32 %v2471, %v3027
      %v3070 = vmul.f32 %v2490, %v3027
      %v3071 = vmul.f32 %v2509, %v3027
      %v3072 = vmul.f32 %v2528, %v3027
      %v3073 = vmul.f32 %v2547, %v3027
      %v3074 = vmul.f32 %v2566, %v3027
      %v3075 = vmul.f32 %v2585, %v3027
      %v3076 = vmul.f32 %v2604, %v3027
      %v3077 = vmul.f32 %v2623, %v3027
      %v3078 = vmul.f32 %v2642, %v3027
      %v3079 = vmul.f32 %v2661, %v3027
      %v3080 = vmul.f32 %v2680, %v3027
      %v3081 = vmul.f32 %v2397, %v3031
      %v3082 = vmul.f32 %v2416, %v3031
      %v3083 = vmul.f32 %v2435, %v3031
      %v3084 = vmul.f32 %v2454, %v3031
      %v3085 = vmul.f32 %v2473, %v3031
      %v3086 = vmul.f32 %v2492, %v3031
      %v3087 = vmul.f32 %v2511, %v3031
      %v3088 = vmul.f32 %v2530, %v3031
      %v3089 = vmul.f32 %v2549, %v3031
      %v3090 = vmul.f32 %v2568, %v3031
      %v3091 = vmul.f32 %v2587, %v3031
      %v3092 = vmul.f32 %v2606, %v3031
      %v3093 = vmul.f32 %v2625, %v3031
      %v3094 = vmul.f32 %v2644, %v3031
      %v3095 = vmul.f32 %v2663, %v3031
      %v3096 = vmul.f32 %v2682, %v3031
      %3098 = vset.pattern.permute.xlu0 0
      %3099 = vperm.xlu0 %3098, %v3013
      %v3100 = vpop.permute.xlu0 %3099
      %3103 = vset.pattern.permute.xlu0 0
      %3104 = vperm.xlu0 %3103, %v3014
      %v3105 = vpop.permute.xlu0 %3104
      %3108 = vset.pattern.permute.xlu0 0
      %3109 = vperm.xlu0 %3108, %v3015
      %v3110 = vpop.permute.xlu0 %3109
      %3113 = vset.pattern.permute.xlu0 0
      %3114 = vperm.xlu0 %3113, %v3016
      %v3115 = vpop.permute.xlu0 %3114
      %v3117 = vadd.f32 %v3033, %v3100
      %v3118 = vadd.f32 %v3034, %v3100
      %v3119 = vadd.f32 %v3035, %v3100
      %v3120 = vadd.f32 %v3036, %v3100
      %v3121 = vadd.f32 %v3037, %v3100
      %v3122 = vadd.f32 %v3038, %v3100
      %v3123 = vadd.f32 %v3039, %v3100
      %v3124 = vadd.f32 %v3040, %v3100
      %v3125 = vadd.f32 %v3041, %v3100
      %v3126 = vadd.f32 %v3042, %v3100
      %v3127 = vadd.f32 %v3043, %v3100
      %v3128 = vadd.f32 %v3044, %v3100
      %v3129 = vadd.f32 %v3045, %v3100
      %v3130 = vadd.f32 %v3046, %v3100
      %v3131 = vadd.f32 %v3047, %v3100
      %v3132 = vadd.f32 %v3048, %v3100
      %v3133 = vadd.f32 %v3049, %v3105
      %v3134 = vadd.f32 %v3050, %v3105
      %v3135 = vadd.f32 %v3051, %v3105
      %v3136 = vadd.f32 %v3052, %v3105
      %v3137 = vadd.f32 %v3053, %v3105
      %v3138 = vadd.f32 %v3054, %v3105
      %v3139 = vadd.f32 %v3055, %v3105
      %v3140 = vadd.f32 %v3056, %v3105
      %v3141 = vadd.f32 %v3057, %v3105
      %v3142 = vadd.f32 %v3058, %v3105
      %v3143 = vadd.f32 %v3059, %v3105
      %v3144 = vadd.f32 %v3060, %v3105
      %v3145 = vadd.f32 %v3061, %v3105
      %v3146 = vadd.f32 %v3062, %v3105
      %v3147 = vadd.f32 %v3063, %v3105
      %v3148 = vadd.f32 %v3064, %v3105
      %v3149 = vadd.f32 %v3065, %v3110
      %v3150 = vadd.f32 %v3066, %v3110
      %v3151 = vadd.f32 %v3067, %v3110
      %v3152 = vadd.f32 %v3068, %v3110
      %v3153 = vadd.f32 %v3069, %v3110
      %v3154 = vadd.f32 %v3070, %v3110
      %v3155 = vadd.f32 %v3071, %v3110
      %v3156 = vadd.f32 %v3072, %v3110
      %v3157 = vadd.f32 %v3073, %v3110
      %v3158 = vadd.f32 %v3074, %v3110
      %v3159 = vadd.f32 %v3075, %v3110
      %v3160 = vadd.f32 %v3076, %v3110
      %v3161 = vadd.f32 %v3077, %v3110
      %v3162 = vadd.f32 %v3078, %v3110
      %v3163 = vadd.f32 %v3079, %v3110
      %v3164 = vadd.f32 %v3080, %v3110
      %v3165 = vadd.f32 %v3081, %v3115
      %v3166 = vadd.f32 %v3082, %v3115
      %v3167 = vadd.f32 %v3083, %v3115
      %v3168 = vadd.f32 %v3084, %v3115
      %v3169 = vadd.f32 %v3085, %v3115
      %v3170 = vadd.f32 %v3086, %v3115
      %v3171 = vadd.f32 %v3087, %v3115
      %v3172 = vadd.f32 %v3088, %v3115
      %v3173 = vadd.f32 %v3089, %v3115
      %v3174 = vadd.f32 %v3090, %v3115
      %v3175 = vadd.f32 %v3091, %v3115
      %v3176 = vadd.f32 %v3092, %v3115
      %v3177 = vadd.f32 %v3093, %v3115
      %v3178 = vadd.f32 %v3094, %v3115
      %v3179 = vadd.f32 %v3095, %v3115
      %v3180 = vadd.f32 %v3096, %v3115
      %v3181 = vsub.f32 0.0, %v3117
      %v3182 = vsub.f32 0.0, %v3118
      %v3183 = vsub.f32 0.0, %v3119
      %v3184 = vsub.f32 0.0, %v3120
      %v3185 = vsub.f32 0.0, %v3121
      %v3186 = vsub.f32 0.0, %v3122
      %v3187 = vsub.f32 0.0, %v3123
      %v3188 = vsub.f32 0.0, %v3124
      %v3189 = vsub.f32 0.0, %v3125
      %v3190 = vsub.f32 0.0, %v3126
      %v3191 = vsub.f32 0.0, %v3127
      %v3192 = vsub.f32 0.0, %v3128
      %v3193 = vsub.f32 0.0, %v3129
      %v3194 = vsub.f32 0.0, %v3130
      %v3195 = vsub.f32 0.0, %v3131
      %v3196 = vsub.f32 0.0, %v3132
      %v3197 = vsub.f32 0.0, %v3133
      %v3198 = vsub.f32 0.0, %v3134
      %v3199 = vsub.f32 0.0, %v3135
      %v3200 = vsub.f32 0.0, %v3136
      %v3201 = vsub.f32 0.0, %v3137
      %v3202 = vsub.f32 0.0, %v3138
      %v3203 = vsub.f32 0.0, %v3139
      %v3204 = vsub.f32 0.0, %v3140
      %v3205 = vsub.f32 0.0, %v3141
      %v3206 = vsub.f32 0.0, %v3142
      %v3207 = vsub.f32 0.0, %v3143
      %v3208 = vsub.f32 0.0, %v3144
      %v3209 = vsub.f32 0.0, %v3145
      %v3210 = vsub.f32 0.0, %v3146
      %v3211 = vsub.f32 0.0, %v3147
      %v3212 = vsub.f32 0.0, %v3148
      %v3213 = vsub.f32 0.0, %v3149
      %v3214 = vsub.f32 0.0, %v3150
      %v3215 = vsub.f32 0.0, %v3151
      %v3216 = vsub.f32 0.0, %v3152
      %v3217 = vsub.f32 0.0, %v3153
      %v3218 = vsub.f32 0.0, %v3154
      %v3219 = vsub.f32 0.0, %v3155
      %v3220 = vsub.f32 0.0, %v3156
      %v3221 = vsub.f32 0.0, %v3157
      %v3222 = vsub.f32 0.0, %v3158
      %v3223 = vsub.f32 0.0, %v3159
      %v3224 = vsub.f32 0.0, %v3160
      %v3225 = vsub.f32 0.0, %v3161
      %v3226 = vsub.f32 0.0, %v3162
      %v3227 = vsub.f32 0.0, %v3163
      %v3228 = vsub.f32 0.0, %v3164
      %v3229 = vsub.f32 0.0, %v3165
      %v3230 = vsub.f32 0.0, %v3166
      %v3231 = vsub.f32 0.0, %v3167
      %v3232 = vsub.f32 0.0, %v3168
      %v3233 = vsub.f32 0.0, %v3169
      %v3234 = vsub.f32 0.0, %v3170
      %v3235 = vsub.f32 0.0, %v3171
      %v3236 = vsub.f32 0.0, %v3172
      %v3237 = vsub.f32 0.0, %v3173
      %v3238 = vsub.f32 0.0, %v3174
      %v3239 = vsub.f32 0.0, %v3175
      %v3240 = vsub.f32 0.0, %v3176
      %v3241 = vsub.f32 0.0, %v3177
      %v3242 = vsub.f32 0.0, %v3178
      %v3243 = vsub.f32 0.0, %v3179
      %v3244 = vsub.f32 0.0, %v3180
      %v3245 = vmul.f32 %v3181, 1.442695
      %v3246 = vpow.pop %v3245
      %v3247 = vmul.f32 %v3182, 1.442695
      %v3248 = vpow.pop %v3247
      %v3249 = vmul.f32 %v3183, 1.442695
      %v3250 = vpow.pop %v3249
      %v3251 = vmul.f32 %v3184, 1.442695
      %v3252 = vpow.pop %v3251
      %v3253 = vmul.f32 %v3185, 1.442695
      %v3254 = vpow.pop %v3253
      %v3255 = vmul.f32 %v3186, 1.442695
      %v3256 = vpow.pop %v3255
      %v3257 = vmul.f32 %v3187, 1.442695
      %v3258 = vpow.pop %v3257
      %v3259 = vmul.f32 %v3188, 1.442695
      %v3260 = vpow.pop %v3259
      %v3261 = vmul.f32 %v3189, 1.442695
      %v3262 = vpow.pop %v3261
      %v3263 = vmul.f32 %v3190, 1.442695
      %v3264 = vpow.pop %v3263
      %v3265 = vmul.f32 %v3191, 1.442695
      %v3266 = vpow.pop %v3265
      %v3267 = vmul.f32 %v3192, 1.442695
      %v3268 = vpow.pop %v3267
      %v3269 = vmul.f32 %v3193, 1.442695
      %v3270 = vpow.pop %v3269
      %v3271 = vmul.f32 %v3194, 1.442695
      %v3272 = vpow.pop %v3271
      %v3273 = vmul.f32 %v3195, 1.442695
      %v3274 = vpow.pop %v3273
      %v3275 = vmul.f32 %v3196, 1.442695
      %v3276 = vpow.pop %v3275
      %v3277 = vmul.f32 %v3197, 1.442695
      %v3278 = vpow.pop %v3277
      %v3279 = vmul.f32 %v3198, 1.442695
      %v3280 = vpow.pop %v3279
      %v3281 = vmul.f32 %v3199, 1.442695
      %v3282 = vpow.pop %v3281
      %v3283 = vmul.f32 %v3200, 1.442695
      %v3284 = vpow.pop %v3283
      %v3285 = vmul.f32 %v3201, 1.442695
      %v3286 = vpow.pop %v3285
      %v3287 = vmul.f32 %v3202, 1.442695
      %v3288 = vpow.pop %v3287
      %v3289 = vmul.f32 %v3203, 1.442695
      %v3290 = vpow.pop %v3289
      %v3291 = vmul.f32 %v3204, 1.442695
      %v3292 = vpow.pop %v3291
      %v3293 = vmul.f32 %v3205, 1.442695
      %v3294 = vpow.pop %v3293
      %v3295 = vmul.f32 %v3206, 1.442695
      %v3296 = vpow.pop %v3295
      %v3297 = vmul.f32 %v3207, 1.442695
      %v3298 = vpow.pop %v3297
      %v3299 = vmul.f32 %v3208, 1.442695
      %v3300 = vpow.pop %v3299
      %v3301 = vmul.f32 %v3209, 1.442695
      %v3302 = vpow.pop %v3301
      %v3303 = vmul.f32 %v3210, 1.442695
      %v3304 = vpow.pop %v3303
      %v3305 = vmul.f32 %v3211, 1.442695
      %v3306 = vpow.pop %v3305
      %v3307 = vmul.f32 %v3212, 1.442695
      %v3308 = vpow.pop %v3307
      %v3309 = vmul.f32 %v3213, 1.442695
      %v3310 = vpow.pop %v3309
      %v3311 = vmul.f32 %v3214, 1.442695
      %v3312 = vpow.pop %v3311
      %v3313 = vmul.f32 %v3215, 1.442695
      %v3314 = vpow.pop %v3313
      %v3315 = vmul.f32 %v3216, 1.442695
      %v3316 = vpow.pop %v3315
      %v3317 = vmul.f32 %v3217, 1.442695
      %v3318 = vpow.pop %v3317
      %v3319 = vmul.f32 %v3218, 1.442695
      %v3320 = vpow.pop %v3319
      %v3321 = vmul.f32 %v3219, 1.442695
      %v3322 = vpow.pop %v3321
      %v3323 = vmul.f32 %v3220, 1.442695
      %v3324 = vpow.pop %v3323
      %v3325 = vmul.f32 %v3221, 1.442695
      %v3326 = vpow.pop %v3325
      %v3327 = vmul.f32 %v3222, 1.442695
      %v3328 = vpow.pop %v3327
      %v3329 = vmul.f32 %v3223, 1.442695
      %v3330 = vpow.pop %v3329
      %v3331 = vmul.f32 %v3224, 1.442695
      %v3332 = vpow.pop %v3331
      %v3333 = vmul.f32 %v3225, 1.442695
      %v3334 = vpow.pop %v3333
      %v3335 = vmul.f32 %v3226, 1.442695
      %v3336 = vpow.pop %v3335
      %v3337 = vmul.f32 %v3227, 1.442695
      %v3338 = vpow.pop %v3337
      %v3339 = vmul.f32 %v3228, 1.442695
      %v3340 = vpow.pop %v3339
      %v3341 = vmul.f32 %v3229, 1.442695
      %v3342 = vpow.pop %v3341
      %v3343 = vmul.f32 %v3230, 1.442695
      %v3344 = vpow.pop %v3343
      %v3345 = vmul.f32 %v3231, 1.442695
      %v3346 = vpow.pop %v3345
      %v3347 = vmul.f32 %v3232, 1.442695
      %v3348 = vpow.pop %v3347
      %v3349 = vmul.f32 %v3233, 1.442695
      %v3350 = vpow.pop %v3349
      %v3351 = vmul.f32 %v3234, 1.442695
      %v3352 = vpow.pop %v3351
      %v3353 = vmul.f32 %v3235, 1.442695
      %v3354 = vpow.pop %v3353
      %v3355 = vmul.f32 %v3236, 1.442695
      %v3356 = vpow.pop %v3355
      %v3357 = vmul.f32 %v3237, 1.442695
      %v3358 = vpow.pop %v3357
      %v3359 = vmul.f32 %v3238, 1.442695
      %v3360 = vpow.pop %v3359
      %v3361 = vmul.f32 %v3239, 1.442695
      %v3362 = vpow.pop %v3361
      %v3363 = vmul.f32 %v3240, 1.442695
      %v3364 = vpow.pop %v3363
      %v3365 = vmul.f32 %v3241, 1.442695
      %v3366 = vpow.pop %v3365
      %v3367 = vmul.f32 %v3242, 1.442695
      %v3368 = vpow.pop %v3367
      %v3369 = vmul.f32 %v3243, 1.442695
      %v3370 = vpow.pop %v3369
      %v3371 = vmul.f32 %v3244, 1.442695
      %v3372 = vpow.pop %v3371
      %v3373 = vadd.f32 %v3246, 1.0
      %v3374 = vadd.f32 %v3248, 1.0
      %v3375 = vadd.f32 %v3250, 1.0
      %v3376 = vadd.f32 %v3252, 1.0
      %v3377 = vadd.f32 %v3254, 1.0
      %v3378 = vadd.f32 %v3256, 1.0
      %v3379 = vadd.f32 %v3258, 1.0
      %v3380 = vadd.f32 %v3260, 1.0
      %v3381 = vadd.f32 %v3262, 1.0
      %v3382 = vadd.f32 %v3264, 1.0
      %v3383 = vadd.f32 %v3266, 1.0
      %v3384 = vadd.f32 %v3268, 1.0
      %v3385 = vadd.f32 %v3270, 1.0
      %v3386 = vadd.f32 %v3272, 1.0
      %v3387 = vadd.f32 %v3274, 1.0
      %v3388 = vadd.f32 %v3276, 1.0
      %v3389 = vadd.f32 %v3278, 1.0
      %v3390 = vadd.f32 %v3280, 1.0
      %v3391 = vadd.f32 %v3282, 1.0
      %v3392 = vadd.f32 %v3284, 1.0
      %v3393 = vadd.f32 %v3286, 1.0
      %v3394 = vadd.f32 %v3288, 1.0
      %v3395 = vadd.f32 %v3290, 1.0
      %v3396 = vadd.f32 %v3292, 1.0
      %v3397 = vadd.f32 %v3294, 1.0
      %v3398 = vadd.f32 %v3296, 1.0
      %v3399 = vadd.f32 %v3298, 1.0
      %v3400 = vadd.f32 %v3300, 1.0
      %v3401 = vadd.f32 %v3302, 1.0
      %v3402 = vadd.f32 %v3304, 1.0
      %v3403 = vadd.f32 %v3306, 1.0
      %v3404 = vadd.f32 %v3308, 1.0
      %v3405 = vadd.f32 %v3310, 1.0
      %v3406 = vadd.f32 %v3312, 1.0
      %v3407 = vadd.f32 %v3314, 1.0
      %v3408 = vadd.f32 %v3316, 1.0
      %v3409 = vadd.f32 %v3318, 1.0
      %v3410 = vadd.f32 %v3320, 1.0
      %v3411 = vadd.f32 %v3322, 1.0
      %v3412 = vadd.f32 %v3324, 1.0
      %v3413 = vadd.f32 %v3326, 1.0
      %v3414 = vadd.f32 %v3328, 1.0
      %v3415 = vadd.f32 %v3330, 1.0
      %v3416 = vadd.f32 %v3332, 1.0
      %v3417 = vadd.f32 %v3334, 1.0
      %v3418 = vadd.f32 %v3336, 1.0
      %v3419 = vadd.f32 %v3338, 1.0
      %v3420 = vadd.f32 %v3340, 1.0
      %v3421 = vadd.f32 %v3342, 1.0
      %v3422 = vadd.f32 %v3344, 1.0
      %v3423 = vadd.f32 %v3346, 1.0
      %v3424 = vadd.f32 %v3348, 1.0
      %v3425 = vadd.f32 %v3350, 1.0
      %v3426 = vadd.f32 %v3352, 1.0
      %v3427 = vadd.f32 %v3354, 1.0
      %v3428 = vadd.f32 %v3356, 1.0
      %v3429 = vadd.f32 %v3358, 1.0
      %v3430 = vadd.f32 %v3360, 1.0
      %v3431 = vadd.f32 %v3362, 1.0
      %v3432 = vadd.f32 %v3364, 1.0
      %v3433 = vadd.f32 %v3366, 1.0
      %v3434 = vadd.f32 %v3368, 1.0
      %v3435 = vadd.f32 %v3370, 1.0
      %v3436 = vadd.f32 %v3372, 1.0
      %v3437 = vrcp.pop %v3373
      %v3438 = vrcp.pop %v3374
      %v3439 = vrcp.pop %v3375
      %v3440 = vrcp.pop %v3376
      %v3441 = vrcp.pop %v3377
      %v3442 = vrcp.pop %v3378
      %v3443 = vrcp.pop %v3379
      %v3444 = vrcp.pop %v3380
      %v3445 = vrcp.pop %v3381
      %v3446 = vrcp.pop %v3382
      %v3447 = vrcp.pop %v3383
      %v3448 = vrcp.pop %v3384
      %v3449 = vrcp.pop %v3385
      %v3450 = vrcp.pop %v3386
      %v3451 = vrcp.pop %v3387
      %v3452 = vrcp.pop %v3388
      %v3453 = vrcp.pop %v3389
      %v3454 = vrcp.pop %v3390
      %v3455 = vrcp.pop %v3391
      %v3456 = vrcp.pop %v3392
      %v3457 = vrcp.pop %v3393
      %v3458 = vrcp.pop %v3394
      %v3459 = vrcp.pop %v3395
      %v3460 = vrcp.pop %v3396
      %v3461 = vrcp.pop %v3397
      %v3462 = vrcp.pop %v3398
      %v3463 = vrcp.pop %v3399
      %v3464 = vrcp.pop %v3400
      %v3465 = vrcp.pop %v3401
      %v3466 = vrcp.pop %v3402
      %v3467 = vrcp.pop %v3403
      %v3468 = vrcp.pop %v3404
      %v3469 = vrcp.pop %v3405
      %v3470 = vrcp.pop %v3406
      %v3471 = vrcp.pop %v3407
      %v3472 = vrcp.pop %v3408
      %v3473 = vrcp.pop %v3409
      %v3474 = vrcp.pop %v3410
      %v3475 = vrcp.pop %v3411
      %v3476 = vrcp.pop %v3412
      %v3477 = vrcp.pop %v3413
      %v3478 = vrcp.pop %v3414
      %v3479 = vrcp.pop %v3415
      %v3480 = vrcp.pop %v3416
      %v3481 = vrcp.pop %v3417
      %v3482 = vrcp.pop %v3418
      %v3483 = vrcp.pop %v3419
      %v3484 = vrcp.pop %v3420
      %v3485 = vrcp.pop %v3421
      %v3486 = vrcp.pop %v3422
      %v3487 = vrcp.pop %v3423
      %v3488 = vrcp.pop %v3424
      %v3489 = vrcp.pop %v3425
      %v3490 = vrcp.pop %v3426
      %v3491 = vrcp.pop %v3427
      %v3492 = vrcp.pop %v3428
      %v3493 = vrcp.pop %v3429
      %v3494 = vrcp.pop %v3430
      %v3495 = vrcp.pop %v3431
      %v3496 = vrcp.pop %v3432
      %v3497 = vrcp.pop %v3433
      %v3498 = vrcp.pop %v3434
      %v3499 = vrcp.pop %v3435
      %v3500 = vrcp.pop %v3436
      %v3501 = vmul.f32 %v3117, %v3437
      %v3502 = vmul.f32 %v3118, %v3438
      %v3503 = vmul.f32 %v3119, %v3439
      %v3504 = vmul.f32 %v3120, %v3440
      %v3505 = vmul.f32 %v3121, %v3441
      %v3506 = vmul.f32 %v3122, %v3442
      %v3507 = vmul.f32 %v3123, %v3443
      %v3508 = vmul.f32 %v3124, %v3444
      %v3509 = vmul.f32 %v3125, %v3445
      %v3510 = vmul.f32 %v3126, %v3446
      %v3511 = vmul.f32 %v3127, %v3447
      %v3512 = vmul.f32 %v3128, %v3448
      %v3513 = vmul.f32 %v3129, %v3449
      %v3514 = vmul.f32 %v3130, %v3450
      %v3515 = vmul.f32 %v3131, %v3451
      %v3516 = vmul.f32 %v3132, %v3452
      %v3517 = vmul.f32 %v3133, %v3453
      %v3518 = vmul.f32 %v3134, %v3454
      %v3519 = vmul.f32 %v3135, %v3455
      %v3520 = vmul.f32 %v3136, %v3456
      %v3521 = vmul.f32 %v3137, %v3457
      %v3522 = vmul.f32 %v3138, %v3458
      %v3523 = vmul.f32 %v3139, %v3459
      %v3524 = vmul.f32 %v3140, %v3460
      %v3525 = vmul.f32 %v3141, %v3461
      %v3526 = vmul.f32 %v3142, %v3462
      %v3527 = vmul.f32 %v3143, %v3463
      %v3528 = vmul.f32 %v3144, %v3464
      %v3529 = vmul.f32 %v3145, %v3465
      %v3530 = vmul.f32 %v3146, %v3466
      %v3531 = vmul.f32 %v3147, %v3467
      %v3532 = vmul.f32 %v3148, %v3468
      %v3533 = vmul.f32 %v3149, %v3469
      %v3534 = vmul.f32 %v3150, %v3470
      %v3535 = vmul.f32 %v3151, %v3471
      %v3536 = vmul.f32 %v3152, %v3472
      %v3537 = vmul.f32 %v3153, %v3473
      %v3538 = vmul.f32 %v3154, %v3474
      %v3539 = vmul.f32 %v3155, %v3475
      %v3540 = vmul.f32 %v3156, %v3476
      %v3541 = vmul.f32 %v3157, %v3477
      %v3542 = vmul.f32 %v3158, %v3478
      %v3543 = vmul.f32 %v3159, %v3479
      %v3544 = vmul.f32 %v3160, %v3480
      %v3545 = vmul.f32 %v3161, %v3481
      %v3546 = vmul.f32 %v3162, %v3482
      %v3547 = vmul.f32 %v3163, %v3483
      %v3548 = vmul.f32 %v3164, %v3484
      %v3549 = vmul.f32 %v3165, %v3485
      %v3550 = vmul.f32 %v3166, %v3486
      %v3551 = vmul.f32 %v3167, %v3487
      %v3552 = vmul.f32 %v3168, %v3488
      %v3553 = vmul.f32 %v3169, %v3489
      %v3554 = vmul.f32 %v3170, %v3490
      %v3555 = vmul.f32 %v3171, %v3491
      %v3556 = vmul.f32 %v3172, %v3492
      %v3557 = vmul.f32 %v3173, %v3493
      %v3558 = vmul.f32 %v3174, %v3494
      %v3559 = vmul.f32 %v3175, %v3495
      %v3560 = vmul.f32 %v3176, %v3496
      %v3561 = vmul.f32 %v3177, %v3497
      %v3562 = vmul.f32 %v3178, %v3498
      %v3563 = vmul.f32 %v3179, %v3499
      %v3564 = vmul.f32 %v3180, %v3500
      %v3565 = vpack.c.bf16 %v3502, %v3501
      %v3566 = vpack.c.bf16 %v3504, %v3503
      %v3567 = vpack.c.bf16 %v3506, %v3505
      %v3568 = vpack.c.bf16 %v3508, %v3507
      %v3569 = vpack.c.bf16 %v3510, %v3509
      %v3570 = vpack.c.bf16 %v3512, %v3511
      %v3571 = vpack.c.bf16 %v3514, %v3513
      %v3572 = vpack.c.bf16 %v3516, %v3515
      %v3573 = vpack.c.bf16 %v3518, %v3517
      %v3574 = vpack.c.bf16 %v3520, %v3519
      %v3575 = vpack.c.bf16 %v3522, %v3521
      %v3576 = vpack.c.bf16 %v3524, %v3523
      %v3577 = vpack.c.bf16 %v3526, %v3525
      %v3578 = vpack.c.bf16 %v3528, %v3527
      %v3579 = vpack.c.bf16 %v3530, %v3529
      %v3580 = vpack.c.bf16 %v3532, %v3531
      %v3581 = vpack.c.bf16 %v3534, %v3533
      %v3582 = vpack.c.bf16 %v3536, %v3535
      %v3583 = vpack.c.bf16 %v3538, %v3537
      %v3584 = vpack.c.bf16 %v3540, %v3539
      %v3585 = vpack.c.bf16 %v3542, %v3541
      %v3586 = vpack.c.bf16 %v3544, %v3543
      %v3587 = vpack.c.bf16 %v3546, %v3545
      %v3588 = vpack.c.bf16 %v3548, %v3547
      %v3589 = vpack.c.bf16 %v3550, %v3549
      %v3590 = vpack.c.bf16 %v3552, %v3551
      %v3591 = vpack.c.bf16 %v3554, %v3553
      %v3592 = vpack.c.bf16 %v3556, %v3555
      %v3593 = vpack.c.bf16 %v3558, %v3557
      %v3594 = vpack.c.bf16 %v3560, %v3559
      %v3595 = vpack.c.bf16 %v3562, %v3561
      %v3596 = vpack.c.bf16 %v3564, %v3563
      %3597 = vst [vmem:[%s265] sm:$0xff] %v3565
      %3598 = vst [vmem:[%s265 + $0x8] sm:$0xff] %v3566
      %3599 = vst [vmem:[%s265 + $0x10] sm:$0xff] %v3567
      %3600 = vst [vmem:[%s265 + $0x18] sm:$0xff] %v3568
      %3601 = vst [vmem:[%s265 + $0x20] sm:$0xff] %v3569
      %3602 = vst [vmem:[%s265 + $0x28] sm:$0xff] %v3570
      %3603 = vst [vmem:[%s265 + $0x30] sm:$0xff] %v3571
      %3604 = vst [vmem:[%s265 + $0x38] sm:$0xff] %v3572
      %3605 = vst [vmem:[%s265 + $0x40] sm:$0xff] %v3573
      %3606 = vst [vmem:[%s265 + $0x48] sm:$0xff] %v3574
      %3607 = vst [vmem:[%s265 + $0x50] sm:$0xff] %v3575
      %3608 = vst [vmem:[%s265 + $0x58] sm:$0xff] %v3576
      %3609 = vst [vmem:[%s265 + $0x60] sm:$0xff] %v3577
      %3610 = vst [vmem:[%s265 + $0x68] sm:$0xff] %v3578
      %3611 = vst [vmem:[%s265 + $0x70] sm:$0xff] %v3579
      %3612 = vst [vmem:[%s265 + $0x78] sm:$0xff] %v3580
      %3613 = vst [vmem:[%s265 + $0x80] sm:$0xff] %v3581
      %3614 = vst [vmem:[%s265 + $0x88] sm:$0xff] %v3582
      %3615 = vst [vmem:[%s265 + $0x90] sm:$0xff] %v3583
      %3616 = vst [vmem:[%s265 + $0x98] sm:$0xff] %v3584
      %3617 = vst [vmem:[%s265 + $0xa0] sm:$0xff] %v3585
      %3618 = vst [vmem:[%s265 + $0xa8] sm:$0xff] %v3586
      %3619 = vst [vmem:[%s265 + $0xb0] sm:$0xff] %v3587
      %3620 = vst [vmem:[%s265 + $0xb8] sm:$0xff] %v3588
      %3621 = vst [vmem:[%s265 + $0xc0] sm:$0xff] %v3589
      %3622 = vst [vmem:[%s265 + $0xc8] sm:$0xff] %v3590
      %3623 = vst [vmem:[%s265 + $0xd0] sm:$0xff] %v3591
      %3624 = vst [vmem:[%s265 + $0xd8] sm:$0xff] %v3592
      %3625 = vst [vmem:[%s265 + $0xe0] sm:$0xff] %v3593
      %3626 = vst [vmem:[%s265 + $0xe8] sm:$0xff] %v3594
      %3627 = vst [vmem:[%s265 + $0xf0] sm:$0xff] %v3595
      %3628 = vst [vmem:[%s265 + $0xf8] sm:$0xff] %v3596
      %s3629 = smul.u32 4, %s20
      %p3630 = scmp.lt.s32.totalorder %s19, 1
      %s3631 = scalar_select %p3630, %s19, 1
      %p3632 = scmp.lt.s32.totalorder %s3629, 7
      %s3633 = scalar_select %p3632, %s3629, 7
      %s3634 = smul.addr %s3633, 16
      %s3635 = smul.addr %s3631, 128
      %s3636 = sadd.s32 %s3634, %s3635
      %s3637 = smul.addr %s3636, 4
      %s3638 = scalar_lea.vmem %s4, %s3637
      // Predicated region
      $region37: #{unconv_sc3d_pallas.1} parent=35 // pred_check
        %p3639 = pneg %p146
      $region38: #{unconv_sc3d_pallas.1} parent=35 // pred_check_branch
        %3641 = sbr.rel (%p3639) target = $region40
      $region39: #{unconv_sc3d_pallas.1} parent=35 // pred_region
        %s3642 = smul.u32 4, %s20
      $region40: #{unconv_sc3d_pallas.1} parent=35 // pred_fallthru
        _
    $region36: #{unconv_sc3d_pallas.1} parent=5 // pred_fallthru
      _
    %p3643 = scmp.le.s32.totalorder 2, %s10
    // Predicated region
    $region41: #{unconv_sc3d_pallas.1} parent=5 // pred_check
      %p3644 = pneg %p3643
    $region42: #{unconv_sc3d_pallas.1} parent=5 // pred_check_branch
      %3646 = sbr.rel (%p3644) target = $region44
    $region43: #{unconv_sc3d_pallas.1} parent=5 // pred_region
      %s3647 = ssub.s32 %s10, 2
      // Predicated region
      $region45: #{unconv_sc3d_pallas.1} parent=43 // pred_check
        %p3648 = pneg %p152
      $region46: #{unconv_sc3d_pallas.1} parent=43 // pred_check_branch
        %3650 = sbr.rel (%p3648) target = $region48
      $region47: #{unconv_sc3d_pallas.1} parent=43 // pred_region
        %s3651 = smul.u32 4, %s22
        %p3652 = scmp.lt.s32.totalorder %s21, 1
        %s3653 = scalar_select %p3652, %s21, 1
        %p3654 = scmp.lt.s32.totalorder %s3651, 7
        %s3655 = scalar_select %p3654, %s3651, 7
        %s3656 = smul.addr %s3655, 16
        %s3657 = smul.addr %s3653, 128
        %s3658 = sadd.s32 %s3656, %s3657
        %s3659 = smul.addr %s3658, 4
        %s3660 = scalar_lea.vmem %s4, %s3659
      $region48: #{unconv_sc3d_pallas.1} parent=43 // pred_fallthru
        _
    $region44: #{unconv_sc3d_pallas.1} parent=5 // pred_fallthru
      _
  $region6: #{unconv_sc3d_pallas.1} parent=0 // loop_footer
    %s14 = sadd.s32 1, %s10
  $region7: #{unconv_sc3d_pallas.1} parent=0 // loop_footer_branch
    %9 = sbr.rel target = $region3
  $region8: #{unconv_sc3d_pallas.1} parent=0 // loop_exit
    _

</llo_original>
